<compile_context>
chip_gen: v6e
topology: v6e:2x2x1
jax: 0.10.0
libtpu: 0.0.40
codegen_flags: <defaults>
</compile_context>

<pallas_src>
import jax
import jax.numpy as jnp
from jax.experimental import pallas as pl
from jax.experimental.pallas import tpu as pltpu

# ----- scaled-down "bert-base-cased" hyper-parameters (real: 30522/768/12/12/3072) -----
BERT_VOCAB = 512      # word-piece vocab (scaled down from 30522)
MAX_POS = 128         # max position embeddings (scaled down from 512)
HIDDEN = 128          # hidden size (scaled down from 768)
NUM_HEADS = 4         # attention heads (scaled down from 12)
HEAD_DIM = HIDDEN // NUM_HEADS
INTERMEDIATE = 256    # FFN inner size (scaled down from 3072)
NUM_LAYERS = 2        # transformer layers (scaled down from 12)
NER_VOCAB = 16        # `vocab_size` argument of BertNER (NER tag set size)
CLS_PAD = 128         # lane-dense padded width of the classifier output slab
LN_EPS = 1e-12        # BERT LayerNorm eps


# ----------------------------- in-kernel helpers -----------------------------

def _layernorm(x, g, b):
    """LayerNorm over the lane (hidden) axis, f32, biased variance (matches BERT)."""
    mean = jnp.mean(x, axis=-1, keepdims=True)
    xc = x - mean
    var = jnp.mean(xc * xc, axis=-1, keepdims=True)
    return xc * jax.lax.rsqrt(var + LN_EPS) * g + b


def _gelu(x):
    """Exact erf-form GELU, as used by BERT."""
    return 0.5 * x * (1.0 + jax.lax.erf(x * jnp.float32(0.7071067811865476)))


# ----------------------------- the fused kernel -----------------------------
# One grid step == one sequence of S tokens; everything (embedding gather,
# NUM_LAYERS transformer layers, classifier) runs VMEM-resident on [S, HIDDEN].

def _bert_ner_kernel(
    ids_ref, pos_type_ref, word_emb_ref, emb_g_ref, emb_b_ref,
    qkv_w_ref, qkv_b_ref, ao_w_ref, ao_b_ref,
    ff1_w_ref, ff1_b_ref, ff2_w_ref, ff2_b_ref,
    ln1_g_ref, ln1_b_ref, ln2_g_ref, ln2_b_ref,
    cls_w_ref, cls_b_ref,
    logits_ref,
):
    rows = ids_ref.shape[0]                                              # == S

    # ---- embeddings: one-hot MXU gather (bf16, exact 0/1) + add + LayerNorm ----
    ids = ids_ref[...]                                                   # [S, 1] int32
    vocab_iota = jax.lax.broadcasted_iota(jnp.int32, (rows, BERT_VOCAB), 1)
    onehot = (ids == vocab_iota).astype(jnp.bfloat16)                    # [S, V] bf16
    word = jnp.dot(onehot, word_emb_ref[...],
                   preferred_element_type=jnp.float32)                   # [S, H] f32
    h = _layernorm(word + pos_type_ref[...], emb_g_ref[...], emb_b_ref[...])

    for l in range(NUM_LAYERS):
        # --- fused QKV projection (1/sqrt(Dh) already folded into Q weight+bias) ---
        qkv = jnp.dot(h.astype(jnp.bfloat16), qkv_w_ref[l],
                      preferred_element_type=jnp.float32) + qkv_b_ref[l]  # [S, 3H]
        ao_w_l = ao_w_ref[l]                                              # [H, H] bf16
        acc = jnp.zeros((rows, HIDDEN), jnp.float32)
        # --- per-head SDPA with output projection folded into the head loop ---
        for hd in range(NUM_HEADS):
            lo = hd * HEAD_DIM
            q = qkv[:, lo:lo + HEAD_DIM].astype(jnp.bfloat16)                     # [S, Dh]
            k = qkv[:, HIDDEN + lo:HIDDEN + lo + HEAD_DIM].astype(jnp.bfloat16)   # [S, Dh]
            v = qkv[:, 2 * HIDDEN + lo:2 * HIDDEN + lo + HEAD_DIM].astype(jnp.bfloat16)
            s = jax.lax.dot_general(q, k, (((1,), (1,)), ((), ())),
                                    preferred_element_type=jnp.float32)           # [S, S]
            s = s - jnp.max(s, axis=-1, keepdims=True)
            p = jnp.exp(s)
            p = p * pl.reciprocal(jnp.sum(p, axis=-1, keepdims=True), approx=True)
            ctx = jnp.dot(p.astype(jnp.bfloat16), v,
                          preferred_element_type=jnp.float32)                     # [S, Dh]
            acc = acc + jnp.dot(ctx.astype(jnp.bfloat16),
                                ao_w_l[lo:lo + HEAD_DIM, :],
                                preferred_element_type=jnp.float32)               # [S, H]
        attn_out = acc + ao_b_ref[l]
        h = _layernorm(h + attn_out, ln1_g_ref[l], ln1_b_ref[l])          # fused resid + LN
        # --- feed forward with fused GELU ---
        ff = jnp.dot(h.astype(jnp.bfloat16), ff1_w_ref[l],
                     preferred_element_type=jnp.float32) + ff1_b_ref[l]
        ff = _gelu(ff)
        ff = jnp.dot(ff.astype(jnp.bfloat16), ff2_w_ref[l],
                     preferred_element_type=jnp.float32) + ff2_b_ref[l]
        h = _layernorm(h + ff, ln2_g_ref[l], ln2_b_ref[l])                # fused resid + LN

    # ---- classifier: lane-dense [S, 128] logits slab, bf16 MXU, f32 accumulate ----
    logits_ref[...] = jnp.dot(h.astype(jnp.bfloat16), cls_w_ref[...],
                              preferred_element_type=jnp.float32) + cls_b_ref[...]


# ----------------------------- parameter setup -----------------------------

def init_params(key):
    """Logical (per-op, f32) BERT-style parameters."""
    def dense(k, fan_in, fan_out):
        return (jax.random.normal(k, (fan_in, fan_out), jnp.float32) * 0.02,
                jnp.zeros((fan_out,), jnp.float32))

    keys = jax.random.split(key, 4 + NUM_LAYERS)
    params = {
        "word_emb": jax.random.normal(keys[0], (BERT_VOCAB, HIDDEN), jnp.float32) * 0.02,
        "pos_emb": jax.random.normal(keys[1], (MAX_POS, HIDDEN), jnp.float32) * 0.02,
        "type_emb": jax.random.normal(keys[2], (2, HIDDEN), jnp.float32) * 0.02,
        "emb_ln_g": jnp.ones((HIDDEN,), jnp.float32),
        "emb_ln_b": jnp.zeros((HIDDEN,), jnp.float32),
    }
    params["cls_w"], params["cls_b"] = dense(keys[3], HIDDEN, NER_VOCAB)

    layers = []
    for l in range(NUM_LAYERS):
        lk = jax.random.split(keys[4 + l], 6)
        layer = {}
        layer["q_w"], layer["q_b"] = dense(lk[0], HIDDEN, HIDDEN)
        layer["k_w"], layer["k_b"] = dense(lk[1], HIDDEN, HIDDEN)
        layer["v_w"], layer["v_b"] = dense(lk[2], HIDDEN, HIDDEN)
        layer["ao_w"], layer["ao_b"] = dense(lk[3], HIDDEN, HIDDEN)
        layer["ff1_w"], layer["ff1_b"] = dense(lk[4], HIDDEN, INTERMEDIATE)
        layer["ff2_w"], layer["ff2_b"] = dense(lk[5], INTERMEDIATE, HIDDEN)
        layer["ln1_g"] = jnp.ones((HIDDEN,), jnp.float32)
        layer["ln1_b"] = jnp.zeros((HIDDEN,), jnp.float32)
        layer["ln2_g"] = jnp.ones((HIDDEN,), jnp.float32)
        layer["ln2_b"] = jnp.zeros((HIDDEN,), jnp.float32)
        layers.append(layer)
    params["layers"] = layers
    return params


def pack_params(p):
    """Fuse QKV (with 1/sqrt(Dh) folded into Q weight+bias), stack layers, cast all MXU
    operand weights (incl. embedding table and classifier) to bf16, precompute the
    pos+token-type embedding slab, and pad the classifier to a lane-dense 128 slab."""
    scale = jnp.float32(1.0 / (HEAD_DIM ** 0.5))

    def stack(fn):
        return jnp.stack([fn(l) for l in p["layers"]], axis=0)

    cls_w = jnp.zeros((HIDDEN, CLS_PAD), jnp.float32).at[:, :NER_VOCAB].set(p["cls_w"])
    cls_b = jnp.zeros((1, CLS_PAD), jnp.float32).at[:, :NER_VOCAB].set(p["cls_b"])

    return {
        # [MAX_POS, H]: position + token-type(=0) embedding slab, precomputed once.
        "pos_type": (p["pos_emb"] + p["type_emb"][0][None, :]).astype(jnp.float32),
        "word_emb": p["word_emb"].astype(jnp.bfloat16),   # [V, H] bf16 MXU gather table
        "emb_ln_g": p["emb_ln_g"].reshape(1, HIDDEN),
        "emb_ln_b": p["emb_ln_b"].reshape(1, HIDDEN),
        "qkv_w": stack(lambda l: jnp.concatenate(
            [l["q_w"] * scale, l["k_w"], l["v_w"]], axis=1)).astype(jnp.bfloat16),
        "qkv_b": stack(lambda l: jnp.concatenate(
            [l["q_b"] * scale, l["k_b"], l["v_b"]]).reshape(1, 3 * HIDDEN)),
        "ao_w": stack(lambda l: l["ao_w"]).astype(jnp.bfloat16),
        "ao_b": stack(lambda l: l["ao_b"].reshape(1, HIDDEN)),
        "ff1_w": stack(lambda l: l["ff1_w"]).astype(jnp.bfloat16),
        "ff1_b": stack(lambda l: l["ff1_b"].reshape(1, INTERMEDIATE)),
        "ff2_w": stack(lambda l: l["ff2_w"]).astype(jnp.bfloat16),
        "ff2_b": stack(lambda l: l["ff2_b"].reshape(1, HIDDEN)),
        "ln1_g": stack(lambda l: l["ln1_g"].reshape(1, HIDDEN)),
        "ln1_b": stack(lambda l: l["ln1_b"].reshape(1, HIDDEN)),
        "ln2_g": stack(lambda l: l["ln2_g"].reshape(1, HIDDEN)),
        "ln2_b": stack(lambda l: l["ln2_b"].reshape(1, HIDDEN)),
        "cls_w": cls_w.astype(jnp.bfloat16),              # [H, CLS_PAD] bf16 (zero-padded)
        "cls_b": cls_b,                                   # [1, CLS_PAD] f32  (zero-padded)
    }


# ----------------------------- forward pass -----------------------------

def _const_spec(shape):
    """Weight block: full array, same block every grid step (no re-DMA across steps)."""
    n = len(shape)
    return pl.BlockSpec(shape, lambda b, _n=n: (0,) * _n)


def bert_ner_forward(pp, x_ids):
    """x_ids: [B, S] int32 token ids -> (logits [B,S,NER_VOCAB] f32, preds [B,S] int32)."""
    B, S = x_ids.shape
    M = B * S

    ids = x_ids.reshape(M, 1).astype(jnp.int32)

    weight_args = (pp["word_emb"], pp["emb_ln_g"], pp["emb_ln_b"],
                   pp["qkv_w"], pp["qkv_b"], pp["ao_w"], pp["ao_b"],
                   pp["ff1_w"], pp["ff1_b"], pp["ff2_w"], pp["ff2_b"],
                   pp["ln1_g"], pp["ln1_b"], pp["ln2_g"], pp["ln2_b"],
                   pp["cls_w"], pp["cls_b"])

    in_specs = ([pl.BlockSpec((S, 1), lambda b: (b, 0)),          # this sequence's ids
                 pl.BlockSpec((S, HIDDEN), lambda b: (0, 0))]     # pos+type slab rows 0..S
                + [_const_spec(a.shape) for a in weight_args])

    logits_pad = pl.pallas_call(
        _bert_ner_kernel,
        out_shape=jax.ShapeDtypeStruct((M, CLS_PAD), jnp.float32),
        grid=(B,),
        in_specs=in_specs,
        out_specs=pl.BlockSpec((S, CLS_PAD), lambda b: (b, 0)),
        compiler_params=pltpu.CompilerParams(dimension_semantics=("parallel",)),
    )(ids, pp["pos_type"], *weight_args)

    logits = logits_pad[:, :NER_VOCAB].reshape(B, S, NER_VOCAB)
    # argmax over the 16 real tag columns in the wrapper (first-index tie-break, as torch).
    preds = jnp.argmax(logits, axis=-1).astype(jnp.int32)
    return logits, preds


# ----------------------------- main -----------------------------

if __name__ == "__main__":
    key = jax.random.PRNGKey(0)
    pkey, xkey = jax.random.split(key)

    params = pack_params(init_params(pkey))
    B, S = 2, 8
    x = jax.random.randint(xkey, (B, S), 0, BERT_VOCAB, dtype=jnp.int32)

    logits, preds = jax.jit(bert_ner_forward)(params, x)
    jax.block_until_ready((logits, preds))

    assert logits.shape == (B, S, NER_VOCAB) and logits.dtype == jnp.float32
    assert preds.shape == (B, S) and preds.dtype == jnp.int32
    print("KERNEL_OK")
</pallas_src>

<mosaic_0001>
module attributes {stable_mosaic.version = 11 : i64} {
  func.func @_bert_ner_kernel(%arg0: i32, %arg1: memref<8x1xi32, #tpu.memory_space<vmem>>, %arg2: memref<8x128xf32, #tpu.memory_space<vmem>>, %arg3: memref<512x128xbf16, #tpu.memory_space<vmem>>, %arg4: memref<1x128xf32, #tpu.memory_space<vmem>>, %arg5: memref<1x128xf32, #tpu.memory_space<vmem>>, %arg6: memref<2x128x384xbf16, #tpu.memory_space<vmem>>, %arg7: memref<2x1x384xf32, #tpu.memory_space<vmem>>, %arg8: memref<2x128x128xbf16, #tpu.memory_space<vmem>>, %arg9: memref<2x1x128xf32, #tpu.memory_space<vmem>>, %arg10: memref<2x128x256xbf16, #tpu.memory_space<vmem>>, %arg11: memref<2x1x256xf32, #tpu.memory_space<vmem>>, %arg12: memref<2x256x128xbf16, #tpu.memory_space<vmem>>, %arg13: memref<2x1x128xf32, #tpu.memory_space<vmem>>, %arg14: memref<2x1x128xf32, #tpu.memory_space<vmem>>, %arg15: memref<2x1x128xf32, #tpu.memory_space<vmem>>, %arg16: memref<2x1x128xf32, #tpu.memory_space<vmem>>, %arg17: memref<2x1x128xf32, #tpu.memory_space<vmem>>, %arg18: memref<128x128xbf16, #tpu.memory_space<vmem>>, %arg19: memref<1x128xf32, #tpu.memory_space<vmem>>, %arg20: memref<8x128xf32, #tpu.memory_space<vmem>>) attributes {dimension_semantics = [#tpu.dimension_semantics<parallel>], iteration_bounds = array<i64: 2>, scalar_prefetch = 0 : i64, scratch_operands = 0 : i64, tpu.core_type = #tpu.core_type<tc>, window_params = [{transform_indices = @transform_0, window_bounds = array<i64: 8, 1>}, {transform_indices = @transform_1, window_bounds = array<i64: 8, 128>}, {pipeline_mode = #tpu.pipeline_mode<synchronous>, transform_indices = @transform_2, window_bounds = array<i64: 512, 128>}, {pipeline_mode = #tpu.pipeline_mode<synchronous>, transform_indices = @transform_3, window_bounds = array<i64: 1, 128>}, {pipeline_mode = #tpu.pipeline_mode<synchronous>, transform_indices = @transform_4, window_bounds = array<i64: 1, 128>}, {pipeline_mode = #tpu.pipeline_mode<synchronous>, transform_indices = @transform_5, window_bounds = array<i64: 2, 128, 384>}, {pipeline_mode = #tpu.pipeline_mode<synchronous>, transform_indices = @transform_6, window_bounds = array<i64: 2, 1, 384>}, {pipeline_mode = #tpu.pipeline_mode<synchronous>, transform_indices = @transform_7, window_bounds = array<i64: 2, 128, 128>}, {pipeline_mode = #tpu.pipeline_mode<synchronous>, transform_indices = @transform_8, window_bounds = array<i64: 2, 1, 128>}, {pipeline_mode = #tpu.pipeline_mode<synchronous>, transform_indices = @transform_9, window_bounds = array<i64: 2, 128, 256>}, {pipeline_mode = #tpu.pipeline_mode<synchronous>, transform_indices = @transform_10, window_bounds = array<i64: 2, 1, 256>}, {pipeline_mode = #tpu.pipeline_mode<synchronous>, transform_indices = @transform_11, window_bounds = array<i64: 2, 256, 128>}, {pipeline_mode = #tpu.pipeline_mode<synchronous>, transform_indices = @transform_12, window_bounds = array<i64: 2, 1, 128>}, {pipeline_mode = #tpu.pipeline_mode<synchronous>, transform_indices = @transform_13, window_bounds = array<i64: 2, 1, 128>}, {pipeline_mode = #tpu.pipeline_mode<synchronous>, transform_indices = @transform_14, window_bounds = array<i64: 2, 1, 128>}, {pipeline_mode = #tpu.pipeline_mode<synchronous>, transform_indices = @transform_15, window_bounds = array<i64: 2, 1, 128>}, {pipeline_mode = #tpu.pipeline_mode<synchronous>, transform_indices = @transform_16, window_bounds = array<i64: 2, 1, 128>}, {pipeline_mode = #tpu.pipeline_mode<synchronous>, transform_indices = @transform_17, window_bounds = array<i64: 128, 128>}, {pipeline_mode = #tpu.pipeline_mode<synchronous>, transform_indices = @transform_18, window_bounds = array<i64: 1, 128>}, {transform_indices = @transform_19, window_bounds = array<i64: 8, 128>}]} {
    %c0 = arith.constant 0 : index
    %c0_0 = arith.constant 0 : index
    %0 = vector.load %arg1[%c0, %c0_0] : memref<8x1xi32, #tpu.memory_space<vmem>>, vector<8x1xi32>
    %1 = tpu.iota {dimensions = array<i32: 1>} : vector<8x512xi32>
    %2 = vector.broadcast %0 : vector<8x1xi32> to vector<8x512xi32>
    %3 = arith.cmpi eq, %2, %1 : vector<8x512xi32>
    %4 = arith.extui %3 : vector<8x512xi1> to vector<8x512xi32>
    %5 = arith.sitofp %4 : vector<8x512xi32> to vector<8x512xf32>
    %6 = arith.truncf %5 : vector<8x512xf32> to vector<8x512xbf16>
    %c0_1 = arith.constant 0 : index
    %c0_2 = arith.constant 0 : index
    %7 = vector.load %arg3[%c0_1, %c0_2] : memref<512x128xbf16, #tpu.memory_space<vmem>>, vector<512x128xbf16>
    %cst = arith.constant dense<0.000000e+00> : vector<8x128xf32>
    %8 = tpu.matmul %6, %7, %cst {dimension_numbers = #tpu.dot_dimension_numbers<[1], [0], [0], [1], [0, 0, 1, 1], [], []>} : vector<8x512xbf16>, vector<512x128xbf16>, vector<8x128xf32> -> vector<8x128xf32>
    %c0_3 = arith.constant 0 : index
    %c0_4 = arith.constant 0 : index
    %9 = vector.load %arg2[%c0_3, %c0_4] : memref<8x128xf32, #tpu.memory_space<vmem>>, vector<8x128xf32>
    %10 = arith.addf %8, %9 : vector<8x128xf32>
    %c0_5 = arith.constant 0 : index
    %c0_6 = arith.constant 0 : index
    %11 = vector.load %arg4[%c0_5, %c0_6] : memref<1x128xf32, #tpu.memory_space<vmem>>, vector<1x128xf32>
    %c0_7 = arith.constant 0 : index
    %c0_8 = arith.constant 0 : index
    %12 = vector.load %arg5[%c0_7, %c0_8] : memref<1x128xf32, #tpu.memory_space<vmem>>, vector<1x128xf32>
    %cst_9 = arith.constant dense<0.000000e+00> : vector<8xf32>
    %13 = vector.multi_reduction <add>, %10, %cst_9 [1] : vector<8x128xf32> to vector<8xf32>
    %14 = vector.shape_cast %13 : vector<8xf32> to vector<8x1xf32>
    %cst_10 = arith.constant 1.280000e+02 : f32
    %15 = vector.broadcast %cst_10 : f32 to vector<8x1xf32>
    %16 = arith.divf %14, %15 : vector<8x1xf32>
    %17 = vector.broadcast %16 : vector<8x1xf32> to vector<8x128xf32>
    %18 = arith.subf %10, %17 : vector<8x128xf32>
    %19 = arith.mulf %18, %18 : vector<8x128xf32>
    %cst_11 = arith.constant dense<0.000000e+00> : vector<8xf32>
    %20 = vector.multi_reduction <add>, %19, %cst_11 [1] : vector<8x128xf32> to vector<8xf32>
    %21 = vector.shape_cast %20 : vector<8xf32> to vector<8x1xf32>
    %cst_12 = arith.constant 1.280000e+02 : f32
    %22 = vector.broadcast %cst_12 : f32 to vector<8x1xf32>
    %23 = arith.divf %21, %22 : vector<8x1xf32>
    %cst_13 = arith.constant 9.99999996E-13 : f32
    %24 = vector.broadcast %cst_13 : f32 to vector<8x1xf32>
    %25 = arith.addf %23, %24 : vector<8x1xf32>
    %26 = math.rsqrt %25 : vector<8x1xf32>
    %27 = vector.broadcast %26 : vector<8x1xf32> to vector<8x128xf32>
    %28 = arith.mulf %18, %27 : vector<8x128xf32>
    %29 = vector.broadcast %11 : vector<1x128xf32> to vector<8x128xf32>
    %30 = arith.mulf %28, %29 : vector<8x128xf32>
    %31 = vector.broadcast %12 : vector<1x128xf32> to vector<8x128xf32>
    %32 = arith.addf %30, %31 : vector<8x128xf32>
    %33 = arith.truncf %32 : vector<8x128xf32> to vector<8x128xbf16>
    %c0_14 = arith.constant 0 : index
    %c0_15 = arith.constant 0 : index
    %c0_16 = arith.constant 0 : index
    %34 = vector.load %arg6[%c0_14, %c0_15, %c0_16] : memref<2x128x384xbf16, #tpu.memory_space<vmem>>, vector<1x128x384xbf16>
    %35 = vector.shape_cast %34 : vector<1x128x384xbf16> to vector<128x384xbf16>
    %cst_17 = arith.constant dense<0.000000e+00> : vector<8x384xf32>
    %36 = tpu.matmul %33, %35, %cst_17 {dimension_numbers = #tpu.dot_dimension_numbers<[1], [0], [0], [1], [0, 0, 1, 1], [], []>} : vector<8x128xbf16>, vector<128x384xbf16>, vector<8x384xf32> -> vector<8x384xf32>
    %c0_18 = arith.constant 0 : index
    %c0_19 = arith.constant 0 : index
    %c0_20 = arith.constant 0 : index
    %37 = vector.load %arg7[%c0_18, %c0_19, %c0_20] : memref<2x1x384xf32, #tpu.memory_space<vmem>>, vector<1x1x384xf32>
    %38 = vector.shape_cast %37 : vector<1x1x384xf32> to vector<1x384xf32>
    %39 = vector.broadcast %38 : vector<1x384xf32> to vector<8x384xf32>
    %40 = arith.addf %36, %39 : vector<8x384xf32>
    %c0_21 = arith.constant 0 : index
    %c0_22 = arith.constant 0 : index
    %c0_23 = arith.constant 0 : index
    %41 = vector.load %arg8[%c0_21, %c0_22, %c0_23] : memref<2x128x128xbf16, #tpu.memory_space<vmem>>, vector<1x128x128xbf16>
    %42 = vector.shape_cast %41 : vector<1x128x128xbf16> to vector<128x128xbf16>
    %cst_24 = arith.constant 0.000000e+00 : f32
    %43 = vector.broadcast %cst_24 : f32 to vector<8x128xf32>
    %44 = vector.extract_strided_slice %40 {offsets = [0, 0], sizes = [8, 32], strides = [1, 1]} : vector<8x384xf32> to vector<8x32xf32>
    %45 = arith.truncf %44 : vector<8x32xf32> to vector<8x32xbf16>
    %46 = vector.extract_strided_slice %40 {offsets = [0, 128], sizes = [8, 32], strides = [1, 1]} : vector<8x384xf32> to vector<8x32xf32>
    %47 = arith.truncf %46 : vector<8x32xf32> to vector<8x32xbf16>
    %48 = vector.extract_strided_slice %40 {offsets = [0, 256], sizes = [8, 32], strides = [1, 1]} : vector<8x384xf32> to vector<8x32xf32>
    %49 = arith.truncf %48 : vector<8x32xf32> to vector<8x32xbf16>
    %cst_25 = arith.constant dense<0.000000e+00> : vector<8x8xf32>
    %50 = tpu.matmul %45, %47, %cst_25 {dimension_numbers = #tpu.dot_dimension_numbers<[1], [1], [0], [0], [0, 0, 1, 0], [], []>} : vector<8x32xbf16>, vector<8x32xbf16>, vector<8x8xf32> -> vector<8x8xf32>
    %cst_26 = arith.constant dense<0xFF800000> : vector<8xf32>
    %51 = vector.multi_reduction <maximumf>, %50, %cst_26 [1] : vector<8x8xf32> to vector<8xf32>
    %52 = vector.shape_cast %51 : vector<8xf32> to vector<8x1xf32>
    %53 = vector.broadcast %52 : vector<8x1xf32> to vector<8x8xf32>
    %54 = arith.subf %50, %53 : vector<8x8xf32>
    %55 = math.exp %54 : vector<8x8xf32>
    %cst_27 = arith.constant dense<0.000000e+00> : vector<8xf32>
    %56 = vector.multi_reduction <add>, %55, %cst_27 [1] : vector<8x8xf32> to vector<8xf32>
    %57 = vector.shape_cast %56 : vector<8xf32> to vector<8x1xf32>
    %58 = tpu.reciprocal %57 {approx = true} : vector<8x1xf32> -> vector<8x1xf32>
    %59 = vector.broadcast %58 : vector<8x1xf32> to vector<8x8xf32>
    %60 = arith.mulf %55, %59 : vector<8x8xf32>
    %61 = arith.truncf %60 : vector<8x8xf32> to vector<8x8xbf16>
    %cst_28 = arith.constant dense<0.000000e+00> : vector<8x32xf32>
    %62 = tpu.matmul %61, %49, %cst_28 {dimension_numbers = #tpu.dot_dimension_numbers<[1], [0], [0], [1], [0, 0, 1, 1], [], []>} : vector<8x8xbf16>, vector<8x32xbf16>, vector<8x32xf32> -> vector<8x32xf32>
    %63 = arith.truncf %62 : vector<8x32xf32> to vector<8x32xbf16>
    %64 = vector.extract_strided_slice %42 {offsets = [0, 0], sizes = [32, 128], strides = [1, 1]} : vector<128x128xbf16> to vector<32x128xbf16>
    %cst_29 = arith.constant dense<0.000000e+00> : vector<8x128xf32>
    %65 = tpu.matmul %63, %64, %cst_29 {dimension_numbers = #tpu.dot_dimension_numbers<[1], [0], [0], [1], [0, 0, 1, 1], [], []>} : vector<8x32xbf16>, vector<32x128xbf16>, vector<8x128xf32> -> vector<8x128xf32>
    %66 = arith.addf %43, %65 : vector<8x128xf32>
    %67 = vector.extract_strided_slice %40 {offsets = [0, 32], sizes = [8, 32], strides = [1, 1]} : vector<8x384xf32> to vector<8x32xf32>
    %68 = arith.truncf %67 : vector<8x32xf32> to vector<8x32xbf16>
    %69 = vector.extract_strided_slice %40 {offsets = [0, 160], sizes = [8, 32], strides = [1, 1]} : vector<8x384xf32> to vector<8x32xf32>
    %70 = arith.truncf %69 : vector<8x32xf32> to vector<8x32xbf16>
    %71 = vector.extract_strided_slice %40 {offsets = [0, 288], sizes = [8, 32], strides = [1, 1]} : vector<8x384xf32> to vector<8x32xf32>
    %72 = arith.truncf %71 : vector<8x32xf32> to vector<8x32xbf16>
    %cst_30 = arith.constant dense<0.000000e+00> : vector<8x8xf32>
    %73 = tpu.matmul %68, %70, %cst_30 {dimension_numbers = #tpu.dot_dimension_numbers<[1], [1], [0], [0], [0, 0, 1, 0], [], []>} : vector<8x32xbf16>, vector<8x32xbf16>, vector<8x8xf32> -> vector<8x8xf32>
    %cst_31 = arith.constant dense<0xFF800000> : vector<8xf32>
    %74 = vector.multi_reduction <maximumf>, %73, %cst_31 [1] : vector<8x8xf32> to vector<8xf32>
    %75 = vector.shape_cast %74 : vector<8xf32> to vector<8x1xf32>
    %76 = vector.broadcast %75 : vector<8x1xf32> to vector<8x8xf32>
    %77 = arith.subf %73, %76 : vector<8x8xf32>
    %78 = math.exp %77 : vector<8x8xf32>
    %cst_32 = arith.constant dense<0.000000e+00> : vector<8xf32>
    %79 = vector.multi_reduction <add>, %78, %cst_32 [1] : vector<8x8xf32> to vector<8xf32>
    %80 = vector.shape_cast %79 : vector<8xf32> to vector<8x1xf32>
    %81 = tpu.reciprocal %80 {approx = true} : vector<8x1xf32> -> vector<8x1xf32>
    %82 = vector.broadcast %81 : vector<8x1xf32> to vector<8x8xf32>
    %83 = arith.mulf %78, %82 : vector<8x8xf32>
    %84 = arith.truncf %83 : vector<8x8xf32> to vector<8x8xbf16>
    %cst_33 = arith.constant dense<0.000000e+00> : vector<8x32xf32>
    %85 = tpu.matmul %84, %72, %cst_33 {dimension_numbers = #tpu.dot_dimension_numbers<[1], [0], [0], [1], [0, 0, 1, 1], [], []>} : vector<8x8xbf16>, vector<8x32xbf16>, vector<8x32xf32> -> vector<8x32xf32>
    %86 = arith.truncf %85 : vector<8x32xf32> to vector<8x32xbf16>
    %87 = vector.extract_strided_slice %42 {offsets = [32, 0], sizes = [32, 128], strides = [1, 1]} : vector<128x128xbf16> to vector<32x128xbf16>
    %cst_34 = arith.constant dense<0.000000e+00> : vector<8x128xf32>
    %88 = tpu.matmul %86, %87, %cst_34 {dimension_numbers = #tpu.dot_dimension_numbers<[1], [0], [0], [1], [0, 0, 1, 1], [], []>} : vector<8x32xbf16>, vector<32x128xbf16>, vector<8x128xf32> -> vector<8x128xf32>
    %89 = arith.addf %66, %88 : vector<8x128xf32>
    %90 = vector.extract_strided_slice %40 {offsets = [0, 64], sizes = [8, 32], strides = [1, 1]} : vector<8x384xf32> to vector<8x32xf32>
    %91 = arith.truncf %90 : vector<8x32xf32> to vector<8x32xbf16>
    %92 = vector.extract_strided_slice %40 {offsets = [0, 192], sizes = [8, 32], strides = [1, 1]} : vector<8x384xf32> to vector<8x32xf32>
    %93 = arith.truncf %92 : vector<8x32xf32> to vector<8x32xbf16>
    %94 = vector.extract_strided_slice %40 {offsets = [0, 320], sizes = [8, 32], strides = [1, 1]} : vector<8x384xf32> to vector<8x32xf32>
    %95 = arith.truncf %94 : vector<8x32xf32> to vector<8x32xbf16>
    %cst_35 = arith.constant dense<0.000000e+00> : vector<8x8xf32>
    %96 = tpu.matmul %91, %93, %cst_35 {dimension_numbers = #tpu.dot_dimension_numbers<[1], [1], [0], [0], [0, 0, 1, 0], [], []>} : vector<8x32xbf16>, vector<8x32xbf16>, vector<8x8xf32> -> vector<8x8xf32>
    %cst_36 = arith.constant dense<0xFF800000> : vector<8xf32>
    %97 = vector.multi_reduction <maximumf>, %96, %cst_36 [1] : vector<8x8xf32> to vector<8xf32>
    %98 = vector.shape_cast %97 : vector<8xf32> to vector<8x1xf32>
    %99 = vector.broadcast %98 : vector<8x1xf32> to vector<8x8xf32>
    %100 = arith.subf %96, %99 : vector<8x8xf32>
    %101 = math.exp %100 : vector<8x8xf32>
    %cst_37 = arith.constant dense<0.000000e+00> : vector<8xf32>
    %102 = vector.multi_reduction <add>, %101, %cst_37 [1] : vector<8x8xf32> to vector<8xf32>
    %103 = vector.shape_cast %102 : vector<8xf32> to vector<8x1xf32>
    %104 = tpu.reciprocal %103 {approx = true} : vector<8x1xf32> -> vector<8x1xf32>
    %105 = vector.broadcast %104 : vector<8x1xf32> to vector<8x8xf32>
    %106 = arith.mulf %101, %105 : vector<8x8xf32>
    %107 = arith.truncf %106 : vector<8x8xf32> to vector<8x8xbf16>
    %cst_38 = arith.constant dense<0.000000e+00> : vector<8x32xf32>
    %108 = tpu.matmul %107, %95, %cst_38 {dimension_numbers = #tpu.dot_dimension_numbers<[1], [0], [0], [1], [0, 0, 1, 1], [], []>} : vector<8x8xbf16>, vector<8x32xbf16>, vector<8x32xf32> -> vector<8x32xf32>
    %109 = arith.truncf %108 : vector<8x32xf32> to vector<8x32xbf16>
    %110 = vector.extract_strided_slice %42 {offsets = [64, 0], sizes = [32, 128], strides = [1, 1]} : vector<128x128xbf16> to vector<32x128xbf16>
    %cst_39 = arith.constant dense<0.000000e+00> : vector<8x128xf32>
    %111 = tpu.matmul %109, %110, %cst_39 {dimension_numbers = #tpu.dot_dimension_numbers<[1], [0], [0], [1], [0, 0, 1, 1], [], []>} : vector<8x32xbf16>, vector<32x128xbf16>, vector<8x128xf32> -> vector<8x128xf32>
    %112 = arith.addf %89, %111 : vector<8x128xf32>
    %113 = vector.extract_strided_slice %40 {offsets = [0, 96], sizes = [8, 32], strides = [1, 1]} : vector<8x384xf32> to vector<8x32xf32>
    %114 = arith.truncf %113 : vector<8x32xf32> to vector<8x32xbf16>
    %115 = vector.extract_strided_slice %40 {offsets = [0, 224], sizes = [8, 32], strides = [1, 1]} : vector<8x384xf32> to vector<8x32xf32>
    %116 = arith.truncf %115 : vector<8x32xf32> to vector<8x32xbf16>
    %117 = vector.extract_strided_slice %40 {offsets = [0, 352], sizes = [8, 32], strides = [1, 1]} : vector<8x384xf32> to vector<8x32xf32>
    %118 = arith.truncf %117 : vector<8x32xf32> to vector<8x32xbf16>
    %cst_40 = arith.constant dense<0.000000e+00> : vector<8x8xf32>
    %119 = tpu.matmul %114, %116, %cst_40 {dimension_numbers = #tpu.dot_dimension_numbers<[1], [1], [0], [0], [0, 0, 1, 0], [], []>} : vector<8x32xbf16>, vector<8x32xbf16>, vector<8x8xf32> -> vector<8x8xf32>
    %cst_41 = arith.constant dense<0xFF800000> : vector<8xf32>
    %120 = vector.multi_reduction <maximumf>, %119, %cst_41 [1] : vector<8x8xf32> to vector<8xf32>
    %121 = vector.shape_cast %120 : vector<8xf32> to vector<8x1xf32>
    %122 = vector.broadcast %121 : vector<8x1xf32> to vector<8x8xf32>
    %123 = arith.subf %119, %122 : vector<8x8xf32>
    %124 = math.exp %123 : vector<8x8xf32>
    %cst_42 = arith.constant dense<0.000000e+00> : vector<8xf32>
    %125 = vector.multi_reduction <add>, %124, %cst_42 [1] : vector<8x8xf32> to vector<8xf32>
    %126 = vector.shape_cast %125 : vector<8xf32> to vector<8x1xf32>
    %127 = tpu.reciprocal %126 {approx = true} : vector<8x1xf32> -> vector<8x1xf32>
    %128 = vector.broadcast %127 : vector<8x1xf32> to vector<8x8xf32>
    %129 = arith.mulf %124, %128 : vector<8x8xf32>
    %130 = arith.truncf %129 : vector<8x8xf32> to vector<8x8xbf16>
    %cst_43 = arith.constant dense<0.000000e+00> : vector<8x32xf32>
    %131 = tpu.matmul %130, %118, %cst_43 {dimension_numbers = #tpu.dot_dimension_numbers<[1], [0], [0], [1], [0, 0, 1, 1], [], []>} : vector<8x8xbf16>, vector<8x32xbf16>, vector<8x32xf32> -> vector<8x32xf32>
    %132 = arith.truncf %131 : vector<8x32xf32> to vector<8x32xbf16>
    %133 = vector.extract_strided_slice %42 {offsets = [96, 0], sizes = [32, 128], strides = [1, 1]} : vector<128x128xbf16> to vector<32x128xbf16>
    %cst_44 = arith.constant dense<0.000000e+00> : vector<8x128xf32>
    %134 = tpu.matmul %132, %133, %cst_44 {dimension_numbers = #tpu.dot_dimension_numbers<[1], [0], [0], [1], [0, 0, 1, 1], [], []>} : vector<8x32xbf16>, vector<32x128xbf16>, vector<8x128xf32> -> vector<8x128xf32>
    %135 = arith.addf %112, %134 : vector<8x128xf32>
    %c0_45 = arith.constant 0 : index
    %c0_46 = arith.constant 0 : index
    %c0_47 = arith.constant 0 : index
    %136 = vector.load %arg9[%c0_45, %c0_46, %c0_47] : memref<2x1x128xf32, #tpu.memory_space<vmem>>, vector<1x1x128xf32>
    %137 = vector.shape_cast %136 : vector<1x1x128xf32> to vector<1x128xf32>
    %138 = vector.broadcast %137 : vector<1x128xf32> to vector<8x128xf32>
    %139 = arith.addf %135, %138 : vector<8x128xf32>
    %140 = arith.addf %32, %139 : vector<8x128xf32>
    %c0_48 = arith.constant 0 : index
    %c0_49 = arith.constant 0 : index
    %c0_50 = arith.constant 0 : index
    %141 = vector.load %arg14[%c0_48, %c0_49, %c0_50] : memref<2x1x128xf32, #tpu.memory_space<vmem>>, vector<1x1x128xf32>
    %142 = vector.shape_cast %141 : vector<1x1x128xf32> to vector<1x128xf32>
    %c0_51 = arith.constant 0 : index
    %c0_52 = arith.constant 0 : index
    %c0_53 = arith.constant 0 : index
    %143 = vector.load %arg15[%c0_51, %c0_52, %c0_53] : memref<2x1x128xf32, #tpu.memory_space<vmem>>, vector<1x1x128xf32>
    %144 = vector.shape_cast %143 : vector<1x1x128xf32> to vector<1x128xf32>
    %cst_54 = arith.constant dense<0.000000e+00> : vector<8xf32>
    %145 = vector.multi_reduction <add>, %140, %cst_54 [1] : vector<8x128xf32> to vector<8xf32>
    %146 = vector.shape_cast %145 : vector<8xf32> to vector<8x1xf32>
    %cst_55 = arith.constant 1.280000e+02 : f32
    %147 = vector.broadcast %cst_55 : f32 to vector<8x1xf32>
    %148 = arith.divf %146, %147 : vector<8x1xf32>
    %149 = vector.broadcast %148 : vector<8x1xf32> to vector<8x128xf32>
    %150 = arith.subf %140, %149 : vector<8x128xf32>
    %151 = arith.mulf %150, %150 : vector<8x128xf32>
    %cst_56 = arith.constant dense<0.000000e+00> : vector<8xf32>
    %152 = vector.multi_reduction <add>, %151, %cst_56 [1] : vector<8x128xf32> to vector<8xf32>
    %153 = vector.shape_cast %152 : vector<8xf32> to vector<8x1xf32>
    %cst_57 = arith.constant 1.280000e+02 : f32
    %154 = vector.broadcast %cst_57 : f32 to vector<8x1xf32>
    %155 = arith.divf %153, %154 : vector<8x1xf32>
    %cst_58 = arith.constant 9.99999996E-13 : f32
    %156 = vector.broadcast %cst_58 : f32 to vector<8x1xf32>
    %157 = arith.addf %155, %156 : vector<8x1xf32>
    %158 = math.rsqrt %157 : vector<8x1xf32>
    %159 = vector.broadcast %158 : vector<8x1xf32> to vector<8x128xf32>
    %160 = arith.mulf %150, %159 : vector<8x128xf32>
    %161 = vector.broadcast %142 : vector<1x128xf32> to vector<8x128xf32>
    %162 = arith.mulf %160, %161 : vector<8x128xf32>
    %163 = vector.broadcast %144 : vector<1x128xf32> to vector<8x128xf32>
    %164 = arith.addf %162, %163 : vector<8x128xf32>
    %165 = arith.truncf %164 : vector<8x128xf32> to vector<8x128xbf16>
    %c0_59 = arith.constant 0 : index
    %c0_60 = arith.constant 0 : index
    %c0_61 = arith.constant 0 : index
    %166 = vector.load %arg10[%c0_59, %c0_60, %c0_61] : memref<2x128x256xbf16, #tpu.memory_space<vmem>>, vector<1x128x256xbf16>
    %167 = vector.shape_cast %166 : vector<1x128x256xbf16> to vector<128x256xbf16>
    %cst_62 = arith.constant dense<0.000000e+00> : vector<8x256xf32>
    %168 = tpu.matmul %165, %167, %cst_62 {dimension_numbers = #tpu.dot_dimension_numbers<[1], [0], [0], [1], [0, 0, 1, 1], [], []>} : vector<8x128xbf16>, vector<128x256xbf16>, vector<8x256xf32> -> vector<8x256xf32>
    %c0_63 = arith.constant 0 : index
    %c0_64 = arith.constant 0 : index
    %c0_65 = arith.constant 0 : index
    %169 = vector.load %arg11[%c0_63, %c0_64, %c0_65] : memref<2x1x256xf32, #tpu.memory_space<vmem>>, vector<1x1x256xf32>
    %170 = vector.shape_cast %169 : vector<1x1x256xf32> to vector<1x256xf32>
    %171 = vector.broadcast %170 : vector<1x256xf32> to vector<8x256xf32>
    %172 = arith.addf %168, %171 : vector<8x256xf32>
    %cst_66 = arith.constant 5.000000e-01 : f32
    %173 = vector.broadcast %cst_66 : f32 to vector<8x256xf32>
    %174 = arith.mulf %173, %172 : vector<8x256xf32>
    %cst_67 = arith.constant 0.707106769 : f32
    %175 = vector.broadcast %cst_67 : f32 to vector<8x256xf32>
    %176 = arith.mulf %172, %175 : vector<8x256xf32>
    %177 = math.erf %176 : vector<8x256xf32>
    %cst_68 = arith.constant 1.000000e+00 : f32
    %178 = vector.broadcast %cst_68 : f32 to vector<8x256xf32>
    %179 = arith.addf %178, %177 : vector<8x256xf32>
    %180 = arith.mulf %174, %179 : vector<8x256xf32>
    %181 = arith.truncf %180 : vector<8x256xf32> to vector<8x256xbf16>
    %c0_69 = arith.constant 0 : index
    %c0_70 = arith.constant 0 : index
    %c0_71 = arith.constant 0 : index
    %182 = vector.load %arg12[%c0_69, %c0_70, %c0_71] : memref<2x256x128xbf16, #tpu.memory_space<vmem>>, vector<1x256x128xbf16>
    %183 = vector.shape_cast %182 : vector<1x256x128xbf16> to vector<256x128xbf16>
    %cst_72 = arith.constant dense<0.000000e+00> : vector<8x128xf32>
    %184 = tpu.matmul %181, %183, %cst_72 {dimension_numbers = #tpu.dot_dimension_numbers<[1], [0], [0], [1], [0, 0, 1, 1], [], []>} : vector<8x256xbf16>, vector<256x128xbf16>, vector<8x128xf32> -> vector<8x128xf32>
    %c0_73 = arith.constant 0 : index
    %c0_74 = arith.constant 0 : index
    %c0_75 = arith.constant 0 : index
    %185 = vector.load %arg13[%c0_73, %c0_74, %c0_75] : memref<2x1x128xf32, #tpu.memory_space<vmem>>, vector<1x1x128xf32>
    %186 = vector.shape_cast %185 : vector<1x1x128xf32> to vector<1x128xf32>
    %187 = vector.broadcast %186 : vector<1x128xf32> to vector<8x128xf32>
    %188 = arith.addf %184, %187 : vector<8x128xf32>
    %189 = arith.addf %164, %188 : vector<8x128xf32>
    %c0_76 = arith.constant 0 : index
    %c0_77 = arith.constant 0 : index
    %c0_78 = arith.constant 0 : index
    %190 = vector.load %arg16[%c0_76, %c0_77, %c0_78] : memref<2x1x128xf32, #tpu.memory_space<vmem>>, vector<1x1x128xf32>
    %191 = vector.shape_cast %190 : vector<1x1x128xf32> to vector<1x128xf32>
    %c0_79 = arith.constant 0 : index
    %c0_80 = arith.constant 0 : index
    %c0_81 = arith.constant 0 : index
    %192 = vector.load %arg17[%c0_79, %c0_80, %c0_81] : memref<2x1x128xf32, #tpu.memory_space<vmem>>, vector<1x1x128xf32>
    %193 = vector.shape_cast %192 : vector<1x1x128xf32> to vector<1x128xf32>
    %cst_82 = arith.constant dense<0.000000e+00> : vector<8xf32>
    %194 = vector.multi_reduction <add>, %189, %cst_82 [1] : vector<8x128xf32> to vector<8xf32>
    %195 = vector.shape_cast %194 : vector<8xf32> to vector<8x1xf32>
    %cst_83 = arith.constant 1.280000e+02 : f32
    %196 = vector.broadcast %cst_83 : f32 to vector<8x1xf32>
    %197 = arith.divf %195, %196 : vector<8x1xf32>
    %198 = vector.broadcast %197 : vector<8x1xf32> to vector<8x128xf32>
    %199 = arith.subf %189, %198 : vector<8x128xf32>
    %200 = arith.mulf %199, %199 : vector<8x128xf32>
    %cst_84 = arith.constant dense<0.000000e+00> : vector<8xf32>
    %201 = vector.multi_reduction <add>, %200, %cst_84 [1] : vector<8x128xf32> to vector<8xf32>
    %202 = vector.shape_cast %201 : vector<8xf32> to vector<8x1xf32>
    %cst_85 = arith.constant 1.280000e+02 : f32
    %203 = vector.broadcast %cst_85 : f32 to vector<8x1xf32>
    %204 = arith.divf %202, %203 : vector<8x1xf32>
    %cst_86 = arith.constant 9.99999996E-13 : f32
    %205 = vector.broadcast %cst_86 : f32 to vector<8x1xf32>
    %206 = arith.addf %204, %205 : vector<8x1xf32>
    %207 = math.rsqrt %206 : vector<8x1xf32>
    %208 = vector.broadcast %207 : vector<8x1xf32> to vector<8x128xf32>
    %209 = arith.mulf %199, %208 : vector<8x128xf32>
    %210 = vector.broadcast %191 : vector<1x128xf32> to vector<8x128xf32>
    %211 = arith.mulf %209, %210 : vector<8x128xf32>
    %212 = vector.broadcast %193 : vector<1x128xf32> to vector<8x128xf32>
    %213 = arith.addf %211, %212 : vector<8x128xf32>
    %214 = arith.truncf %213 : vector<8x128xf32> to vector<8x128xbf16>
    %c1 = arith.constant 1 : index
    %c0_87 = arith.constant 0 : index
    %c0_88 = arith.constant 0 : index
    %215 = vector.load %arg6[%c1, %c0_87, %c0_88] : memref<2x128x384xbf16, #tpu.memory_space<vmem>>, vector<1x128x384xbf16>
    %216 = vector.shape_cast %215 : vector<1x128x384xbf16> to vector<128x384xbf16>
    %cst_89 = arith.constant dense<0.000000e+00> : vector<8x384xf32>
    %217 = tpu.matmul %214, %216, %cst_89 {dimension_numbers = #tpu.dot_dimension_numbers<[1], [0], [0], [1], [0, 0, 1, 1], [], []>} : vector<8x128xbf16>, vector<128x384xbf16>, vector<8x384xf32> -> vector<8x384xf32>
    %c1_90 = arith.constant 1 : index
    %c0_91 = arith.constant 0 : index
    %c0_92 = arith.constant 0 : index
    %218 = vector.load %arg7[%c1_90, %c0_91, %c0_92] : memref<2x1x384xf32, #tpu.memory_space<vmem>>, vector<1x1x384xf32>
    %219 = vector.shape_cast %218 : vector<1x1x384xf32> to vector<1x384xf32>
    %220 = vector.broadcast %219 : vector<1x384xf32> to vector<8x384xf32>
    %221 = arith.addf %217, %220 : vector<8x384xf32>
    %c1_93 = arith.constant 1 : index
    %c0_94 = arith.constant 0 : index
    %c0_95 = arith.constant 0 : index
    %222 = vector.load %arg8[%c1_93, %c0_94, %c0_95] : memref<2x128x128xbf16, #tpu.memory_space<vmem>>, vector<1x128x128xbf16>
    %223 = vector.shape_cast %222 : vector<1x128x128xbf16> to vector<128x128xbf16>
    %cst_96 = arith.constant 0.000000e+00 : f32
    %224 = vector.broadcast %cst_96 : f32 to vector<8x128xf32>
    %225 = vector.extract_strided_slice %221 {offsets = [0, 0], sizes = [8, 32], strides = [1, 1]} : vector<8x384xf32> to vector<8x32xf32>
    %226 = arith.truncf %225 : vector<8x32xf32> to vector<8x32xbf16>
    %227 = vector.extract_strided_slice %221 {offsets = [0, 128], sizes = [8, 32], strides = [1, 1]} : vector<8x384xf32> to vector<8x32xf32>
    %228 = arith.truncf %227 : vector<8x32xf32> to vector<8x32xbf16>
    %229 = vector.extract_strided_slice %221 {offsets = [0, 256], sizes = [8, 32], strides = [1, 1]} : vector<8x384xf32> to vector<8x32xf32>
    %230 = arith.truncf %229 : vector<8x32xf32> to vector<8x32xbf16>
    %cst_97 = arith.constant dense<0.000000e+00> : vector<8x8xf32>
    %231 = tpu.matmul %226, %228, %cst_97 {dimension_numbers = #tpu.dot_dimension_numbers<[1], [1], [0], [0], [0, 0, 1, 0], [], []>} : vector<8x32xbf16>, vector<8x32xbf16>, vector<8x8xf32> -> vector<8x8xf32>
    %cst_98 = arith.constant dense<0xFF800000> : vector<8xf32>
    %232 = vector.multi_reduction <maximumf>, %231, %cst_98 [1] : vector<8x8xf32> to vector<8xf32>
    %233 = vector.shape_cast %232 : vector<8xf32> to vector<8x1xf32>
    %234 = vector.broadcast %233 : vector<8x1xf32> to vector<8x8xf32>
    %235 = arith.subf %231, %234 : vector<8x8xf32>
    %236 = math.exp %235 : vector<8x8xf32>
    %cst_99 = arith.constant dense<0.000000e+00> : vector<8xf32>
    %237 = vector.multi_reduction <add>, %236, %cst_99 [1] : vector<8x8xf32> to vector<8xf32>
    %238 = vector.shape_cast %237 : vector<8xf32> to vector<8x1xf32>
    %239 = tpu.reciprocal %238 {approx = true} : vector<8x1xf32> -> vector<8x1xf32>
    %240 = vector.broadcast %239 : vector<8x1xf32> to vector<8x8xf32>
    %241 = arith.mulf %236, %240 : vector<8x8xf32>
    %242 = arith.truncf %241 : vector<8x8xf32> to vector<8x8xbf16>
    %cst_100 = arith.constant dense<0.000000e+00> : vector<8x32xf32>
    %243 = tpu.matmul %242, %230, %cst_100 {dimension_numbers = #tpu.dot_dimension_numbers<[1], [0], [0], [1], [0, 0, 1, 1], [], []>} : vector<8x8xbf16>, vector<8x32xbf16>, vector<8x32xf32> -> vector<8x32xf32>
    %244 = arith.truncf %243 : vector<8x32xf32> to vector<8x32xbf16>
    %245 = vector.extract_strided_slice %223 {offsets = [0, 0], sizes = [32, 128], strides = [1, 1]} : vector<128x128xbf16> to vector<32x128xbf16>
    %cst_101 = arith.constant dense<0.000000e+00> : vector<8x128xf32>
    %246 = tpu.matmul %244, %245, %cst_101 {dimension_numbers = #tpu.dot_dimension_numbers<[1], [0], [0], [1], [0, 0, 1, 1], [], []>} : vector<8x32xbf16>, vector<32x128xbf16>, vector<8x128xf32> -> vector<8x128xf32>
    %247 = arith.addf %224, %246 : vector<8x128xf32>
    %248 = vector.extract_strided_slice %221 {offsets = [0, 32], sizes = [8, 32], strides = [1, 1]} : vector<8x384xf32> to vector<8x32xf32>
    %249 = arith.truncf %248 : vector<8x32xf32> to vector<8x32xbf16>
    %250 = vector.extract_strided_slice %221 {offsets = [0, 160], sizes = [8, 32], strides = [1, 1]} : vector<8x384xf32> to vector<8x32xf32>
    %251 = arith.truncf %250 : vector<8x32xf32> to vector<8x32xbf16>
    %252 = vector.extract_strided_slice %221 {offsets = [0, 288], sizes = [8, 32], strides = [1, 1]} : vector<8x384xf32> to vector<8x32xf32>
    %253 = arith.truncf %252 : vector<8x32xf32> to vector<8x32xbf16>
    %cst_102 = arith.constant dense<0.000000e+00> : vector<8x8xf32>
    %254 = tpu.matmul %249, %251, %cst_102 {dimension_numbers = #tpu.dot_dimension_numbers<[1], [1], [0], [0], [0, 0, 1, 0], [], []>} : vector<8x32xbf16>, vector<8x32xbf16>, vector<8x8xf32> -> vector<8x8xf32>
    %cst_103 = arith.constant dense<0xFF800000> : vector<8xf32>
    %255 = vector.multi_reduction <maximumf>, %254, %cst_103 [1] : vector<8x8xf32> to vector<8xf32>
    %256 = vector.shape_cast %255 : vector<8xf32> to vector<8x1xf32>
    %257 = vector.broadcast %256 : vector<8x1xf32> to vector<8x8xf32>
    %258 = arith.subf %254, %257 : vector<8x8xf32>
    %259 = math.exp %258 : vector<8x8xf32>
    %cst_104 = arith.constant dense<0.000000e+00> : vector<8xf32>
    %260 = vector.multi_reduction <add>, %259, %cst_104 [1] : vector<8x8xf32> to vector<8xf32>
    %261 = vector.shape_cast %260 : vector<8xf32> to vector<8x1xf32>
    %262 = tpu.reciprocal %261 {approx = true} : vector<8x1xf32> -> vector<8x1xf32>
    %263 = vector.broadcast %262 : vector<8x1xf32> to vector<8x8xf32>
    %264 = arith.mulf %259, %263 : vector<8x8xf32>
    %265 = arith.truncf %264 : vector<8x8xf32> to vector<8x8xbf16>
    %cst_105 = arith.constant dense<0.000000e+00> : vector<8x32xf32>
    %266 = tpu.matmul %265, %253, %cst_105 {dimension_numbers = #tpu.dot_dimension_numbers<[1], [0], [0], [1], [0, 0, 1, 1], [], []>} : vector<8x8xbf16>, vector<8x32xbf16>, vector<8x32xf32> -> vector<8x32xf32>
    %267 = arith.truncf %266 : vector<8x32xf32> to vector<8x32xbf16>
    %268 = vector.extract_strided_slice %223 {offsets = [32, 0], sizes = [32, 128], strides = [1, 1]} : vector<128x128xbf16> to vector<32x128xbf16>
    %cst_106 = arith.constant dense<0.000000e+00> : vector<8x128xf32>
    %269 = tpu.matmul %267, %268, %cst_106 {dimension_numbers = #tpu.dot_dimension_numbers<[1], [0], [0], [1], [0, 0, 1, 1], [], []>} : vector<8x32xbf16>, vector<32x128xbf16>, vector<8x128xf32> -> vector<8x128xf32>
    %270 = arith.addf %247, %269 : vector<8x128xf32>
    %271 = vector.extract_strided_slice %221 {offsets = [0, 64], sizes = [8, 32], strides = [1, 1]} : vector<8x384xf32> to vector<8x32xf32>
    %272 = arith.truncf %271 : vector<8x32xf32> to vector<8x32xbf16>
    %273 = vector.extract_strided_slice %221 {offsets = [0, 192], sizes = [8, 32], strides = [1, 1]} : vector<8x384xf32> to vector<8x32xf32>
    %274 = arith.truncf %273 : vector<8x32xf32> to vector<8x32xbf16>
    %275 = vector.extract_strided_slice %221 {offsets = [0, 320], sizes = [8, 32], strides = [1, 1]} : vector<8x384xf32> to vector<8x32xf32>
    %276 = arith.truncf %275 : vector<8x32xf32> to vector<8x32xbf16>
    %cst_107 = arith.constant dense<0.000000e+00> : vector<8x8xf32>
    %277 = tpu.matmul %272, %274, %cst_107 {dimension_numbers = #tpu.dot_dimension_numbers<[1], [1], [0], [0], [0, 0, 1, 0], [], []>} : vector<8x32xbf16>, vector<8x32xbf16>, vector<8x8xf32> -> vector<8x8xf32>
    %cst_108 = arith.constant dense<0xFF800000> : vector<8xf32>
    %278 = vector.multi_reduction <maximumf>, %277, %cst_108 [1] : vector<8x8xf32> to vector<8xf32>
    %279 = vector.shape_cast %278 : vector<8xf32> to vector<8x1xf32>
    %280 = vector.broadcast %279 : vector<8x1xf32> to vector<8x8xf32>
    %281 = arith.subf %277, %280 : vector<8x8xf32>
    %282 = math.exp %281 : vector<8x8xf32>
    %cst_109 = arith.constant dense<0.000000e+00> : vector<8xf32>
    %283 = vector.multi_reduction <add>, %282, %cst_109 [1] : vector<8x8xf32> to vector<8xf32>
    %284 = vector.shape_cast %283 : vector<8xf32> to vector<8x1xf32>
    %285 = tpu.reciprocal %284 {approx = true} : vector<8x1xf32> -> vector<8x1xf32>
    %286 = vector.broadcast %285 : vector<8x1xf32> to vector<8x8xf32>
    %287 = arith.mulf %282, %286 : vector<8x8xf32>
    %288 = arith.truncf %287 : vector<8x8xf32> to vector<8x8xbf16>
    %cst_110 = arith.constant dense<0.000000e+00> : vector<8x32xf32>
    %289 = tpu.matmul %288, %276, %cst_110 {dimension_numbers = #tpu.dot_dimension_numbers<[1], [0], [0], [1], [0, 0, 1, 1], [], []>} : vector<8x8xbf16>, vector<8x32xbf16>, vector<8x32xf32> -> vector<8x32xf32>
    %290 = arith.truncf %289 : vector<8x32xf32> to vector<8x32xbf16>
    %291 = vector.extract_strided_slice %223 {offsets = [64, 0], sizes = [32, 128], strides = [1, 1]} : vector<128x128xbf16> to vector<32x128xbf16>
    %cst_111 = arith.constant dense<0.000000e+00> : vector<8x128xf32>
    %292 = tpu.matmul %290, %291, %cst_111 {dimension_numbers = #tpu.dot_dimension_numbers<[1], [0], [0], [1], [0, 0, 1, 1], [], []>} : vector<8x32xbf16>, vector<32x128xbf16>, vector<8x128xf32> -> vector<8x128xf32>
    %293 = arith.addf %270, %292 : vector<8x128xf32>
    %294 = vector.extract_strided_slice %221 {offsets = [0, 96], sizes = [8, 32], strides = [1, 1]} : vector<8x384xf32> to vector<8x32xf32>
    %295 = arith.truncf %294 : vector<8x32xf32> to vector<8x32xbf16>
    %296 = vector.extract_strided_slice %221 {offsets = [0, 224], sizes = [8, 32], strides = [1, 1]} : vector<8x384xf32> to vector<8x32xf32>
    %297 = arith.truncf %296 : vector<8x32xf32> to vector<8x32xbf16>
    %298 = vector.extract_strided_slice %221 {offsets = [0, 352], sizes = [8, 32], strides = [1, 1]} : vector<8x384xf32> to vector<8x32xf32>
    %299 = arith.truncf %298 : vector<8x32xf32> to vector<8x32xbf16>
    %cst_112 = arith.constant dense<0.000000e+00> : vector<8x8xf32>
    %300 = tpu.matmul %295, %297, %cst_112 {dimension_numbers = #tpu.dot_dimension_numbers<[1], [1], [0], [0], [0, 0, 1, 0], [], []>} : vector<8x32xbf16>, vector<8x32xbf16>, vector<8x8xf32> -> vector<8x8xf32>
    %cst_113 = arith.constant dense<0xFF800000> : vector<8xf32>
    %301 = vector.multi_reduction <maximumf>, %300, %cst_113 [1] : vector<8x8xf32> to vector<8xf32>
    %302 = vector.shape_cast %301 : vector<8xf32> to vector<8x1xf32>
    %303 = vector.broadcast %302 : vector<8x1xf32> to vector<8x8xf32>
    %304 = arith.subf %300, %303 : vector<8x8xf32>
    %305 = math.exp %304 : vector<8x8xf32>
    %cst_114 = arith.constant dense<0.000000e+00> : vector<8xf32>
    %306 = vector.multi_reduction <add>, %305, %cst_114 [1] : vector<8x8xf32> to vector<8xf32>
    %307 = vector.shape_cast %306 : vector<8xf32> to vector<8x1xf32>
    %308 = tpu.reciprocal %307 {approx = true} : vector<8x1xf32> -> vector<8x1xf32>
    %309 = vector.broadcast %308 : vector<8x1xf32> to vector<8x8xf32>
    %310 = arith.mulf %305, %309 : vector<8x8xf32>
    %311 = arith.truncf %310 : vector<8x8xf32> to vector<8x8xbf16>
    %cst_115 = arith.constant dense<0.000000e+00> : vector<8x32xf32>
    %312 = tpu.matmul %311, %299, %cst_115 {dimension_numbers = #tpu.dot_dimension_numbers<[1], [0], [0], [1], [0, 0, 1, 1], [], []>} : vector<8x8xbf16>, vector<8x32xbf16>, vector<8x32xf32> -> vector<8x32xf32>
    %313 = arith.truncf %312 : vector<8x32xf32> to vector<8x32xbf16>
    %314 = vector.extract_strided_slice %223 {offsets = [96, 0], sizes = [32, 128], strides = [1, 1]} : vector<128x128xbf16> to vector<32x128xbf16>
    %cst_116 = arith.constant dense<0.000000e+00> : vector<8x128xf32>
    %315 = tpu.matmul %313, %314, %cst_116 {dimension_numbers = #tpu.dot_dimension_numbers<[1], [0], [0], [1], [0, 0, 1, 1], [], []>} : vector<8x32xbf16>, vector<32x128xbf16>, vector<8x128xf32> -> vector<8x128xf32>
    %316 = arith.addf %293, %315 : vector<8x128xf32>
    %c1_117 = arith.constant 1 : index
    %c0_118 = arith.constant 0 : index
    %c0_119 = arith.constant 0 : index
    %317 = vector.load %arg9[%c1_117, %c0_118, %c0_119] : memref<2x1x128xf32, #tpu.memory_space<vmem>>, vector<1x1x128xf32>
    %318 = vector.shape_cast %317 : vector<1x1x128xf32> to vector<1x128xf32>
    %319 = vector.broadcast %318 : vector<1x128xf32> to vector<8x128xf32>
    %320 = arith.addf %316, %319 : vector<8x128xf32>
    %321 = arith.addf %213, %320 : vector<8x128xf32>
    %c1_120 = arith.constant 1 : index
    %c0_121 = arith.constant 0 : index
    %c0_122 = arith.constant 0 : index
    %322 = vector.load %arg14[%c1_120, %c0_121, %c0_122] : memref<2x1x128xf32, #tpu.memory_space<vmem>>, vector<1x1x128xf32>
    %323 = vector.shape_cast %322 : vector<1x1x128xf32> to vector<1x128xf32>
    %c1_123 = arith.constant 1 : index
    %c0_124 = arith.constant 0 : index
    %c0_125 = arith.constant 0 : index
    %324 = vector.load %arg15[%c1_123, %c0_124, %c0_125] : memref<2x1x128xf32, #tpu.memory_space<vmem>>, vector<1x1x128xf32>
    %325 = vector.shape_cast %324 : vector<1x1x128xf32> to vector<1x128xf32>
    %cst_126 = arith.constant dense<0.000000e+00> : vector<8xf32>
    %326 = vector.multi_reduction <add>, %321, %cst_126 [1] : vector<8x128xf32> to vector<8xf32>
    %327 = vector.shape_cast %326 : vector<8xf32> to vector<8x1xf32>
    %cst_127 = arith.constant 1.280000e+02 : f32
    %328 = vector.broadcast %cst_127 : f32 to vector<8x1xf32>
    %329 = arith.divf %327, %328 : vector<8x1xf32>
    %330 = vector.broadcast %329 : vector<8x1xf32> to vector<8x128xf32>
    %331 = arith.subf %321, %330 : vector<8x128xf32>
    %332 = arith.mulf %331, %331 : vector<8x128xf32>
    %cst_128 = arith.constant dense<0.000000e+00> : vector<8xf32>
    %333 = vector.multi_reduction <add>, %332, %cst_128 [1] : vector<8x128xf32> to vector<8xf32>
    %334 = vector.shape_cast %333 : vector<8xf32> to vector<8x1xf32>
    %cst_129 = arith.constant 1.280000e+02 : f32
    %335 = vector.broadcast %cst_129 : f32 to vector<8x1xf32>
    %336 = arith.divf %334, %335 : vector<8x1xf32>
    %cst_130 = arith.constant 9.99999996E-13 : f32
    %337 = vector.broadcast %cst_130 : f32 to vector<8x1xf32>
    %338 = arith.addf %336, %337 : vector<8x1xf32>
    %339 = math.rsqrt %338 : vector<8x1xf32>
    %340 = vector.broadcast %339 : vector<8x1xf32> to vector<8x128xf32>
    %341 = arith.mulf %331, %340 : vector<8x128xf32>
    %342 = vector.broadcast %323 : vector<1x128xf32> to vector<8x128xf32>
    %343 = arith.mulf %341, %342 : vector<8x128xf32>
    %344 = vector.broadcast %325 : vector<1x128xf32> to vector<8x128xf32>
    %345 = arith.addf %343, %344 : vector<8x128xf32>
    %346 = arith.truncf %345 : vector<8x128xf32> to vector<8x128xbf16>
    %c1_131 = arith.constant 1 : index
    %c0_132 = arith.constant 0 : index
    %c0_133 = arith.constant 0 : index
    %347 = vector.load %arg10[%c1_131, %c0_132, %c0_133] : memref<2x128x256xbf16, #tpu.memory_space<vmem>>, vector<1x128x256xbf16>
    %348 = vector.shape_cast %347 : vector<1x128x256xbf16> to vector<128x256xbf16>
    %cst_134 = arith.constant dense<0.000000e+00> : vector<8x256xf32>
    %349 = tpu.matmul %346, %348, %cst_134 {dimension_numbers = #tpu.dot_dimension_numbers<[1], [0], [0], [1], [0, 0, 1, 1], [], []>} : vector<8x128xbf16>, vector<128x256xbf16>, vector<8x256xf32> -> vector<8x256xf32>
    %c1_135 = arith.constant 1 : index
    %c0_136 = arith.constant 0 : index
    %c0_137 = arith.constant 0 : index
    %350 = vector.load %arg11[%c1_135, %c0_136, %c0_137] : memref<2x1x256xf32, #tpu.memory_space<vmem>>, vector<1x1x256xf32>
    %351 = vector.shape_cast %350 : vector<1x1x256xf32> to vector<1x256xf32>
    %352 = vector.broadcast %351 : vector<1x256xf32> to vector<8x256xf32>
    %353 = arith.addf %349, %352 : vector<8x256xf32>
    %cst_138 = arith.constant 5.000000e-01 : f32
    %354 = vector.broadcast %cst_138 : f32 to vector<8x256xf32>
    %355 = arith.mulf %354, %353 : vector<8x256xf32>
    %cst_139 = arith.constant 0.707106769 : f32
    %356 = vector.broadcast %cst_139 : f32 to vector<8x256xf32>
    %357 = arith.mulf %353, %356 : vector<8x256xf32>
    %358 = math.erf %357 : vector<8x256xf32>
    %cst_140 = arith.constant 1.000000e+00 : f32
    %359 = vector.broadcast %cst_140 : f32 to vector<8x256xf32>
    %360 = arith.addf %359, %358 : vector<8x256xf32>
    %361 = arith.mulf %355, %360 : vector<8x256xf32>
    %362 = arith.truncf %361 : vector<8x256xf32> to vector<8x256xbf16>
    %c1_141 = arith.constant 1 : index
    %c0_142 = arith.constant 0 : index
    %c0_143 = arith.constant 0 : index
    %363 = vector.load %arg12[%c1_141, %c0_142, %c0_143] : memref<2x256x128xbf16, #tpu.memory_space<vmem>>, vector<1x256x128xbf16>
    %364 = vector.shape_cast %363 : vector<1x256x128xbf16> to vector<256x128xbf16>
    %cst_144 = arith.constant dense<0.000000e+00> : vector<8x128xf32>
    %365 = tpu.matmul %362, %364, %cst_144 {dimension_numbers = #tpu.dot_dimension_numbers<[1], [0], [0], [1], [0, 0, 1, 1], [], []>} : vector<8x256xbf16>, vector<256x128xbf16>, vector<8x128xf32> -> vector<8x128xf32>
    %c1_145 = arith.constant 1 : index
    %c0_146 = arith.constant 0 : index
    %c0_147 = arith.constant 0 : index
    %366 = vector.load %arg13[%c1_145, %c0_146, %c0_147] : memref<2x1x128xf32, #tpu.memory_space<vmem>>, vector<1x1x128xf32>
    %367 = vector.shape_cast %366 : vector<1x1x128xf32> to vector<1x128xf32>
    %368 = vector.broadcast %367 : vector<1x128xf32> to vector<8x128xf32>
    %369 = arith.addf %365, %368 : vector<8x128xf32>
    %370 = arith.addf %345, %369 : vector<8x128xf32>
    %c1_148 = arith.constant 1 : index
    %c0_149 = arith.constant 0 : index
    %c0_150 = arith.constant 0 : index
    %371 = vector.load %arg16[%c1_148, %c0_149, %c0_150] : memref<2x1x128xf32, #tpu.memory_space<vmem>>, vector<1x1x128xf32>
    %372 = vector.shape_cast %371 : vector<1x1x128xf32> to vector<1x128xf32>
    %c1_151 = arith.constant 1 : index
    %c0_152 = arith.constant 0 : index
    %c0_153 = arith.constant 0 : index
    %373 = vector.load %arg17[%c1_151, %c0_152, %c0_153] : memref<2x1x128xf32, #tpu.memory_space<vmem>>, vector<1x1x128xf32>
    %374 = vector.shape_cast %373 : vector<1x1x128xf32> to vector<1x128xf32>
    %cst_154 = arith.constant dense<0.000000e+00> : vector<8xf32>
    %375 = vector.multi_reduction <add>, %370, %cst_154 [1] : vector<8x128xf32> to vector<8xf32>
    %376 = vector.shape_cast %375 : vector<8xf32> to vector<8x1xf32>
    %cst_155 = arith.constant 1.280000e+02 : f32
    %377 = vector.broadcast %cst_155 : f32 to vector<8x1xf32>
    %378 = arith.divf %376, %377 : vector<8x1xf32>
    %379 = vector.broadcast %378 : vector<8x1xf32> to vector<8x128xf32>
    %380 = arith.subf %370, %379 : vector<8x128xf32>
    %381 = arith.mulf %380, %380 : vector<8x128xf32>
    %cst_156 = arith.constant dense<0.000000e+00> : vector<8xf32>
    %382 = vector.multi_reduction <add>, %381, %cst_156 [1] : vector<8x128xf32> to vector<8xf32>
    %383 = vector.shape_cast %382 : vector<8xf32> to vector<8x1xf32>
    %cst_157 = arith.constant 1.280000e+02 : f32
    %384 = vector.broadcast %cst_157 : f32 to vector<8x1xf32>
    %385 = arith.divf %383, %384 : vector<8x1xf32>
    %cst_158 = arith.constant 9.99999996E-13 : f32
    %386 = vector.broadcast %cst_158 : f32 to vector<8x1xf32>
    %387 = arith.addf %385, %386 : vector<8x1xf32>
    %388 = math.rsqrt %387 : vector<8x1xf32>
    %389 = vector.broadcast %388 : vector<8x1xf32> to vector<8x128xf32>
    %390 = arith.mulf %380, %389 : vector<8x128xf32>
    %391 = vector.broadcast %372 : vector<1x128xf32> to vector<8x128xf32>
    %392 = arith.mulf %390, %391 : vector<8x128xf32>
    %393 = vector.broadcast %374 : vector<1x128xf32> to vector<8x128xf32>
    %394 = arith.addf %392, %393 : vector<8x128xf32>
    %395 = arith.truncf %394 : vector<8x128xf32> to vector<8x128xbf16>
    %c0_159 = arith.constant 0 : index
    %c0_160 = arith.constant 0 : index
    %396 = vector.load %arg18[%c0_159, %c0_160] : memref<128x128xbf16, #tpu.memory_space<vmem>>, vector<128x128xbf16>
    %cst_161 = arith.constant dense<0.000000e+00> : vector<8x128xf32>
    %397 = tpu.matmul %395, %396, %cst_161 {dimension_numbers = #tpu.dot_dimension_numbers<[1], [0], [0], [1], [0, 0, 1, 1], [], []>} : vector<8x128xbf16>, vector<128x128xbf16>, vector<8x128xf32> -> vector<8x128xf32>
    %c0_162 = arith.constant 0 : index
    %c0_163 = arith.constant 0 : index
    %398 = vector.load %arg19[%c0_162, %c0_163] : memref<1x128xf32, #tpu.memory_space<vmem>>, vector<1x128xf32>
    %399 = vector.broadcast %398 : vector<1x128xf32> to vector<8x128xf32>
    %400 = arith.addf %397, %399 : vector<8x128xf32>
    %c0_164 = arith.constant 0 : index
    %c0_165 = arith.constant 0 : index
    %401 = vector.load %arg20[%c0_164, %c0_165] : memref<8x128xf32, #tpu.memory_space<vmem>>, vector<8x128xf32>
    tpu.vector_store %arg20[%c0_164, %c0_165], %400 {strides = array<i32>} : memref<8x128xf32, #tpu.memory_space<vmem>>, vector<8x128xf32>,
    return
  }
  func.func @transform_0(%arg0: i32) -> (i32, i32) {
    %c0_i32 = arith.constant 0 : i32
    %c0_i32_0 = arith.constant 0 : i32
    return %arg0, %c0_i32 : i32, i32
  }
  func.func @transform_1(%arg0: i32) -> (i32, i32) {
    %c0_i32 = arith.constant 0 : i32
    %c0_i32_0 = arith.constant 0 : i32
    %c0_i32_1 = arith.constant 0 : i32
    return %c0_i32, %c0_i32_0 : i32, i32
  }
  func.func @transform_2(%arg0: i32) -> (i32, i32) {
    %c0_i32 = arith.constant 0 : i32
    %c0_i32_0 = arith.constant 0 : i32
    %c0_i32_1 = arith.constant 0 : i32
    return %c0_i32, %c0_i32_0 : i32, i32
  }
  func.func @transform_3(%arg0: i32) -> (i32, i32) {
    %c0_i32 = arith.constant 0 : i32
    %c0_i32_0 = arith.constant 0 : i32
    %c0_i32_1 = arith.constant 0 : i32
    return %c0_i32, %c0_i32_0 : i32, i32
  }
  func.func @transform_4(%arg0: i32) -> (i32, i32) {
    %c0_i32 = arith.constant 0 : i32
    %c0_i32_0 = arith.constant 0 : i32
    %c0_i32_1 = arith.constant 0 : i32
    return %c0_i32, %c0_i32_0 : i32, i32
  }
  func.func @transform_5(%arg0: i32) -> (i32, i32, i32) {
    %c0_i32 = arith.constant 0 : i32
    %c0_i32_0 = arith.constant 0 : i32
    %c0_i32_1 = arith.constant 0 : i32
    %c0_i32_2 = arith.constant 0 : i32
    return %c0_i32, %c0_i32_0, %c0_i32_1 : i32, i32, i32
  }
  func.func @transform_6(%arg0: i32) -> (i32, i32, i32) {
    %c0_i32 = arith.constant 0 : i32
    %c0_i32_0 = arith.constant 0 : i32
    %c0_i32_1 = arith.constant 0 : i32
    %c0_i32_2 = arith.constant 0 : i32
    return %c0_i32, %c0_i32_0, %c0_i32_1 : i32, i32, i32
  }
  func.func @transform_7(%arg0: i32) -> (i32, i32, i32) {
    %c0_i32 = arith.constant 0 : i32
    %c0_i32_0 = arith.constant 0 : i32
    %c0_i32_1 = arith.constant 0 : i32
    %c0_i32_2 = arith.constant 0 : i32
    return %c0_i32, %c0_i32_0, %c0_i32_1 : i32, i32, i32
  }
  func.func @transform_8(%arg0: i32) -> (i32, i32, i32) {
    %c0_i32 = arith.constant 0 : i32
    %c0_i32_0 = arith.constant 0 : i32
    %c0_i32_1 = arith.constant 0 : i32
    %c0_i32_2 = arith.constant 0 : i32
    return %c0_i32, %c0_i32_0, %c0_i32_1 : i32, i32, i32
  }
  func.func @transform_9(%arg0: i32) -> (i32, i32, i32) {
    %c0_i32 = arith.constant 0 : i32
    %c0_i32_0 = arith.constant 0 : i32
    %c0_i32_1 = arith.constant 0 : i32
    %c0_i32_2 = arith.constant 0 : i32
    return %c0_i32, %c0_i32_0, %c0_i32_1 : i32, i32, i32
  }
  func.func @transform_10(%arg0: i32) -> (i32, i32, i32) {
    %c0_i32 = arith.constant 0 : i32
    %c0_i32_0 = arith.constant 0 : i32
    %c0_i32_1 = arith.constant 0 : i32
    %c0_i32_2 = arith.constant 0 : i32
    return %c0_i32, %c0_i32_0, %c0_i32_1 : i32, i32, i32
  }
  func.func @transform_11(%arg0: i32) -> (i32, i32, i32) {
    %c0_i32 = arith.constant 0 : i32
    %c0_i32_0 = arith.constant 0 : i32
    %c0_i32_1 = arith.constant 0 : i32
    %c0_i32_2 = arith.constant 0 : i32
    return %c0_i32, %c0_i32_0, %c0_i32_1 : i32, i32, i32
  }
  func.func @transform_12(%arg0: i32) -> (i32, i32, i32) {
    %c0_i32 = arith.constant 0 : i32
    %c0_i32_0 = arith.constant 0 : i32
    %c0_i32_1 = arith.constant 0 : i32
    %c0_i32_2 = arith.constant 0 : i32
    return %c0_i32, %c0_i32_0, %c0_i32_1 : i32, i32, i32
  }
  func.func @transform_13(%arg0: i32) -> (i32, i32, i32) {
    %c0_i32 = arith.constant 0 : i32
    %c0_i32_0 = arith.constant 0 : i32
    %c0_i32_1 = arith.constant 0 : i32
    %c0_i32_2 = arith.constant 0 : i32
    return %c0_i32, %c0_i32_0, %c0_i32_1 : i32, i32, i32
  }
  func.func @transform_14(%arg0: i32) -> (i32, i32, i32) {
    %c0_i32 = arith.constant 0 : i32
    %c0_i32_0 = arith.constant 0 : i32
    %c0_i32_1 = arith.constant 0 : i32
    %c0_i32_2 = arith.constant 0 : i32
    return %c0_i32, %c0_i32_0, %c0_i32_1 : i32, i32, i32
  }
  func.func @transform_15(%arg0: i32) -> (i32, i32, i32) {
    %c0_i32 = arith.constant 0 : i32
    %c0_i32_0 = arith.constant 0 : i32
    %c0_i32_1 = arith.constant 0 : i32
    %c0_i32_2 = arith.constant 0 : i32
    return %c0_i32, %c0_i32_0, %c0_i32_1 : i32, i32, i32
  }
  func.func @transform_16(%arg0: i32) -> (i32, i32, i32) {
    %c0_i32 = arith.constant 0 : i32
    %c0_i32_0 = arith.constant 0 : i32
    %c0_i32_1 = arith.constant 0 : i32
    %c0_i32_2 = arith.constant 0 : i32
    return %c0_i32, %c0_i32_0, %c0_i32_1 : i32, i32, i32
  }
  func.func @transform_17(%arg0: i32) -> (i32, i32) {
    %c0_i32 = arith.constant 0 : i32
    %c0_i32_0 = arith.constant 0 : i32
    %c0_i32_1 = arith.constant 0 : i32
    return %c0_i32, %c0_i32_0 : i32, i32
  }
  func.func @transform_18(%arg0: i32) -> (i32, i32) {
    %c0_i32 = arith.constant 0 : i32
    %c0_i32_0 = arith.constant 0 : i32
    %c0_i32_1 = arith.constant 0 : i32
    return %c0_i32, %c0_i32_0 : i32, i32
  }
  func.func @transform_19(%arg0: i32) -> (i32, i32) {
    %c0_i32 = arith.constant 0 : i32
    %c0_i32_0 = arith.constant 0 : i32
    return %arg0, %c0_i32 : i32, i32
  }
}

</mosaic_0001>

<llo_original>
// kernel: bert_ner_forward.1
$region0: #{bert_ner_forward.1}
  #allocation0 [shape = 'u32[]', space=smem, size = 0x4, offset = 0x4, fixed_abs, tag = 'smem constant byte address 0x4 - core index']
  #allocation1 [shape = 'u32[144,128]{1,0:T(1,128)}', space=vmem, size = 0x12000, scoped, tag = 'internal scratch']
  %s0 = inlined_call_operand.vmem [shape: s32[16,1], index: 0, kind: input, shape index: {}]
  %s1 = inlined_call_operand.hbm [shape: f32[128,128], index: 1, kind: input, shape index: {}]
  %s2 = inlined_call_operand.hbm [shape: bf16[512,128], index: 2, kind: input, shape index: {}]
  %s3 = inlined_call_operand.vmem [shape: f32[1,128], index: 3, kind: input, shape index: {}]
  %s4 = inlined_call_operand.hbm [shape: f32[1,128], index: 4, kind: input, shape index: {}]
  %s5 = inlined_call_operand.hbm [shape: bf16[2,128,384], index: 5, kind: input, shape index: {}]
  %s6 = inlined_call_operand.vmem [shape: f32[2,1,384], index: 6, kind: input, shape index: {}]
  %s7 = inlined_call_operand.hbm [shape: bf16[2,128,128], index: 7, kind: input, shape index: {}]
  %s8 = inlined_call_operand.vmem [shape: f32[2,1,128], index: 8, kind: input, shape index: {}]
  %s9 = inlined_call_operand.hbm [shape: bf16[2,128,256], index: 9, kind: input, shape index: {}]
  %s10 = inlined_call_operand.vmem [shape: f32[2,1,256], index: 10, kind: input, shape index: {}]
  %s11 = inlined_call_operand.hbm [shape: bf16[2,256,128], index: 11, kind: input, shape index: {}]
  %s12 = inlined_call_operand.vmem [shape: f32[2,1,128], index: 12, kind: input, shape index: {}]
  %s13 = inlined_call_operand.vmem [shape: f32[2,1,128], index: 13, kind: input, shape index: {}]
  %s14 = inlined_call_operand.vmem [shape: f32[2,1,128], index: 14, kind: input, shape index: {}]
  %s15 = inlined_call_operand.vmem [shape: f32[2,1,128], index: 15, kind: input, shape index: {}]
  %s16 = inlined_call_operand.vmem [shape: f32[2,1,128], index: 16, kind: input, shape index: {}]
  %s17 = inlined_call_operand.hbm [shape: bf16[128,128], index: 17, kind: input, shape index: {}]
  %s18 = inlined_call_operand.hbm [shape: f32[1,128], index: 18, kind: input, shape index: {}]
  %s19 = inlined_call_operand.vmem [shape: f32[16,128], index: 19, kind: output, shape index: {}]
  %s20 = sld [smem:[#allocation0]]
  $region145: #{bert_ner_forward.1} parent=0
    _
  %s22 = ssub.s32 1, %s20
  %s23 = scalar_select 0, %s22, %s20
  $region1: #{bert_ner_forward.1} parent=0
    #allocation2 [shape = 'u8[4096]{0}', space=vmem, size = 0x1000, scoped, tag = 'input window, operand 1, single buffered']
    #allocation3 [shape = 's32[2]{0}', space=sflag, size = 0x8, scoped, tag = 'scoped memory for bert_ner_forward.1']
    #allocation4 [shape = 'u8[131072]{0}', space=vmem, size = 0x20000, scoped, tag = 'input window, operand 2, single buffered']
    #allocation5 [shape = 's32[1]{0}', space=sflag, size = 0x4, scoped, tag = 'scoped memory for bert_ner_forward.1']
    #allocation6 [shape = 'u8[512]{0}', space=vmem, size = 0x400, scoped, tag = 'input window, operand 4, single buffered']
    #allocation7 [shape = 'u8[196608]{0}', space=vmem, size = 0x30000, scoped, tag = 'input window, operand 5, single buffered']
    #allocation8 [shape = 's32[1]{0}', space=sflag, size = 0x4, scoped, tag = 'scoped memory for bert_ner_forward.1']
    #allocation9 [shape = 'u8[65536]{0}', space=vmem, size = 0x10000, scoped, tag = 'input window, operand 7, single buffered']
    #allocation10 [shape = 'u8[131072]{0}', space=vmem, size = 0x20000, scoped, tag = 'input window, operand 9, single buffered']
    #allocation11 [shape = 's32[1]{0}', space=sflag, size = 0x4, scoped, tag = 'scoped memory for bert_ner_forward.1']
    #allocation12 [shape = 'u8[131072]{0}', space=vmem, size = 0x20000, scoped, tag = 'input window, operand 11, single buffered']
    #allocation13 [shape = 'u8[32768]{0}', space=vmem, size = 0x8000, scoped, tag = 'input window, operand 17, single buffered']
    #allocation14 [shape = 's32[1]{0}', space=sflag, size = 0x4, scoped, tag = 'scoped memory for bert_ner_forward.1']
    #allocation15 [shape = 'u8[512]{0}', space=vmem, size = 0x400, scoped, tag = 'input window, operand 18, single buffered']
    %24 = vsyncpa [#allocation3], 0
    %25 = vsyncpa [#allocation5], 0
    %26 = vsyncpa [#allocation8], 0
    %27 = vsyncpa [#allocation11], 0
    %28 = vsyncpa [#allocation14], 0
    loop: start=0, step=1, limit=4
    $region2: #{bert_ner_forward.1} parent=1 // loop_pre_header
      _
    $region3: #{bert_ner_forward.1} parent=1 // loop_header
      %s30 = sphi 0, %s34
      %p31 = scmp.ge.s32.totalorder %s30, 4
      %s40 = sphi 0, %s42
      %s43 = sphi 0, %s40
      %s44 = sphi 0, %s43
      %s60 = sphi 0, %s44
      %s64 = sphi 0, %s64
      %s66 = sphi 0, %s64
      %s67 = sphi 0, %s66
      %s81 = sphi 0, %s67
      %s85 = sphi 0, %s85
      %s87 = sphi 0, %s85
      %s88 = sphi 0, %s87
      %s102 = sphi 0, %s88
      %s106 = sphi 0, %s106
      %s108 = sphi 0, %s106
      %s109 = sphi 0, %s108
      %s123 = sphi 0, %s109
      %s127 = sphi 0, %s127
      %s129 = sphi 0, %s127
      %s130 = sphi 0, %s129
      %s144 = sphi 0, %s130
      %s148 = sphi 0, %s148
      %s150 = sphi 0, %s148
      %s151 = sphi 0, %s150
      %s165 = sphi 0, %s151
      %s169 = sphi 0, %s169
      %s171 = sphi 0, %s169
      %s172 = sphi 0, %s171
      %s186 = sphi 0, %s172
      %s190 = sphi 0, %s190
      %s192 = sphi 0, %s190
      %s193 = sphi 0, %s192
      %s207 = sphi 0, %s193
      %s211 = sphi 0, %s211
      %s213 = sphi 0, %s211
      %s214 = sphi 0, %s213
      %s228 = sphi 0, %s214
      %s232 = sphi 0, %s232
      %s234 = sphi 0, %s232
      %s235 = sphi 0, %s234
      %s249 = sphi 0, %s235
      %s253 = sphi 0, %s253
      %s255 = sphi 0, %s253
      %s256 = sphi 0, %s255
      %s270 = sphi 0, %s256
      %s274 = sphi 0, %s274
      %s276 = sphi 0, %s274
      %s277 = sphi 0, %s276
      %s291 = sphi 0, %s277
      %s295 = sphi 0, %s295
      %s297 = sphi 0, %s295
      %s298 = sphi 0, %s297
      %s312 = sphi 0, %s298
      %s316 = sphi 0, %s316
      %s318 = sphi 0, %s316
      %s319 = sphi 0, %s318
      %s333 = sphi 0, %s319
      %s337 = sphi 0, %s337
      %s339 = sphi 0, %s337
      %s340 = sphi 0, %s339
      %s354 = sphi 0, %s340
      %s358 = sphi 0, %s358
      %s360 = sphi 0, %s358
      %s361 = sphi 0, %s360
      %s375 = sphi 0, %s361
      %s379 = sphi 0, %s379
      %s381 = sphi 0, %s379
      %s382 = sphi 0, %s381
      %s396 = sphi 0, %s382
      %s400 = sphi 0, %s400
      %s402 = sphi 0, %s400
      %s403 = sphi 0, %s402
      %s417 = sphi 0, %s403
      %s421 = sphi 0, %s421
      %s423 = sphi 0, %s421
      %s424 = sphi 0, %s423
      %s438 = sphi 0, %s424
      %s444 = sphi 0, %s446
      %s447 = sphi 0, %s444
      %s448 = sphi 0, %s447
      %s464 = sphi 0, %s448
    $region4: #{bert_ner_forward.1} parent=1 // loop_header_branch
      %33 = sbr.rel (%p31) target = $region8
    $region5: #{bert_ner_forward.1} parent=1 // loop_body
      %s35 = ssub.s32 %s30, 1
      %s36 = ssub.s32 %s30, 2
      %s37 = sadd.s32 %s30, 1
      %s38 = ssub.s32 %s30, %s37
      %p39 = scmp.eq.s32.totalorder %s38, 0
      %s41 = sadd.s32 %s40, 1
      %s42 = scalar_select %p39, %s40, %s41
      %p45 = pneg %p39
      %p46 = scmp.eq.s32.totalorder %s30, 1
      %p47 = por %p45, %p46
      %p48 = scmp.ne.s32.totalorder %s40, %s43
      %p49 = scmp.eq.s32.totalorder %s30, 0
      %p50 = por %p48, %p49
      %p51 = scmp.ne.s32.totalorder %s40, %s43
      %p52 = scmp.eq.s32.totalorder %s35, 1
      %p53 = por %p51, %p52
      %p54 = scmp.ne.s32.totalorder %s43, %s44
      %p55 = scmp.eq.s32.totalorder %s35, 0
      %p56 = por %p54, %p55
      %p57 = scmp.ne.s32.totalorder %s43, %s44
      %p58 = scmp.eq.s32.totalorder %s36, 1
      %p59 = por %p57, %p58
      %p61 = scmp.ne.s32.totalorder %s44, %s60
      %p62 = scmp.eq.s32.totalorder %s36, 0
      %p63 = por %p61, %p62
      %s65 = sadd.s32 %s64, 1
      %p68 = scmp.eq.s32.totalorder %s30, 1
      %p69 = scmp.ne.s32.totalorder %s64, %s66
      %p70 = scmp.eq.s32.totalorder %s30, 0
      %p71 = por %p69, %p70
      %p72 = scmp.ne.s32.totalorder %s64, %s66
      %p73 = scmp.eq.s32.totalorder %s35, 1
      %p74 = por %p72, %p73
      %p75 = scmp.ne.s32.totalorder %s66, %s67
      %p76 = scmp.eq.s32.totalorder %s35, 0
      %p77 = por %p75, %p76
      %p78 = scmp.ne.s32.totalorder %s66, %s67
      %p79 = scmp.eq.s32.totalorder %s36, 1
      %p80 = por %p78, %p79
      %p82 = scmp.ne.s32.totalorder %s67, %s81
      %p83 = scmp.eq.s32.totalorder %s36, 0
      %p84 = por %p82, %p83
      %s86 = sadd.s32 %s85, 1
      %p89 = scmp.eq.s32.totalorder %s30, 1
      %p90 = scmp.ne.s32.totalorder %s85, %s87
      %p91 = scmp.eq.s32.totalorder %s30, 0
      %p92 = por %p90, %p91
      %p93 = scmp.ne.s32.totalorder %s85, %s87
      %p94 = scmp.eq.s32.totalorder %s35, 1
      %p95 = por %p93, %p94
      %p96 = scmp.ne.s32.totalorder %s87, %s88
      %p97 = scmp.eq.s32.totalorder %s35, 0
      %p98 = por %p96, %p97
      %p99 = scmp.ne.s32.totalorder %s87, %s88
      %p100 = scmp.eq.s32.totalorder %s36, 1
      %p101 = por %p99, %p100
      %p103 = scmp.ne.s32.totalorder %s88, %s102
      %p104 = scmp.eq.s32.totalorder %s36, 0
      %p105 = por %p103, %p104
      %s107 = sadd.s32 %s106, 1
      %p110 = scmp.eq.s32.totalorder %s30, 1
      %p111 = scmp.ne.s32.totalorder %s106, %s108
      %p112 = scmp.eq.s32.totalorder %s30, 0
      %p113 = por %p111, %p112
      %p114 = scmp.ne.s32.totalorder %s106, %s108
      %p115 = scmp.eq.s32.totalorder %s35, 1
      %p116 = por %p114, %p115
      %p117 = scmp.ne.s32.totalorder %s108, %s109
      %p118 = scmp.eq.s32.totalorder %s35, 0
      %p119 = por %p117, %p118
      %p120 = scmp.ne.s32.totalorder %s108, %s109
      %p121 = scmp.eq.s32.totalorder %s36, 1
      %p122 = por %p120, %p121
      %p124 = scmp.ne.s32.totalorder %s109, %s123
      %p125 = scmp.eq.s32.totalorder %s36, 0
      %p126 = por %p124, %p125
      %s128 = sadd.s32 %s127, 1
      %p131 = scmp.eq.s32.totalorder %s30, 1
      %p132 = scmp.ne.s32.totalorder %s127, %s129
      %p133 = scmp.eq.s32.totalorder %s30, 0
      %p134 = por %p132, %p133
      %p135 = scmp.ne.s32.totalorder %s127, %s129
      %p136 = scmp.eq.s32.totalorder %s35, 1
      %p137 = por %p135, %p136
      %p138 = scmp.ne.s32.totalorder %s129, %s130
      %p139 = scmp.eq.s32.totalorder %s35, 0
      %p140 = por %p138, %p139
      %p141 = scmp.ne.s32.totalorder %s129, %s130
      %p142 = scmp.eq.s32.totalorder %s36, 1
      %p143 = por %p141, %p142
      %p145 = scmp.ne.s32.totalorder %s130, %s144
      %p146 = scmp.eq.s32.totalorder %s36, 0
      %p147 = por %p145, %p146
      %s149 = sadd.s32 %s148, 1
      %p152 = scmp.eq.s32.totalorder %s30, 1
      %p153 = scmp.ne.s32.totalorder %s148, %s150
      %p154 = scmp.eq.s32.totalorder %s30, 0
      %p155 = por %p153, %p154
      %p156 = scmp.ne.s32.totalorder %s148, %s150
      %p157 = scmp.eq.s32.totalorder %s35, 1
      %p158 = por %p156, %p157
      %p159 = scmp.ne.s32.totalorder %s150, %s151
      %p160 = scmp.eq.s32.totalorder %s35, 0
      %p161 = por %p159, %p160
      %p162 = scmp.ne.s32.totalorder %s150, %s151
      %p163 = scmp.eq.s32.totalorder %s36, 1
      %p164 = por %p162, %p163
      %p166 = scmp.ne.s32.totalorder %s151, %s165
      %p167 = scmp.eq.s32.totalorder %s36, 0
      %p168 = por %p166, %p167
      %s170 = sadd.s32 %s169, 1
      %p173 = scmp.eq.s32.totalorder %s30, 1
      %p174 = scmp.ne.s32.totalorder %s169, %s171
      %p175 = scmp.eq.s32.totalorder %s30, 0
      %p176 = por %p174, %p175
      %p177 = scmp.ne.s32.totalorder %s169, %s171
      %p178 = scmp.eq.s32.totalorder %s35, 1
      %p179 = por %p177, %p178
      %p180 = scmp.ne.s32.totalorder %s171, %s172
      %p181 = scmp.eq.s32.totalorder %s35, 0
      %p182 = por %p180, %p181
      %p183 = scmp.ne.s32.totalorder %s171, %s172
      %p184 = scmp.eq.s32.totalorder %s36, 1
      %p185 = por %p183, %p184
      %p187 = scmp.ne.s32.totalorder %s172, %s186
      %p188 = scmp.eq.s32.totalorder %s36, 0
      %p189 = por %p187, %p188
      %s191 = sadd.s32 %s190, 1
      %p194 = scmp.eq.s32.totalorder %s30, 1
      %p195 = scmp.ne.s32.totalorder %s190, %s192
      %p196 = scmp.eq.s32.totalorder %s30, 0
      %p197 = por %p195, %p196
      %p198 = scmp.ne.s32.totalorder %s190, %s192
      %p199 = scmp.eq.s32.totalorder %s35, 1
      %p200 = por %p198, %p199
      %p201 = scmp.ne.s32.totalorder %s192, %s193
      %p202 = scmp.eq.s32.totalorder %s35, 0
      %p203 = por %p201, %p202
      %p204 = scmp.ne.s32.totalorder %s192, %s193
      %p205 = scmp.eq.s32.totalorder %s36, 1
      %p206 = por %p204, %p205
      %p208 = scmp.ne.s32.totalorder %s193, %s207
      %p209 = scmp.eq.s32.totalorder %s36, 0
      %p210 = por %p208, %p209
      %s212 = sadd.s32 %s211, 1
      %p215 = scmp.eq.s32.totalorder %s30, 1
      %p216 = scmp.ne.s32.totalorder %s211, %s213
      %p217 = scmp.eq.s32.totalorder %s30, 0
      %p218 = por %p216, %p217
      %p219 = scmp.ne.s32.totalorder %s211, %s213
      %p220 = scmp.eq.s32.totalorder %s35, 1
      %p221 = por %p219, %p220
      %p222 = scmp.ne.s32.totalorder %s213, %s214
      %p223 = scmp.eq.s32.totalorder %s35, 0
      %p224 = por %p222, %p223
      %p225 = scmp.ne.s32.totalorder %s213, %s214
      %p226 = scmp.eq.s32.totalorder %s36, 1
      %p227 = por %p225, %p226
      %p229 = scmp.ne.s32.totalorder %s214, %s228
      %p230 = scmp.eq.s32.totalorder %s36, 0
      %p231 = por %p229, %p230
      %s233 = sadd.s32 %s232, 1
      %p236 = scmp.eq.s32.totalorder %s30, 1
      %p237 = scmp.ne.s32.totalorder %s232, %s234
      %p238 = scmp.eq.s32.totalorder %s30, 0
      %p239 = por %p237, %p238
      %p240 = scmp.ne.s32.totalorder %s232, %s234
      %p241 = scmp.eq.s32.totalorder %s35, 1
      %p242 = por %p240, %p241
      %p243 = scmp.ne.s32.totalorder %s234, %s235
      %p244 = scmp.eq.s32.totalorder %s35, 0
      %p245 = por %p243, %p244
      %p246 = scmp.ne.s32.totalorder %s234, %s235
      %p247 = scmp.eq.s32.totalorder %s36, 1
      %p248 = por %p246, %p247
      %p250 = scmp.ne.s32.totalorder %s235, %s249
      %p251 = scmp.eq.s32.totalorder %s36, 0
      %p252 = por %p250, %p251
      %s254 = sadd.s32 %s253, 1
      %p257 = scmp.eq.s32.totalorder %s30, 1
      %p258 = scmp.ne.s32.totalorder %s253, %s255
      %p259 = scmp.eq.s32.totalorder %s30, 0
      %p260 = por %p258, %p259
      %p261 = scmp.ne.s32.totalorder %s253, %s255
      %p262 = scmp.eq.s32.totalorder %s35, 1
      %p263 = por %p261, %p262
      %p264 = scmp.ne.s32.totalorder %s255, %s256
      %p265 = scmp.eq.s32.totalorder %s35, 0
      %p266 = por %p264, %p265
      %p267 = scmp.ne.s32.totalorder %s255, %s256
      %p268 = scmp.eq.s32.totalorder %s36, 1
      %p269 = por %p267, %p268
      %p271 = scmp.ne.s32.totalorder %s256, %s270
      %p272 = scmp.eq.s32.totalorder %s36, 0
      %p273 = por %p271, %p272
      %s275 = sadd.s32 %s274, 1
      %p278 = scmp.eq.s32.totalorder %s30, 1
      %p279 = scmp.ne.s32.totalorder %s274, %s276
      %p280 = scmp.eq.s32.totalorder %s30, 0
      %p281 = por %p279, %p280
      %p282 = scmp.ne.s32.totalorder %s274, %s276
      %p283 = scmp.eq.s32.totalorder %s35, 1
      %p284 = por %p282, %p283
      %p285 = scmp.ne.s32.totalorder %s276, %s277
      %p286 = scmp.eq.s32.totalorder %s35, 0
      %p287 = por %p285, %p286
      %p288 = scmp.ne.s32.totalorder %s276, %s277
      %p289 = scmp.eq.s32.totalorder %s36, 1
      %p290 = por %p288, %p289
      %p292 = scmp.ne.s32.totalorder %s277, %s291
      %p293 = scmp.eq.s32.totalorder %s36, 0
      %p294 = por %p292, %p293
      %s296 = sadd.s32 %s295, 1
      %p299 = scmp.eq.s32.totalorder %s30, 1
      %p300 = scmp.ne.s32.totalorder %s295, %s297
      %p301 = scmp.eq.s32.totalorder %s30, 0
      %p302 = por %p300, %p301
      %p303 = scmp.ne.s32.totalorder %s295, %s297
      %p304 = scmp.eq.s32.totalorder %s35, 1
      %p305 = por %p303, %p304
      %p306 = scmp.ne.s32.totalorder %s297, %s298
      %p307 = scmp.eq.s32.totalorder %s35, 0
      %p308 = por %p306, %p307
      %p309 = scmp.ne.s32.totalorder %s297, %s298
      %p310 = scmp.eq.s32.totalorder %s36, 1
      %p311 = por %p309, %p310
      %p313 = scmp.ne.s32.totalorder %s298, %s312
      %p314 = scmp.eq.s32.totalorder %s36, 0
      %p315 = por %p313, %p314
      %s317 = sadd.s32 %s316, 1
      %p320 = scmp.eq.s32.totalorder %s30, 1
      %p321 = scmp.ne.s32.totalorder %s316, %s318
      %p322 = scmp.eq.s32.totalorder %s30, 0
      %p323 = por %p321, %p322
      %p324 = scmp.ne.s32.totalorder %s316, %s318
      %p325 = scmp.eq.s32.totalorder %s35, 1
      %p326 = por %p324, %p325
      %p327 = scmp.ne.s32.totalorder %s318, %s319
      %p328 = scmp.eq.s32.totalorder %s35, 0
      %p329 = por %p327, %p328
      %p330 = scmp.ne.s32.totalorder %s318, %s319
      %p331 = scmp.eq.s32.totalorder %s36, 1
      %p332 = por %p330, %p331
      %p334 = scmp.ne.s32.totalorder %s319, %s333
      %p335 = scmp.eq.s32.totalorder %s36, 0
      %p336 = por %p334, %p335
      %s338 = sadd.s32 %s337, 1
      %p341 = scmp.eq.s32.totalorder %s30, 1
      %p342 = scmp.ne.s32.totalorder %s337, %s339
      %p343 = scmp.eq.s32.totalorder %s30, 0
      %p344 = por %p342, %p343
      %p345 = scmp.ne.s32.totalorder %s337, %s339
      %p346 = scmp.eq.s32.totalorder %s35, 1
      %p347 = por %p345, %p346
      %p348 = scmp.ne.s32.totalorder %s339, %s340
      %p349 = scmp.eq.s32.totalorder %s35, 0
      %p350 = por %p348, %p349
      %p351 = scmp.ne.s32.totalorder %s339, %s340
      %p352 = scmp.eq.s32.totalorder %s36, 1
      %p353 = por %p351, %p352
      %p355 = scmp.ne.s32.totalorder %s340, %s354
      %p356 = scmp.eq.s32.totalorder %s36, 0
      %p357 = por %p355, %p356
      %s359 = sadd.s32 %s358, 1
      %p362 = scmp.eq.s32.totalorder %s30, 1
      %p363 = scmp.ne.s32.totalorder %s358, %s360
      %p364 = scmp.eq.s32.totalorder %s30, 0
      %p365 = por %p363, %p364
      %p366 = scmp.ne.s32.totalorder %s358, %s360
      %p367 = scmp.eq.s32.totalorder %s35, 1
      %p368 = por %p366, %p367
      %p369 = scmp.ne.s32.totalorder %s360, %s361
      %p370 = scmp.eq.s32.totalorder %s35, 0
      %p371 = por %p369, %p370
      %p372 = scmp.ne.s32.totalorder %s360, %s361
      %p373 = scmp.eq.s32.totalorder %s36, 1
      %p374 = por %p372, %p373
      %p376 = scmp.ne.s32.totalorder %s361, %s375
      %p377 = scmp.eq.s32.totalorder %s36, 0
      %p378 = por %p376, %p377
      %s380 = sadd.s32 %s379, 1
      %p383 = scmp.eq.s32.totalorder %s30, 1
      %p384 = scmp.ne.s32.totalorder %s379, %s381
      %p385 = scmp.eq.s32.totalorder %s30, 0
      %p386 = por %p384, %p385
      %p387 = scmp.ne.s32.totalorder %s379, %s381
      %p388 = scmp.eq.s32.totalorder %s35, 1
      %p389 = por %p387, %p388
      %p390 = scmp.ne.s32.totalorder %s381, %s382
      %p391 = scmp.eq.s32.totalorder %s35, 0
      %p392 = por %p390, %p391
      %p393 = scmp.ne.s32.totalorder %s381, %s382
      %p394 = scmp.eq.s32.totalorder %s36, 1
      %p395 = por %p393, %p394
      %p397 = scmp.ne.s32.totalorder %s382, %s396
      %p398 = scmp.eq.s32.totalorder %s36, 0
      %p399 = por %p397, %p398
      %s401 = sadd.s32 %s400, 1
      %p404 = scmp.eq.s32.totalorder %s30, 1
      %p405 = scmp.ne.s32.totalorder %s400, %s402
      %p406 = scmp.eq.s32.totalorder %s30, 0
      %p407 = por %p405, %p406
      %p408 = scmp.ne.s32.totalorder %s400, %s402
      %p409 = scmp.eq.s32.totalorder %s35, 1
      %p410 = por %p408, %p409
      %p411 = scmp.ne.s32.totalorder %s402, %s403
      %p412 = scmp.eq.s32.totalorder %s35, 0
      %p413 = por %p411, %p412
      %p414 = scmp.ne.s32.totalorder %s402, %s403
      %p415 = scmp.eq.s32.totalorder %s36, 1
      %p416 = por %p414, %p415
      %p418 = scmp.ne.s32.totalorder %s403, %s417
      %p419 = scmp.eq.s32.totalorder %s36, 0
      %p420 = por %p418, %p419
      %s422 = sadd.s32 %s421, 1
      %p425 = scmp.eq.s32.totalorder %s30, 1
      %p426 = scmp.ne.s32.totalorder %s421, %s423
      %p427 = scmp.eq.s32.totalorder %s30, 0
      %p428 = por %p426, %p427
      %p429 = scmp.ne.s32.totalorder %s421, %s423
      %p430 = scmp.eq.s32.totalorder %s35, 1
      %p431 = por %p429, %p430
      %p432 = scmp.ne.s32.totalorder %s423, %s424
      %p433 = scmp.eq.s32.totalorder %s35, 0
      %p434 = por %p432, %p433
      %p435 = scmp.ne.s32.totalorder %s423, %s424
      %p436 = scmp.eq.s32.totalorder %s36, 1
      %p437 = por %p435, %p436
      %p439 = scmp.ne.s32.totalorder %s424, %s438
      %p440 = scmp.eq.s32.totalorder %s36, 0
      %p441 = por %p439, %p440
      %s442 = ssub.s32 %s30, %s37
      %p443 = scmp.eq.s32.totalorder %s442, 0
      %s445 = sadd.s32 %s444, 1
      %s446 = scalar_select %p443, %s444, %s445
      %p449 = pneg %p443
      %p450 = scmp.eq.s32.totalorder %s30, 1
      %p451 = por %p449, %p450
      %p452 = scmp.ne.s32.totalorder %s444, %s447
      %p453 = scmp.eq.s32.totalorder %s30, 0
      %p454 = por %p452, %p453
      %p455 = scmp.ne.s32.totalorder %s444, %s447
      %p456 = scmp.eq.s32.totalorder %s35, 1
      %p457 = por %p455, %p456
      %p458 = scmp.ne.s32.totalorder %s447, %s448
      %p459 = scmp.eq.s32.totalorder %s35, 0
      %p460 = por %p458, %p459
      %p461 = scmp.ne.s32.totalorder %s447, %s448
      %p462 = scmp.eq.s32.totalorder %s36, 1
      %p463 = por %p461, %p462
      %p465 = scmp.ne.s32.totalorder %s448, %s464
      %p466 = scmp.eq.s32.totalorder %s36, 0
      %p467 = por %p465, %p466
      %p468 = scmp.le.s32.totalorder 1, %s30
      %p469 = scmp.lt.s32.totalorder %s30, 3
      %p470 = pnand %p468, %p469
      %p471 = pneg %p470
      // Predicated region
      $region9: #{bert_ner_forward.1} parent=5 // pred_check
        _
      $region10: #{bert_ner_forward.1} parent=5 // pred_check_branch
        %473 = sbr.rel (%p470) target = $region12
      $region11: #{bert_ner_forward.1} parent=5 // pred_region
        %s474 = ssub.s32 %s30, 1
        // Predicated region
        $region13: #{bert_ner_forward.1} parent=11 // pred_check
          %p475 = pneg %p77
        $region14: #{bert_ner_forward.1} parent=11 // pred_check_branch
          %477 = sbr.rel (%p475) target = $region16
        $region15: #{bert_ner_forward.1} parent=11 // pred_region
          %s479 = ssub.s32 128, 128
          %480 = vsyncadd [#allocation3], %s479
          %s482 = sshll.u32 [#allocation2], 4
          %s483 = int_to_ptr.vmem [resolvable:$true] %s482
          %485 = dma.hbm_to_vmem [thread:$0]  %s1, 128, %s483, [#allocation3]
        $region16: #{bert_ner_forward.1} parent=11 // pred_fallthru
          _
        // Predicated region
        $region17: #{bert_ner_forward.1} parent=11 // pred_check
          %p486 = pneg %p98
        $region18: #{bert_ner_forward.1} parent=11 // pred_check_branch
          %488 = sbr.rel (%p486) target = $region20
        $region19: #{bert_ner_forward.1} parent=11 // pred_region
          %s490 = ssub.s32 4096, 4096
          %491 = vsyncadd [#allocation5], %s490
          %s492 = sshll.u32 [#allocation4], 4
          %s493 = int_to_ptr.vmem [resolvable:$true] %s492
          %498 = dma.hbm_to_vmem [thread:$0]  %s2, 4096, %s493, [#allocation5], 64, 64, 4
        $region20: #{bert_ner_forward.1} parent=11 // pred_fallthru
          _
        // Predicated region
        $region21: #{bert_ner_forward.1} parent=11 // pred_check
          %p499 = pneg %p119
        $region22: #{bert_ner_forward.1} parent=11 // pred_check_branch
          %501 = sbr.rel (%p499) target = $region24
        $region23: #{bert_ner_forward.1} parent=11 // pred_region
          _
        $region24: #{bert_ner_forward.1} parent=11 // pred_fallthru
          _
        // Predicated region
        $region25: #{bert_ner_forward.1} parent=11 // pred_check
          %p502 = pneg %p140
        $region26: #{bert_ner_forward.1} parent=11 // pred_check_branch
          %504 = sbr.rel (%p502) target = $region28
        $region27: #{bert_ner_forward.1} parent=11 // pred_region
          %s506 = ssub.s32 16, 16
          %507 = vsyncadd [#allocation5], %s506
          %s509 = sshll.u32 [#allocation6], 4
          %s510 = int_to_ptr.vmem [resolvable:$true] %s509
          %512 = dma.hbm_to_vmem [thread:$0]  %s4, 16, %s510, [#allocation5]
        $region28: #{bert_ner_forward.1} parent=11 // pred_fallthru
          _
        // Predicated region
        $region29: #{bert_ner_forward.1} parent=11 // pred_check
          %p513 = pneg %p161
        $region30: #{bert_ner_forward.1} parent=11 // pred_check_branch
          %515 = sbr.rel (%p513) target = $region32
        $region31: #{bert_ner_forward.1} parent=11 // pred_region
          %s517 = ssub.s32 6144, 6144
          %518 = vsyncadd [#allocation8], %s517
          %s519 = sshll.u32 [#allocation7], 4
          %s520 = int_to_ptr.vmem [resolvable:$true] %s519
          %525 = dma.hbm_to_vmem [thread:$0]  %s5, 6144, %s520, [#allocation8], 192, 192, 12
        $region32: #{bert_ner_forward.1} parent=11 // pred_fallthru
          _
        // Predicated region
        $region33: #{bert_ner_forward.1} parent=11 // pred_check
          %p526 = pneg %p182
        $region34: #{bert_ner_forward.1} parent=11 // pred_check_branch
          %528 = sbr.rel (%p526) target = $region36
        $region35: #{bert_ner_forward.1} parent=11 // pred_region
          _
        $region36: #{bert_ner_forward.1} parent=11 // pred_fallthru
          _
        // Predicated region
        $region37: #{bert_ner_forward.1} parent=11 // pred_check
          %p529 = pneg %p203
        $region38: #{bert_ner_forward.1} parent=11 // pred_check_branch
          %531 = sbr.rel (%p529) target = $region40
        $region39: #{bert_ner_forward.1} parent=11 // pred_region
          %s533 = ssub.s32 2048, 2048
          %534 = vsyncadd [#allocation8], %s533
          %s535 = sshll.u32 [#allocation9], 4
          %s536 = int_to_ptr.vmem [resolvable:$true] %s535
          %541 = dma.hbm_to_vmem [thread:$0]  %s7, 2048, %s536, [#allocation8], 64, 64, 4
        $region40: #{bert_ner_forward.1} parent=11 // pred_fallthru
          _
        // Predicated region
        $region41: #{bert_ner_forward.1} parent=11 // pred_check
          %p542 = pneg %p224
        $region42: #{bert_ner_forward.1} parent=11 // pred_check_branch
          %544 = sbr.rel (%p542) target = $region44
        $region43: #{bert_ner_forward.1} parent=11 // pred_region
          _
        $region44: #{bert_ner_forward.1} parent=11 // pred_fallthru
          _
        // Predicated region
        $region45: #{bert_ner_forward.1} parent=11 // pred_check
          %p545 = pneg %p245
        $region46: #{bert_ner_forward.1} parent=11 // pred_check_branch
          %547 = sbr.rel (%p545) target = $region48
        $region47: #{bert_ner_forward.1} parent=11 // pred_region
          %s549 = ssub.s32 4096, 4096
          %550 = vsyncadd [#allocation11], %s549
          %s551 = sshll.u32 [#allocation10], 4
          %s552 = int_to_ptr.vmem [resolvable:$true] %s551
          %557 = dma.hbm_to_vmem [thread:$0]  %s9, 4096, %s552, [#allocation11], 128, 128, 8
        $region48: #{bert_ner_forward.1} parent=11 // pred_fallthru
          _
        // Predicated region
        $region49: #{bert_ner_forward.1} parent=11 // pred_check
          %p558 = pneg %p266
        $region50: #{bert_ner_forward.1} parent=11 // pred_check_branch
          %560 = sbr.rel (%p558) target = $region52
        $region51: #{bert_ner_forward.1} parent=11 // pred_region
          _
        $region52: #{bert_ner_forward.1} parent=11 // pred_fallthru
          _
        // Predicated region
        $region53: #{bert_ner_forward.1} parent=11 // pred_check
          %p561 = pneg %p287
        $region54: #{bert_ner_forward.1} parent=11 // pred_check_branch
          %563 = sbr.rel (%p561) target = $region56
        $region55: #{bert_ner_forward.1} parent=11 // pred_region
          %s565 = ssub.s32 4096, 4096
          %566 = vsyncadd [#allocation11], %s565
          %s567 = sshll.u32 [#allocation12], 4
          %s568 = int_to_ptr.vmem [resolvable:$true] %s567
          %573 = dma.hbm_to_vmem [thread:$0]  %s11, 4096, %s568, [#allocation11], 64, 64, 4
        $region56: #{bert_ner_forward.1} parent=11 // pred_fallthru
          _
        // Predicated region
        $region57: #{bert_ner_forward.1} parent=11 // pred_check
          %p574 = pneg %p308
        $region58: #{bert_ner_forward.1} parent=11 // pred_check_branch
          %576 = sbr.rel (%p574) target = $region60
        $region59: #{bert_ner_forward.1} parent=11 // pred_region
          _
        $region60: #{bert_ner_forward.1} parent=11 // pred_fallthru
          _
        // Predicated region
        $region61: #{bert_ner_forward.1} parent=11 // pred_check
          %p577 = pneg %p329
        $region62: #{bert_ner_forward.1} parent=11 // pred_check_branch
          %579 = sbr.rel (%p577) target = $region64
        $region63: #{bert_ner_forward.1} parent=11 // pred_region
          _
        $region64: #{bert_ner_forward.1} parent=11 // pred_fallthru
          _
        // Predicated region
        $region65: #{bert_ner_forward.1} parent=11 // pred_check
          %p580 = pneg %p350
        $region66: #{bert_ner_forward.1} parent=11 // pred_check_branch
          %582 = sbr.rel (%p580) target = $region68
        $region67: #{bert_ner_forward.1} parent=11 // pred_region
          _
        $region68: #{bert_ner_forward.1} parent=11 // pred_fallthru
          _
        // Predicated region
        $region69: #{bert_ner_forward.1} parent=11 // pred_check
          %p583 = pneg %p371
        $region70: #{bert_ner_forward.1} parent=11 // pred_check_branch
          %585 = sbr.rel (%p583) target = $region72
        $region71: #{bert_ner_forward.1} parent=11 // pred_region
          _
        $region72: #{bert_ner_forward.1} parent=11 // pred_fallthru
          _
        // Predicated region
        $region73: #{bert_ner_forward.1} parent=11 // pred_check
          %p586 = pneg %p392
        $region74: #{bert_ner_forward.1} parent=11 // pred_check_branch
          %588 = sbr.rel (%p586) target = $region76
        $region75: #{bert_ner_forward.1} parent=11 // pred_region
          _
        $region76: #{bert_ner_forward.1} parent=11 // pred_fallthru
          _
        // Predicated region
        $region77: #{bert_ner_forward.1} parent=11 // pred_check
          %p589 = pneg %p413
        $region78: #{bert_ner_forward.1} parent=11 // pred_check_branch
          %591 = sbr.rel (%p589) target = $region80
        $region79: #{bert_ner_forward.1} parent=11 // pred_region
          %s593 = ssub.s32 1024, 1024
          %594 = vsyncadd [#allocation14], %s593
          %s595 = sshll.u32 [#allocation13], 4
          %s596 = int_to_ptr.vmem [resolvable:$true] %s595
          %601 = dma.hbm_to_vmem [thread:$0]  %s17, 1024, %s596, [#allocation14], 64, 64, 4
        $region80: #{bert_ner_forward.1} parent=11 // pred_fallthru
          _
        // Predicated region
        $region81: #{bert_ner_forward.1} parent=11 // pred_check
          %p602 = pneg %p434
        $region82: #{bert_ner_forward.1} parent=11 // pred_check_branch
          %604 = sbr.rel (%p602) target = $region84
        $region83: #{bert_ner_forward.1} parent=11 // pred_region
          %s606 = ssub.s32 16, 16
          %607 = vsyncadd [#allocation14], %s606
          %s609 = sshll.u32 [#allocation15], 4
          %s610 = int_to_ptr.vmem [resolvable:$true] %s609
          %612 = dma.hbm_to_vmem [thread:$0]  %s18, 16, %s610, [#allocation14]
        $region84: #{bert_ner_forward.1} parent=11 // pred_fallthru
          _
      $region12: #{bert_ner_forward.1} parent=5 // pred_fallthru
        _
      %p613 = scmp.lt.s32.totalorder %s30, 2
      // Predicated region
      $region85: #{bert_ner_forward.1} parent=5 // pred_check
        %p614 = pneg %p613
      $region86: #{bert_ner_forward.1} parent=5 // pred_check_branch
        %616 = sbr.rel (%p614) target = $region88
      $region87: #{bert_ner_forward.1} parent=5 // pred_region
        // Predicated region
        $region89: #{bert_ner_forward.1} parent=87 // pred_check
          %p617 = pneg %p50
        $region90: #{bert_ner_forward.1} parent=87 // pred_check_branch
          %619 = sbr.rel (%p617) target = $region92
        $region91: #{bert_ner_forward.1} parent=87 // pred_region
          %p620 = scmp.lt.s32.totalorder %s30, 1
          %s621 = scalar_select %p620, %s30, 1
          %s622 = smul.addr %s621, 8
          %s623 = scalar_lea.vmem %s0, %s622
        $region92: #{bert_ner_forward.1} parent=87 // pred_fallthru
          _
      $region88: #{bert_ner_forward.1} parent=5 // pred_fallthru
        _
      %p624 = scmp.le.s32.totalorder 1, %s30
      %p625 = scmp.lt.s32.totalorder %s30, 3
      %p626 = pnand %p624, %p625
      %p627 = pneg %p626
      // Predicated region
      $region93: #{bert_ner_forward.1} parent=5 // pred_check
        _
      $region94: #{bert_ner_forward.1} parent=5 // pred_check_branch
        %629 = sbr.rel (%p626) target = $region96
      $region95: #{bert_ner_forward.1} parent=5 // pred_region
        %s630 = ssub.s32 %s30, 1
        // Predicated region
        $region97: #{bert_ner_forward.1} parent=95 // pred_check
          %p631 = pneg %p77
        $region98: #{bert_ner_forward.1} parent=95 // pred_check_branch
          %633 = sbr.rel (%p631) target = $region100
        $region99: #{bert_ner_forward.1} parent=95 // pred_region
          %634 = dma.done [#allocation3], 128
        $region100: #{bert_ner_forward.1} parent=95 // pred_fallthru
          _
        // Predicated region
        $region101: #{bert_ner_forward.1} parent=95 // pred_check
          %p635 = pneg %p98
        $region102: #{bert_ner_forward.1} parent=95 // pred_check_branch
          %637 = sbr.rel (%p635) target = $region104
        $region103: #{bert_ner_forward.1} parent=95 // pred_region
          %638 = dma.done [#allocation5], 4096
        $region104: #{bert_ner_forward.1} parent=95 // pred_fallthru
          _
        // Predicated region
        $region105: #{bert_ner_forward.1} parent=95 // pred_check
          %p639 = pneg %p140
        $region106: #{bert_ner_forward.1} parent=95 // pred_check_branch
          %641 = sbr.rel (%p639) target = $region108
        $region107: #{bert_ner_forward.1} parent=95 // pred_region
          %642 = dma.done [#allocation5], 16
        $region108: #{bert_ner_forward.1} parent=95 // pred_fallthru
          _
        // Predicated region
        $region109: #{bert_ner_forward.1} parent=95 // pred_check
          %p643 = pneg %p161
        $region110: #{bert_ner_forward.1} parent=95 // pred_check_branch
          %645 = sbr.rel (%p643) target = $region112
        $region111: #{bert_ner_forward.1} parent=95 // pred_region
          %646 = dma.done [#allocation8], 6144
        $region112: #{bert_ner_forward.1} parent=95 // pred_fallthru
          _
        // Predicated region
        $region113: #{bert_ner_forward.1} parent=95 // pred_check
          %p647 = pneg %p203
        $region114: #{bert_ner_forward.1} parent=95 // pred_check_branch
          %649 = sbr.rel (%p647) target = $region116
        $region115: #{bert_ner_forward.1} parent=95 // pred_region
          %650 = dma.done [#allocation8], 2048
        $region116: #{bert_ner_forward.1} parent=95 // pred_fallthru
          _
        // Predicated region
        $region117: #{bert_ner_forward.1} parent=95 // pred_check
          %p651 = pneg %p245
        $region118: #{bert_ner_forward.1} parent=95 // pred_check_branch
          %653 = sbr.rel (%p651) target = $region120
        $region119: #{bert_ner_forward.1} parent=95 // pred_region
          %654 = dma.done [#allocation11], 4096
        $region120: #{bert_ner_forward.1} parent=95 // pred_fallthru
          _
        // Predicated region
        $region121: #{bert_ner_forward.1} parent=95 // pred_check
          %p655 = pneg %p287
        $region122: #{bert_ner_forward.1} parent=95 // pred_check_branch
          %657 = sbr.rel (%p655) target = $region124
        $region123: #{bert_ner_forward.1} parent=95 // pred_region
          %658 = dma.done [#allocation11], 4096
        $region124: #{bert_ner_forward.1} parent=95 // pred_fallthru
          _
        // Predicated region
        $region125: #{bert_ner_forward.1} parent=95 // pred_check
          %p659 = pneg %p413
        $region126: #{bert_ner_forward.1} parent=95 // pred_check_branch
          %661 = sbr.rel (%p659) target = $region128
        $region127: #{bert_ner_forward.1} parent=95 // pred_region
          %662 = dma.done [#allocation14], 1024
        $region128: #{bert_ner_forward.1} parent=95 // pred_fallthru
          _
        // Predicated region
        $region129: #{bert_ner_forward.1} parent=95 // pred_check
          %p663 = pneg %p434
        $region130: #{bert_ner_forward.1} parent=95 // pred_check_branch
          %665 = sbr.rel (%p663) target = $region132
        $region131: #{bert_ner_forward.1} parent=95 // pred_region
          %666 = dma.done [#allocation14], 16
        $region132: #{bert_ner_forward.1} parent=95 // pred_fallthru
          _
        %p667 = scmp.lt.s32.totalorder %s35, 1
        %s668 = scalar_select %p667, %s35, 1
        %s669 = smul.addr %s668, 8
        %s670 = scalar_lea.vmem %s0, %s669
        %p671 = pneg %p56
        %p672 = pneg %p53
        %p673 = pneg %p77
        %p674 = pneg %p74
        %p675 = pneg %p98
        %p676 = pneg %p95
        %p677 = pneg %p119
        %p678 = pneg %p116
        %p679 = pneg %p140
        %p680 = pneg %p137
        %p681 = pneg %p161
        %p682 = pneg %p158
        %p683 = pneg %p182
        %p684 = pneg %p179
        %p685 = pneg %p203
        %p686 = pneg %p200
        %p687 = pneg %p224
        %p688 = pneg %p221
        %p689 = pneg %p245
        %p690 = pneg %p242
        %p691 = pneg %p266
        %p692 = pneg %p263
        %p693 = pneg %p287
        %p694 = pneg %p284
        %p695 = pneg %p308
        %p696 = pneg %p305
        %p697 = pneg %p329
        %p698 = pneg %p326
        %p699 = pneg %p350
        %p700 = pneg %p347
        %p701 = pneg %p371
        %p702 = pneg %p368
        %p703 = pneg %p392
        %p704 = pneg %p389
        %p705 = pneg %p413
        %p706 = pneg %p410
        %p707 = pneg %p434
        %p708 = pneg %p431
        %p709 = pneg %p460
        %p710 = pneg %p457
        %p711 = scmp.lt.s32.totalorder %s35, 1
        %s712 = scalar_select %p711, %s35, 1
        %s713 = smul.addr %s712, 8
        %s714 = scalar_lea.vmem %s19, %s713
        %p715 = scmp.lt.s32.totalorder %s35, 1
        %s716 = scalar_select %p715, %s35, 1
        %s717 = smul.addr %s716, 8
        %s718 = scalar_lea.vmem %s0, %s717
        %p719 = scmp.lt.s32.totalorder %s35, 1
        %s720 = scalar_select %p719, %s35, 1
        %s721 = smul.addr %s720, 8
        %s722 = scalar_lea.vmem %s19, %s721
        %v724 = vld [vmem:[%s718] sm:$0xff]
        %v725 = vlaneseq
        %v726 = vand.u32 %v725, 127
        %v727 = vadd.s32 %v726, 128
        %v728 = vadd.s32 %v726, 256
        %v729 = vadd.s32 %v726, 384
        %730 = vset.pattern.permute.xlu0 0
        %731 = vperm.xlu0 %730, %v724
        %v732 = vpop.permute.xlu0 %731
        %vm733 = vcmp.eq.s32.totalorder %v732, %v726
        %vm734 = vcmp.eq.s32.totalorder %v732, %v727
        %vm735 = vcmp.eq.s32.totalorder %v732, %v728
        %vm736 = vcmp.eq.s32.totalorder %v732, %v729
        %v737 = vsel %vm733, 1, 0
        %v738 = vsel %vm734, 1, 0
        %v739 = vsel %vm735, 1, 0
        %v740 = vsel %vm736, 1, 0
        %v741 = vcvt.s32.f32 %v737
        %v742 = vcvt.s32.f32 %v738
        %v743 = vcvt.s32.f32 %v739
        %v744 = vcvt.s32.f32 %v740
        %v745 = vpack.c.bf16 %v741, %v741
        %v746 = vpack.c.bf16 %v742, %v742
        %v747 = vpack.c.bf16 %v743, %v743
        %v748 = vpack.c.bf16 %v744, %v744
        %v749 = vld [vmem:[#allocation4] sm:$0xf]
        %v750 = vld [vmem:[#allocation4 + $0x4] sm:$0xf]
        %v751 = vld [vmem:[#allocation4 + $0x8] sm:$0xf]
        %v752 = vld [vmem:[#allocation4 + $0xc] sm:$0xf]
        %v753 = vld [vmem:[#allocation4 + $0x10] sm:$0xf]
        %v754 = vld [vmem:[#allocation4 + $0x14] sm:$0xf]
        %v755 = vld [vmem:[#allocation4 + $0x18] sm:$0xf]
        %v756 = vld [vmem:[#allocation4 + $0x1c] sm:$0xf]
        %v757 = vld [vmem:[#allocation4 + $0x20] sm:$0xf]
        %v758 = vld [vmem:[#allocation4 + $0x24] sm:$0xf]
        %v759 = vld [vmem:[#allocation4 + $0x28] sm:$0xf]
        %v760 = vld [vmem:[#allocation4 + $0x2c] sm:$0xf]
        %v761 = vld [vmem:[#allocation4 + $0x30] sm:$0xf]
        %v762 = vld [vmem:[#allocation4 + $0x34] sm:$0xf]
        %v763 = vld [vmem:[#allocation4 + $0x38] sm:$0xf]
        %v764 = vld [vmem:[#allocation4 + $0x3c] sm:$0xf]
        %v765 = vld [vmem:[#allocation4 + $0x40] sm:$0xf]
        %v766 = vld [vmem:[#allocation4 + $0x44] sm:$0xf]
        %v767 = vld [vmem:[#allocation4 + $0x48] sm:$0xf]
        %v768 = vld [vmem:[#allocation4 + $0x4c] sm:$0xf]
        %v769 = vld [vmem:[#allocation4 + $0x50] sm:$0xf]
        %v770 = vld [vmem:[#allocation4 + $0x54] sm:$0xf]
        %v771 = vld [vmem:[#allocation4 + $0x58] sm:$0xf]
        %v772 = vld [vmem:[#allocation4 + $0x5c] sm:$0xf]
        %v773 = vld [vmem:[#allocation4 + $0x60] sm:$0xf]
        %v774 = vld [vmem:[#allocation4 + $0x64] sm:$0xf]
        %v775 = vld [vmem:[#allocation4 + $0x68] sm:$0xf]
        %v776 = vld [vmem:[#allocation4 + $0x6c] sm:$0xf]
        %v777 = vld [vmem:[#allocation4 + $0x70] sm:$0xf]
        %v778 = vld [vmem:[#allocation4 + $0x74] sm:$0xf]
        %v779 = vld [vmem:[#allocation4 + $0x78] sm:$0xf]
        %v780 = vld [vmem:[#allocation4 + $0x7c] sm:$0xf]
        %v781 = vld [vmem:[#allocation4 + $0x80] sm:$0xf]
        %v782 = vld [vmem:[#allocation4 + $0x84] sm:$0xf]
        %v783 = vld [vmem:[#allocation4 + $0x88] sm:$0xf]
        %v784 = vld [vmem:[#allocation4 + $0x8c] sm:$0xf]
        %v785 = vld [vmem:[#allocation4 + $0x90] sm:$0xf]
        %v786 = vld [vmem:[#allocation4 + $0x94] sm:$0xf]
        %v787 = vld [vmem:[#allocation4 + $0x98] sm:$0xf]
        %v788 = vld [vmem:[#allocation4 + $0x9c] sm:$0xf]
        %v789 = vld [vmem:[#allocation4 + $0xa0] sm:$0xf]
        %v790 = vld [vmem:[#allocation4 + $0xa4] sm:$0xf]
        %v791 = vld [vmem:[#allocation4 + $0xa8] sm:$0xf]
        %v792 = vld [vmem:[#allocation4 + $0xac] sm:$0xf]
        %v793 = vld [vmem:[#allocation4 + $0xb0] sm:$0xf]
        %v794 = vld [vmem:[#allocation4 + $0xb4] sm:$0xf]
        %v795 = vld [vmem:[#allocation4 + $0xb8] sm:$0xf]
        %v796 = vld [vmem:[#allocation4 + $0xbc] sm:$0xf]
        %v797 = vld [vmem:[#allocation4 + $0xc0] sm:$0xf]
        %v798 = vld [vmem:[#allocation4 + $0xc4] sm:$0xf]
        %v799 = vld [vmem:[#allocation4 + $0xc8] sm:$0xf]
        %v800 = vld [vmem:[#allocation4 + $0xcc] sm:$0xf]
        %v801 = vld [vmem:[#allocation4 + $0xd0] sm:$0xf]
        %v802 = vld [vmem:[#allocation4 + $0xd4] sm:$0xf]
        %v803 = vld [vmem:[#allocation4 + $0xd8] sm:$0xf]
        %v804 = vld [vmem:[#allocation4 + $0xdc] sm:$0xf]
        %v805 = vld [vmem:[#allocation4 + $0xe0] sm:$0xf]
        %v806 = vld [vmem:[#allocation4 + $0xe4] sm:$0xf]
        %v807 = vld [vmem:[#allocation4 + $0xe8] sm:$0xf]
        %v808 = vld [vmem:[#allocation4 + $0xec] sm:$0xf]
        %v809 = vld [vmem:[#allocation4 + $0xf0] sm:$0xf]
        %v810 = vld [vmem:[#allocation4 + $0xf4] sm:$0xf]
        %v811 = vld [vmem:[#allocation4 + $0xf8] sm:$0xf]
        %v812 = vld [vmem:[#allocation4 + $0xfc] sm:$0xf]
        %v813 = vld [vmem:[#allocation2] sm:$0xff]
        %v878 = vunpack.c.l.b16 %v749
        %v879 = vunpack.c.l.b16 %v750
        %v880 = vunpack.c.l.b16 %v751
        %v881 = vunpack.c.l.b16 %v752
        %v882 = vunpack.c.l.b16 %v753
        %v883 = vunpack.c.l.b16 %v754
        %v884 = vunpack.c.l.b16 %v755
        %v885 = vunpack.c.l.b16 %v756
        %v886 = vunpack.c.l.b16 %v757
        %v887 = vunpack.c.l.b16 %v758
        %v888 = vunpack.c.l.b16 %v759
        %v889 = vunpack.c.l.b16 %v760
        %v890 = vunpack.c.l.b16 %v761
        %v891 = vunpack.c.l.b16 %v762
        %v892 = vunpack.c.l.b16 %v763
        %v893 = vunpack.c.l.b16 %v764
        %v894 = vunpack.c.l.b16 %v765
        %v895 = vunpack.c.l.b16 %v766
        %v896 = vunpack.c.l.b16 %v767
        %v897 = vunpack.c.l.b16 %v768
        %v898 = vunpack.c.l.b16 %v769
        %v899 = vunpack.c.l.b16 %v770
        %v900 = vunpack.c.l.b16 %v771
        %v901 = vunpack.c.l.b16 %v772
        %v902 = vunpack.c.l.b16 %v773
        %v903 = vunpack.c.l.b16 %v774
        %v904 = vunpack.c.l.b16 %v775
        %v905 = vunpack.c.l.b16 %v776
        %v906 = vunpack.c.l.b16 %v777
        %v907 = vunpack.c.l.b16 %v778
        %v908 = vunpack.c.l.b16 %v779
        %v909 = vunpack.c.l.b16 %v780
        %v910 = vunpack.c.l.b16 %v781
        %v911 = vunpack.c.l.b16 %v782
        %v912 = vunpack.c.l.b16 %v783
        %v913 = vunpack.c.l.b16 %v784
        %v914 = vunpack.c.l.b16 %v785
        %v915 = vunpack.c.l.b16 %v786
        %v916 = vunpack.c.l.b16 %v787
        %v917 = vunpack.c.l.b16 %v788
        %v918 = vunpack.c.l.b16 %v789
        %v919 = vunpack.c.l.b16 %v790
        %v920 = vunpack.c.l.b16 %v791
        %v921 = vunpack.c.l.b16 %v792
        %v922 = vunpack.c.l.b16 %v793
        %v923 = vunpack.c.l.b16 %v794
        %v924 = vunpack.c.l.b16 %v795
        %v925 = vunpack.c.l.b16 %v796
        %v926 = vunpack.c.l.b16 %v797
        %v927 = vunpack.c.l.b16 %v798
        %v928 = vunpack.c.l.b16 %v799
        %v929 = vunpack.c.l.b16 %v800
        %v930 = vunpack.c.l.b16 %v801
        %v931 = vunpack.c.l.b16 %v802
        %v932 = vunpack.c.l.b16 %v803
        %v933 = vunpack.c.l.b16 %v804
        %v934 = vunpack.c.l.b16 %v805
        %v935 = vunpack.c.l.b16 %v806
        %v936 = vunpack.c.l.b16 %v807
        %v937 = vunpack.c.l.b16 %v808
        %v938 = vunpack.c.l.b16 %v809
        %v939 = vunpack.c.l.b16 %v810
        %v940 = vunpack.c.l.b16 %v811
        %v941 = vunpack.c.l.b16 %v812
        %v942 = vpack.c.b16 %v879, %v878
        %v943 = vpack.c.b16 %v881, %v880
        %v944 = vpack.c.b16 %v883, %v882
        %v945 = vpack.c.b16 %v885, %v884
        %v946 = vpack.c.b16 %v887, %v886
        %v947 = vpack.c.b16 %v889, %v888
        %v948 = vpack.c.b16 %v891, %v890
        %v949 = vpack.c.b16 %v893, %v892
        %v950 = vpack.c.b16 %v895, %v894
        %v951 = vpack.c.b16 %v897, %v896
        %v952 = vpack.c.b16 %v899, %v898
        %v953 = vpack.c.b16 %v901, %v900
        %v954 = vpack.c.b16 %v903, %v902
        %v955 = vpack.c.b16 %v905, %v904
        %v956 = vpack.c.b16 %v907, %v906
        %v957 = vpack.c.b16 %v909, %v908
        %v958 = vpack.c.b16 %v911, %v910
        %v959 = vpack.c.b16 %v913, %v912
        %v960 = vpack.c.b16 %v915, %v914
        %v961 = vpack.c.b16 %v917, %v916
        %v962 = vpack.c.b16 %v919, %v918
        %v963 = vpack.c.b16 %v921, %v920
        %v964 = vpack.c.b16 %v923, %v922
        %v965 = vpack.c.b16 %v925, %v924
        %v966 = vpack.c.b16 %v927, %v926
        %v967 = vpack.c.b16 %v929, %v928
        %v968 = vpack.c.b16 %v931, %v930
        %v969 = vpack.c.b16 %v933, %v932
        %v970 = vpack.c.b16 %v935, %v934
        %v971 = vpack.c.b16 %v937, %v936
        %v972 = vpack.c.b16 %v939, %v938
        %v973 = vpack.c.b16 %v941, %v940
        %1006 = vmatprep.subr.bf16.mxu0 0
        %1007 = vmatpush1.bf16.msra.mxu0 %v949
        %1008 = vmatprep.subr.bf16.mxu0 0
        %1009 = vmatpush1.bf16.msra.mxu0 %v948
        %1010 = vmatprep.subr.bf16.mxu0 0
        %1011 = vmatpush1.bf16.msra.mxu0 %v947
        %1012 = vmatprep.subr.bf16.mxu0 0
        %1013 = vmatpush1.bf16.msra.mxu0 %v946
        %1014 = vmatprep.subr.bf16.mxu0 0
        %1015 = vmatpush1.bf16.msra.mxu0 %v945
        %1016 = vmatprep.subr.bf16.mxu0 0
        %1017 = vmatpush1.bf16.msra.mxu0 %v944
        %1018 = vmatprep.subr.bf16.mxu0 0
        %1019 = vmatpush1.bf16.msra.mxu0 %v943
        %1020 = vmatprep.subr.bf16.mxu0 0
        %1021 = vmatpush1.bf16.msra.mxu0 %v942
        %1022 = vmatprep.subr.bf16.mxu0 0
        %1023 = vmatpush2.bf16.msra.mxu0 %v957
        %1024 = vmatprep.subr.bf16.mxu0 0
        %1025 = vmatpush2.bf16.msra.mxu0 %v956
        %1026 = vmatprep.subr.bf16.mxu0 0
        %1027 = vmatpush2.bf16.msra.mxu0 %v955
        %1028 = vmatprep.subr.bf16.mxu0 0
        %1029 = vmatpush2.bf16.msra.mxu0 %v954
        %1030 = vmatprep.subr.bf16.mxu0 0
        %1031 = vmatpush2.bf16.msra.mxu0 %v953
        %1032 = vmatprep.subr.bf16.mxu0 0
        %1033 = vmatpush2.bf16.msra.mxu0 %v952
        %1034 = vmatprep.subr.bf16.mxu0 0
        %1035 = vmatpush2.bf16.msra.mxu0 %v951
        %1036 = vmatprep.subr.bf16.mxu0 0
        %1037 = vmatpush2.bf16.msra.mxu0 %v950
        %1038 = vmatprep.mubr.bf16.mxu0 %v746
        %1039 = vmatmul.mubr.bf16.gmra.mxu0 %v745
        %v1040 = vpop.f32.mrf.mxu0
        %v1041 = vadd.f32 %v813, %v1040
        %v1042 = vpop.f32.mrf.mxu0
        %v1043 = vpop.f32.mrf.mxu0
        %v1044 = vpop.f32.mrf.mxu0
        %1045 = vdwg.mxu0
        %1046 = vmatprep.subr.bf16.mxu0 0
        %1047 = vmatpush1.bf16.msra.mxu0 %v965
        %1048 = vmatprep.subr.bf16.mxu0 0
        %1049 = vmatpush1.bf16.msra.mxu0 %v964
        %1050 = vmatprep.subr.bf16.mxu0 0
        %1051 = vmatpush1.bf16.msra.mxu0 %v963
        %1052 = vmatprep.subr.bf16.mxu0 0
        %1053 = vmatpush1.bf16.msra.mxu0 %v962
        %1054 = vmatprep.subr.bf16.mxu0 0
        %1055 = vmatpush1.bf16.msra.mxu0 %v961
        %1056 = vmatprep.subr.bf16.mxu0 0
        %1057 = vmatpush1.bf16.msra.mxu0 %v960
        %1058 = vmatprep.subr.bf16.mxu0 0
        %1059 = vmatpush1.bf16.msra.mxu0 %v959
        %1060 = vmatprep.subr.bf16.mxu0 0
        %1061 = vmatpush1.bf16.msra.mxu0 %v958
        %1062 = vmatprep.subr.bf16.mxu0 0
        %1063 = vmatpush2.bf16.msra.mxu0 %v973
        %1064 = vmatprep.subr.bf16.mxu0 0
        %1065 = vmatpush2.bf16.msra.mxu0 %v972
        %1066 = vmatprep.subr.bf16.mxu0 0
        %1067 = vmatpush2.bf16.msra.mxu0 %v971
        %1068 = vmatprep.subr.bf16.mxu0 0
        %1069 = vmatpush2.bf16.msra.mxu0 %v970
        %1070 = vmatprep.subr.bf16.mxu0 0
        %1071 = vmatpush2.bf16.msra.mxu0 %v969
        %1072 = vmatprep.subr.bf16.mxu0 0
        %1073 = vmatpush2.bf16.msra.mxu0 %v968
        %1074 = vmatprep.subr.bf16.mxu0 0
        %1075 = vmatpush2.bf16.msra.mxu0 %v967
        %1076 = vmatprep.subr.bf16.mxu0 0
        %1077 = vmatpush2.bf16.msra.mxu0 %v966
        %1078 = vmatprep.mubr.bf16.mxu0 %v748
        %1079 = vmatmul.mubr.bf16.gmra.mxu0 %v747
        %v1080 = vpop.f32.mrf.mxu0
        %v1081 = vadd.f32 %v1041, %v1080
        %v1082 = vpop.f32.mrf.mxu0
        %v1083 = vpop.f32.mrf.mxu0
        %v1084 = vpop.f32.mrf.mxu0
        %1085 = vdwg.mxu0
        %v1086 = vld [vmem:[%s3] sm:$0x1]
        %v1087 = vld [vmem:[#allocation6] sm:$0x1]
        %1088 = vadd.xlane.f32.xlu0 %v1081
        %v1089 = vpop.xlane.xlu0 %1088
        %v1090 = vrcp.pop 128.0
        %v1091 = vmul.f32 %v1089, %v1090
        %v1092 = vsub.f32 %v1081, %v1091
        %v1093 = vmul.f32 %v1092, %v1092
        %1094 = vadd.xlane.f32.xlu0 %v1093
        %v1095 = vpop.xlane.xlu0 %1094
        %v1096 = vmul.f32 %v1095, %v1090
        %v1097 = vadd.f32 %v1096, 1e-12
        %v1098 = vrsqrt.pop %v1097
        %v1099 = vmul.f32 %v1092, %v1098
        %v1101 = vlaneseq
        %v1102 = vshrl.u32 %v1101, 7
        %v1103 = vsub.s32 0, %v1102
        %v1104 = vrot.slane %v1086, %v1103
        %v1106 = vmul.f32 %v1099, %v1104
        %v1108 = vlaneseq
        %v1109 = vshrl.u32 %v1108, 7
        %v1110 = vsub.s32 0, %v1109
        %v1111 = vrot.slane %v1087, %v1110
        %v1113 = vadd.f32 %v1106, %v1111
        %v1114 = vpack.c.bf16 %v1113, %v1113
        %v1115 = vld [vmem:[#allocation7] sm:$0xff]
        %v1116 = vld [vmem:[#allocation7 + $0x8] sm:$0xf]
        %v1117 = vld [vmem:[#allocation7 + $0xc] sm:$0xff]
        %v1118 = vld [vmem:[#allocation7 + $0x14] sm:$0xf]
        %v1119 = vld [vmem:[#allocation7 + $0x18] sm:$0xff]
        %v1120 = vld [vmem:[#allocation7 + $0x20] sm:$0xf]
        %v1121 = vld [vmem:[#allocation7 + $0x24] sm:$0xff]
        %v1122 = vld [vmem:[#allocation7 + $0x2c] sm:$0xf]
        %v1123 = vld [vmem:[#allocation7 + $0x30] sm:$0xff]
        %v1124 = vld [vmem:[#allocation7 + $0x38] sm:$0xf]
        %v1125 = vld [vmem:[#allocation7 + $0x3c] sm:$0xff]
        %v1126 = vld [vmem:[#allocation7 + $0x44] sm:$0xf]
        %v1127 = vld [vmem:[#allocation7 + $0x48] sm:$0xff]
        %v1128 = vld [vmem:[#allocation7 + $0x50] sm:$0xf]
        %v1129 = vld [vmem:[#allocation7 + $0x54] sm:$0xff]
        %v1130 = vld [vmem:[#allocation7 + $0x5c] sm:$0xf]
        %v1131 = vld [vmem:[#allocation7 + $0x60] sm:$0xff]
        %v1132 = vld [vmem:[#allocation7 + $0x68] sm:$0xf]
        %v1133 = vld [vmem:[#allocation7 + $0x6c] sm:$0xff]
        %v1134 = vld [vmem:[#allocation7 + $0x74] sm:$0xf]
        %v1135 = vld [vmem:[#allocation7 + $0x78] sm:$0xff]
        %v1136 = vld [vmem:[#allocation7 + $0x80] sm:$0xf]
        %v1137 = vld [vmem:[#allocation7 + $0x84] sm:$0xff]
        %v1138 = vld [vmem:[#allocation7 + $0x8c] sm:$0xf]
        %v1139 = vld [vmem:[#allocation7 + $0x90] sm:$0xff]
        %v1140 = vld [vmem:[#allocation7 + $0x98] sm:$0xf]
        %v1141 = vld [vmem:[#allocation7 + $0x9c] sm:$0xff]
        %v1142 = vld [vmem:[#allocation7 + $0xa4] sm:$0xf]
        %v1143 = vld [vmem:[#allocation7 + $0xa8] sm:$0xff]
        %v1144 = vld [vmem:[#allocation7 + $0xb0] sm:$0xf]
        %v1145 = vld [vmem:[#allocation7 + $0xb4] sm:$0xff]
        %v1146 = vld [vmem:[#allocation7 + $0xbc] sm:$0xf]
        %v1147 = vld [vmem:[%s6] sm:$0x7]
        %v1149 = vlaneseq
        %v1150 = vshrl.u32 %v1149, 7
        %v1151 = vsub.s32 0, %v1150
        %v1152 = vrot.slane %v1147, %v1151
        %v1153 = vlaneseq
        %v1154 = vshrl.u32 %v1153, 7
        %v1155 = vsub.s32 1, %v1154
        %v1156 = vrot.slane %v1147, %v1155
        %v1157 = vlaneseq
        %v1158 = vshrl.u32 %v1157, 7
        %v1159 = vsub.s32 2, %v1158
        %v1160 = vrot.slane %v1147, %v1159
        %v1196 = vunpack.c.l.b16 %v1115
        %v1197 = vunpack.c.h.b16 %v1115
        %v1198 = vunpack.c.l.b16 %v1116
        %v1199 = vunpack.c.l.b16 %v1117
        %v1200 = vunpack.c.h.b16 %v1117
        %v1201 = vunpack.c.l.b16 %v1118
        %v1202 = vunpack.c.l.b16 %v1119
        %v1203 = vunpack.c.h.b16 %v1119
        %v1204 = vunpack.c.l.b16 %v1120
        %v1205 = vunpack.c.l.b16 %v1121
        %v1206 = vunpack.c.h.b16 %v1121
        %v1207 = vunpack.c.l.b16 %v1122
        %v1208 = vunpack.c.l.b16 %v1123
        %v1209 = vunpack.c.h.b16 %v1123
        %v1210 = vunpack.c.l.b16 %v1124
        %v1211 = vunpack.c.l.b16 %v1125
        %v1212 = vunpack.c.h.b16 %v1125
        %v1213 = vunpack.c.l.b16 %v1126
        %v1214 = vunpack.c.l.b16 %v1127
        %v1215 = vunpack.c.h.b16 %v1127
        %v1216 = vunpack.c.l.b16 %v1128
        %v1217 = vunpack.c.l.b16 %v1129
        %v1218 = vunpack.c.h.b16 %v1129
        %v1219 = vunpack.c.l.b16 %v1130
        %v1220 = vunpack.c.l.b16 %v1131
        %v1221 = vunpack.c.h.b16 %v1131
        %v1222 = vunpack.c.l.b16 %v1132
        %v1223 = vunpack.c.l.b16 %v1133
        %v1224 = vunpack.c.h.b16 %v1133
        %v1225 = vunpack.c.l.b16 %v1134
        %v1226 = vunpack.c.l.b16 %v1135
        %v1227 = vunpack.c.h.b16 %v1135
        %v1228 = vunpack.c.l.b16 %v1136
        %v1229 = vunpack.c.l.b16 %v1137
        %v1230 = vunpack.c.h.b16 %v1137
        %v1231 = vunpack.c.l.b16 %v1138
        %v1232 = vunpack.c.l.b16 %v1139
        %v1233 = vunpack.c.h.b16 %v1139
        %v1234 = vunpack.c.l.b16 %v1140
        %v1235 = vunpack.c.l.b16 %v1141
        %v1236 = vunpack.c.h.b16 %v1141
        %v1237 = vunpack.c.l.b16 %v1142
        %v1238 = vunpack.c.l.b16 %v1143
        %v1239 = vunpack.c.h.b16 %v1143
        %v1240 = vunpack.c.l.b16 %v1144
        %v1241 = vunpack.c.l.b16 %v1145
        %v1242 = vunpack.c.h.b16 %v1145
        %v1243 = vunpack.c.l.b16 %v1146
        %v1244 = vpack.c.b16 %v1199, %v1196
        %v1245 = vpack.c.b16 %v1200, %v1197
        %v1246 = vpack.c.b16 %v1201, %v1198
        %v1247 = vpack.c.b16 %v1205, %v1202
        %v1248 = vpack.c.b16 %v1206, %v1203
        %v1249 = vpack.c.b16 %v1207, %v1204
        %v1250 = vpack.c.b16 %v1211, %v1208
        %v1251 = vpack.c.b16 %v1212, %v1209
        %v1252 = vpack.c.b16 %v1213, %v1210
        %v1253 = vpack.c.b16 %v1217, %v1214
        %v1254 = vpack.c.b16 %v1218, %v1215
        %v1255 = vpack.c.b16 %v1219, %v1216
        %v1256 = vpack.c.b16 %v1223, %v1220
        %v1257 = vpack.c.b16 %v1224, %v1221
        %v1258 = vpack.c.b16 %v1225, %v1222
        %v1259 = vpack.c.b16 %v1229, %v1226
        %v1260 = vpack.c.b16 %v1230, %v1227
        %v1261 = vpack.c.b16 %v1231, %v1228
        %v1262 = vpack.c.b16 %v1235, %v1232
        %v1263 = vpack.c.b16 %v1236, %v1233
        %v1264 = vpack.c.b16 %v1237, %v1234
        %v1265 = vpack.c.b16 %v1241, %v1238
        %v1266 = vpack.c.b16 %v1242, %v1239
        %v1267 = vpack.c.b16 %v1243, %v1240
        %1292 = vmatprep.subr.bf16.mxu0 %v1266
        %1293 = vmatpush1.bf16.msra.mxu0 %v1265
        %1294 = vmatprep.subr.bf16.mxu0 %v1263
        %1295 = vmatpush1.bf16.msra.mxu0 %v1262
        %1296 = vmatprep.subr.bf16.mxu0 %v1260
        %1297 = vmatpush1.bf16.msra.mxu0 %v1259
        %1298 = vmatprep.subr.bf16.mxu0 %v1257
        %1299 = vmatpush1.bf16.msra.mxu0 %v1256
        %1300 = vmatprep.subr.bf16.mxu0 %v1254
        %1301 = vmatpush1.bf16.msra.mxu0 %v1253
        %1302 = vmatprep.subr.bf16.mxu0 %v1251
        %1303 = vmatpush1.bf16.msra.mxu0 %v1250
        %1304 = vmatprep.subr.bf16.mxu0 %v1248
        %1305 = vmatpush1.bf16.msra.mxu0 %v1247
        %1306 = vmatprep.subr.bf16.mxu0 %v1245
        %1307 = vmatpush1.bf16.msra.mxu0 %v1244
        %1308 = vmatprep.subr.bf16.mxu0 0
        %1309 = vmatpush2.bf16.msra.mxu0 0
        %1310 = vmatprep.subr.bf16.mxu0 0
        %1311 = vmatpush2.bf16.msra.mxu0 0
        %1312 = vmatprep.subr.bf16.mxu0 0
        %1313 = vmatpush2.bf16.msra.mxu0 0
        %1314 = vmatprep.subr.bf16.mxu0 0
        %1315 = vmatpush2.bf16.msra.mxu0 0
        %1316 = vmatprep.subr.bf16.mxu0 0
        %1317 = vmatpush2.bf16.msra.mxu0 0
        %1318 = vmatprep.subr.bf16.mxu0 0
        %1319 = vmatpush2.bf16.msra.mxu0 0
        %1320 = vmatprep.subr.bf16.mxu0 0
        %1321 = vmatpush2.bf16.msra.mxu0 0
        %1322 = vmatprep.subr.bf16.mxu0 0
        %1323 = vmatpush2.bf16.msra.mxu0 0
        %1324 = vmatprep.mubr.bf16.mxu0 0
        %1325 = vmatmul.mubr.bf16.gmra.mxu0 %v1114
        %v1326 = vpop.f32.mrf.mxu0
        %v1327 = vadd.f32 %v1152, %v1326
        %v1328 = vpop.f32.mrf.mxu0
        %v1329 = vadd.f32 %v1156, %v1328
        %v1330 = vpop.f32.mrf.mxu0
        %v1331 = vpop.f32.mrf.mxu0
        %1332 = vdwg.mxu0
        %1333 = vmatprep.subr.bf16.mxu0 0
        %1334 = vmatpush1.bf16.msra.mxu0 %v1267
        %1335 = vmatprep.subr.bf16.mxu0 0
        %1336 = vmatpush1.bf16.msra.mxu0 %v1264
        %1337 = vmatprep.subr.bf16.mxu0 0
        %1338 = vmatpush1.bf16.msra.mxu0 %v1261
        %1339 = vmatprep.subr.bf16.mxu0 0
        %1340 = vmatpush1.bf16.msra.mxu0 %v1258
        %1341 = vmatprep.subr.bf16.mxu0 0
        %1342 = vmatpush1.bf16.msra.mxu0 %v1255
        %1343 = vmatprep.subr.bf16.mxu0 0
        %1344 = vmatpush1.bf16.msra.mxu0 %v1252
        %1345 = vmatprep.subr.bf16.mxu0 0
        %1346 = vmatpush1.bf16.msra.mxu0 %v1249
        %1347 = vmatprep.subr.bf16.mxu0 0
        %1348 = vmatpush1.bf16.msra.mxu0 %v1246
        %1349 = vmatprep.subr.bf16.mxu0 0
        %1350 = vmatpush2.bf16.msra.mxu0 0
        %1351 = vmatprep.subr.bf16.mxu0 0
        %1352 = vmatpush2.bf16.msra.mxu0 0
        %1353 = vmatprep.subr.bf16.mxu0 0
        %1354 = vmatpush2.bf16.msra.mxu0 0
        %1355 = vmatprep.subr.bf16.mxu0 0
        %1356 = vmatpush2.bf16.msra.mxu0 0
        %1357 = vmatprep.subr.bf16.mxu0 0
        %1358 = vmatpush2.bf16.msra.mxu0 0
        %1359 = vmatprep.subr.bf16.mxu0 0
        %1360 = vmatpush2.bf16.msra.mxu0 0
        %1361 = vmatprep.subr.bf16.mxu0 0
        %1362 = vmatpush2.bf16.msra.mxu0 0
        %1363 = vmatprep.subr.bf16.mxu0 0
        %1364 = vmatpush2.bf16.msra.mxu0 0
        %1365 = vmatprep.mubr.bf16.mxu0 0
        %1366 = vmatmul.mubr.bf16.gmra.mxu0 %v1114
        %v1367 = vpop.f32.mrf.mxu0
        %v1368 = vadd.f32 %v1160, %v1367
        %v1369 = vpop.f32.mrf.mxu0
        %v1370 = vpop.f32.mrf.mxu0
        %v1371 = vpop.f32.mrf.mxu0
        %1372 = vdwg.mxu0
        %v1373 = vld [vmem:[#allocation9] sm:$0xf]
        %v1374 = vld [vmem:[#allocation9 + $0x4] sm:$0xf]
        %v1375 = vld [vmem:[#allocation9 + $0x8] sm:$0xf]
        %v1376 = vld [vmem:[#allocation9 + $0xc] sm:$0xf]
        %v1377 = vld [vmem:[#allocation9 + $0x10] sm:$0xf]
        %v1378 = vld [vmem:[#allocation9 + $0x14] sm:$0xf]
        %v1379 = vld [vmem:[#allocation9 + $0x18] sm:$0xf]
        %v1380 = vld [vmem:[#allocation9 + $0x1c] sm:$0xf]
        %v1381 = vld [vmem:[#allocation9 + $0x20] sm:$0xf]
        %v1382 = vld [vmem:[#allocation9 + $0x24] sm:$0xf]
        %v1383 = vld [vmem:[#allocation9 + $0x28] sm:$0xf]
        %v1384 = vld [vmem:[#allocation9 + $0x2c] sm:$0xf]
        %v1385 = vld [vmem:[#allocation9 + $0x30] sm:$0xf]
        %v1386 = vld [vmem:[#allocation9 + $0x34] sm:$0xf]
        %v1387 = vld [vmem:[#allocation9 + $0x38] sm:$0xf]
        %v1388 = vld [vmem:[#allocation9 + $0x3c] sm:$0xf]
        %v1389 = vpack.c.bf16 %v1327, %v1327
        %v1390 = vpack.c.bf16 %v1329, %v1329
        %v1391 = vpack.c.bf16 %v1368, %v1368
        %vm1392 = vcmask 261120
        %v1394 = vsel %vm1392, %v1389, 0
        %v1397 = vsel %vm1392, %v1390, 0
        %1399 = vmatprep.subr.bf16.mxu0 0
        %1400 = vmatpush1.bf16.xpose.msra.mxu0 0
        %1401 = vmatprep.subr.bf16.mxu0 0
        %1402 = vmatpush1.bf16.xpose.msra.mxu0 0
        %1403 = vmatprep.subr.bf16.mxu0 0
        %1404 = vmatpush1.bf16.xpose.msra.mxu0 0
        %1405 = vmatprep.subr.bf16.mxu0 0
        %1406 = vmatpush1.bf16.xpose.msra.mxu0 0
        %1407 = vmatprep.subr.bf16.mxu0 0
        %1408 = vmatpush1.bf16.xpose.msra.mxu0 0
        %1409 = vmatprep.subr.bf16.mxu0 0
        %1410 = vmatpush1.bf16.xpose.msra.mxu0 0
        %1411 = vmatprep.subr.bf16.mxu0 0
        %1412 = vmatpush1.bf16.xpose.msra.mxu0 0
        %1413 = vmatprep.subr.bf16.mxu0 0
        %1414 = vmatpush1.bf16.xpose.msra.mxu0 %v1397
        %1415 = vmatprep.subr.bf16.mxu0 0
        %1416 = vmatpush2.bf16.xpose.msra.mxu0 0
        %1417 = vmatprep.subr.bf16.mxu0 0
        %1418 = vmatpush2.bf16.xpose.msra.mxu0 0
        %1419 = vmatprep.subr.bf16.mxu0 0
        %1420 = vmatpush2.bf16.xpose.msra.mxu0 0
        %1421 = vmatprep.subr.bf16.mxu0 0
        %1422 = vmatpush2.bf16.xpose.msra.mxu0 0
        %1423 = vmatprep.subr.bf16.mxu0 0
        %1424 = vmatpush2.bf16.xpose.msra.mxu0 0
        %1425 = vmatprep.subr.bf16.mxu0 0
        %1426 = vmatpush2.bf16.xpose.msra.mxu0 0
        %1427 = vmatprep.subr.bf16.mxu0 0
        %1428 = vmatpush2.bf16.xpose.msra.mxu0 0
        %1429 = vmatprep.subr.bf16.mxu0 0
        %1430 = vmatpush2.bf16.xpose.msra.mxu0 0
        %1431 = vmatprep.mubr.bf16.mxu0 0
        %1432 = vmatmul.mubr.bf16.gmra.mxu0 %v1394
        %v1433 = vpop.f32.mrf.mxu0
        %v1434 = vadd.f32 0.0, %v1433
        %v1435 = vpop.f32.mrf.mxu0
        %v1436 = vpop.f32.mrf.mxu0
        %v1437 = vpop.f32.mrf.mxu0
        %1438 = vdwg.mxu0
        %vm1439 = vcmask 64512
        %v1440 = vsel %vm1439, %v1434, -inf
        %1441 = vmax.xlane.f32.xlu0 %v1440
        %v1442 = vpop.xlane.xlu0 %1441
        %v1443 = vsub.f32 %v1434, %v1442
        %v1444 = vmul.f32 %v1443, 1.442695
        %v1445 = vpow.pop %v1444
        %v1446 = vsel %vm1439, %v1445, 0.0
        %1447 = vadd.xlane.f32.xlu0 %v1446
        %v1448 = vpop.xlane.xlu0 %1447
        %v1449 = vrcp.pop %v1448
        %v1450 = vmul.f32 %v1445, %v1449
        %v1451 = vpack.c.bf16 %v1450, %v1450
        %v1453 = vsel %vm1439, %v1451, 0
        %vm1455 = vcmask 1043456
        %v1457 = vsel %vm1455, %v1391, 0
        %1459 = vmatprep.subr.bf16.mxu0 0
        %1460 = vmatpush1.bf16.msra.mxu0 0
        %1461 = vmatprep.subr.bf16.mxu0 0
        %1462 = vmatpush1.bf16.msra.mxu0 0
        %1463 = vmatprep.subr.bf16.mxu0 0
        %1464 = vmatpush1.bf16.msra.mxu0 0
        %1465 = vmatprep.subr.bf16.mxu0 0
        %1466 = vmatpush1.bf16.msra.mxu0 0
        %1467 = vmatprep.subr.bf16.mxu0 0
        %1468 = vmatpush1.bf16.msra.mxu0 0
        %1469 = vmatprep.subr.bf16.mxu0 0
        %1470 = vmatpush1.bf16.msra.mxu0 0
        %1471 = vmatprep.subr.bf16.mxu0 0
        %1472 = vmatpush1.bf16.msra.mxu0 0
        %1473 = vmatprep.subr.bf16.mxu0 0
        %1474 = vmatpush1.bf16.msra.mxu0 %v1457
        %1475 = vmatprep.subr.bf16.mxu0 0
        %1476 = vmatpush2.bf16.msra.mxu0 0
        %1477 = vmatprep.subr.bf16.mxu0 0
        %1478 = vmatpush2.bf16.msra.mxu0 0
        %1479 = vmatprep.subr.bf16.mxu0 0
        %1480 = vmatpush2.bf16.msra.mxu0 0
        %1481 = vmatprep.subr.bf16.mxu0 0
        %1482 = vmatpush2.bf16.msra.mxu0 0
        %1483 = vmatprep.subr.bf16.mxu0 0
        %1484 = vmatpush2.bf16.msra.mxu0 0
        %1485 = vmatprep.subr.bf16.mxu0 0
        %1486 = vmatpush2.bf16.msra.mxu0 0
        %1487 = vmatprep.subr.bf16.mxu0 0
        %1488 = vmatpush2.bf16.msra.mxu0 0
        %1489 = vmatprep.subr.bf16.mxu0 0
        %1490 = vmatpush2.bf16.msra.mxu0 0
        %1491 = vmatprep.mubr.bf16.mxu0 0
        %1492 = vmatmul.mubr.bf16.gmra.mxu0 %v1453
        %v1493 = vpop.f32.mrf.mxu0
        %v1494 = vadd.f32 0.0, %v1493
        %v1495 = vpop.f32.mrf.mxu0
        %v1496 = vpop.f32.mrf.mxu0
        %v1497 = vpop.f32.mrf.mxu0
        %1498 = vdwg.mxu0
        %v1499 = vpack.c.bf16 %v1494, %v1494
        %1501 = vrot.lane.b32.xlu0 %v1389, 96
        %v1502 = vpop.permute.xlu0 %1501
        %1504 = vrot.lane.b32.xlu0 %v1390, 96
        %v1505 = vpop.permute.xlu0 %1504
        %v1507 = vsel %vm1392, %v1502, 0
        %v1510 = vsel %vm1392, %v1505, 0
        %1512 = vmatprep.subr.bf16.mxu0 0
        %1513 = vmatpush1.bf16.xpose.msra.mxu0 0
        %1514 = vmatprep.subr.bf16.mxu0 0
        %1515 = vmatpush1.bf16.xpose.msra.mxu0 0
        %1516 = vmatprep.subr.bf16.mxu0 0
        %1517 = vmatpush1.bf16.xpose.msra.mxu0 0
        %1518 = vmatprep.subr.bf16.mxu0 0
        %1519 = vmatpush1.bf16.xpose.msra.mxu0 0
        %1520 = vmatprep.subr.bf16.mxu0 0
        %1521 = vmatpush1.bf16.xpose.msra.mxu0 0
        %1522 = vmatprep.subr.bf16.mxu0 0
        %1523 = vmatpush1.bf16.xpose.msra.mxu0 0
        %1524 = vmatprep.subr.bf16.mxu0 0
        %1525 = vmatpush1.bf16.xpose.msra.mxu0 0
        %1526 = vmatprep.subr.bf16.mxu0 0
        %1527 = vmatpush1.bf16.xpose.msra.mxu0 %v1510
        %1528 = vmatprep.subr.bf16.mxu0 0
        %1529 = vmatpush2.bf16.xpose.msra.mxu0 0
        %1530 = vmatprep.subr.bf16.mxu0 0
        %1531 = vmatpush2.bf16.xpose.msra.mxu0 0
        %1532 = vmatprep.subr.bf16.mxu0 0
        %1533 = vmatpush2.bf16.xpose.msra.mxu0 0
        %1534 = vmatprep.subr.bf16.mxu0 0
        %1535 = vmatpush2.bf16.xpose.msra.mxu0 0
        %1536 = vmatprep.subr.bf16.mxu0 0
        %1537 = vmatpush2.bf16.xpose.msra.mxu0 0
        %1538 = vmatprep.subr.bf16.mxu0 0
        %1539 = vmatpush2.bf16.xpose.msra.mxu0 0
        %1540 = vmatprep.subr.bf16.mxu0 0
        %1541 = vmatpush2.bf16.xpose.msra.mxu0 0
        %1542 = vmatprep.subr.bf16.mxu0 0
        %1543 = vmatpush2.bf16.xpose.msra.mxu0 0
        %1544 = vmatprep.mubr.bf16.mxu0 0
        %1545 = vmatmul.mubr.bf16.gmra.mxu0 %v1507
        %v1546 = vpop.f32.mrf.mxu0
        %v1547 = vadd.f32 0.0, %v1546
        %v1548 = vpop.f32.mrf.mxu0
        %v1549 = vpop.f32.mrf.mxu0
        %v1550 = vpop.f32.mrf.mxu0
        %1551 = vdwg.mxu0
        %v1552 = vsel %vm1439, %v1547, -inf
        %1553 = vmax.xlane.f32.xlu0 %v1552
        %v1554 = vpop.xlane.xlu0 %1553
        %v1555 = vsub.f32 %v1547, %v1554
        %v1556 = vmul.f32 %v1555, 1.442695
        %v1557 = vpow.pop %v1556
        %v1558 = vsel %vm1439, %v1557, 0.0
        %1559 = vadd.xlane.f32.xlu0 %v1558
        %v1560 = vpop.xlane.xlu0 %1559
        %v1561 = vrcp.pop %v1560
        %v1562 = vmul.f32 %v1557, %v1561
        %v1563 = vpack.c.bf16 %v1562, %v1562
        %1565 = vrot.lane.b32.xlu0 %v1391, 96
        %v1566 = vpop.permute.xlu0 %1565
        %v1568 = vsel %vm1439, %v1563, 0
        %v1571 = vsel %vm1455, %v1566, 0
        %1573 = vmatprep.subr.bf16.mxu0 0
        %1574 = vmatpush1.bf16.msra.mxu0 0
        %1575 = vmatprep.subr.bf16.mxu0 0
        %1576 = vmatpush1.bf16.msra.mxu0 0
        %1577 = vmatprep.subr.bf16.mxu0 0
        %1578 = vmatpush1.bf16.msra.mxu0 0
        %1579 = vmatprep.subr.bf16.mxu0 0
        %1580 = vmatpush1.bf16.msra.mxu0 0
        %1581 = vmatprep.subr.bf16.mxu0 0
        %1582 = vmatpush1.bf16.msra.mxu0 0
        %1583 = vmatprep.subr.bf16.mxu0 0
        %1584 = vmatpush1.bf16.msra.mxu0 0
        %1585 = vmatprep.subr.bf16.mxu0 0
        %1586 = vmatpush1.bf16.msra.mxu0 0
        %1587 = vmatprep.subr.bf16.mxu0 0
        %1588 = vmatpush1.bf16.msra.mxu0 %v1571
        %1589 = vmatprep.subr.bf16.mxu0 0
        %1590 = vmatpush2.bf16.msra.mxu0 0
        %1591 = vmatprep.subr.bf16.mxu0 0
        %1592 = vmatpush2.bf16.msra.mxu0 0
        %1593 = vmatprep.subr.bf16.mxu0 0
        %1594 = vmatpush2.bf16.msra.mxu0 0
        %1595 = vmatprep.subr.bf16.mxu0 0
        %1596 = vmatpush2.bf16.msra.mxu0 0
        %1597 = vmatprep.subr.bf16.mxu0 0
        %1598 = vmatpush2.bf16.msra.mxu0 0
        %1599 = vmatprep.subr.bf16.mxu0 0
        %1600 = vmatpush2.bf16.msra.mxu0 0
        %1601 = vmatprep.subr.bf16.mxu0 0
        %1602 = vmatpush2.bf16.msra.mxu0 0
        %1603 = vmatprep.subr.bf16.mxu0 0
        %1604 = vmatpush2.bf16.msra.mxu0 0
        %1605 = vmatprep.mubr.bf16.mxu0 0
        %1606 = vmatmul.mubr.bf16.gmra.mxu0 %v1568
        %v1607 = vpop.f32.mrf.mxu0
        %v1608 = vadd.f32 0.0, %v1607
        %v1609 = vpop.f32.mrf.mxu0
        %v1610 = vpop.f32.mrf.mxu0
        %v1611 = vpop.f32.mrf.mxu0
        %1612 = vdwg.mxu0
        %v1613 = vpack.c.bf16 %v1608, %v1608
        %v1618 = vunpack.c.l.b16 %v1377
        %v1619 = vunpack.c.l.b16 %v1378
        %v1620 = vunpack.c.l.b16 %v1379
        %v1621 = vunpack.c.l.b16 %v1380
        %v1622 = vpack.c.b16 %v1619, %v1618
        %v1623 = vpack.c.b16 %v1621, %v1620
        %v1627 = vsel %vm1392, %v1613, 0
        %1629 = vmatprep.subr.bf16.mxu0 0
        %1630 = vmatpush1.bf16.msra.mxu0 0
        %1631 = vmatprep.subr.bf16.mxu0 0
        %1632 = vmatpush1.bf16.msra.mxu0 0
        %1633 = vmatprep.subr.bf16.mxu0 0
        %1634 = vmatpush1.bf16.msra.mxu0 0
        %1635 = vmatprep.subr.bf16.mxu0 0
        %1636 = vmatpush1.bf16.msra.mxu0 0
        %1637 = vmatprep.subr.bf16.mxu0 0
        %1638 = vmatpush1.bf16.msra.mxu0 0
        %1639 = vmatprep.subr.bf16.mxu0 0
        %1640 = vmatpush1.bf16.msra.mxu0 0
        %1641 = vmatprep.subr.bf16.mxu0 0
        %1642 = vmatpush1.bf16.msra.mxu0 %v1623
        %1643 = vmatprep.subr.bf16.mxu0 0
        %1644 = vmatpush1.bf16.msra.mxu0 %v1622
        %1645 = vmatprep.subr.bf16.mxu0 0
        %1646 = vmatpush2.bf16.msra.mxu0 0
        %1647 = vmatprep.subr.bf16.mxu0 0
        %1648 = vmatpush2.bf16.msra.mxu0 0
        %1649 = vmatprep.subr.bf16.mxu0 0
        %1650 = vmatpush2.bf16.msra.mxu0 0
        %1651 = vmatprep.subr.bf16.mxu0 0
        %1652 = vmatpush2.bf16.msra.mxu0 0
        %1653 = vmatprep.subr.bf16.mxu0 0
        %1654 = vmatpush2.bf16.msra.mxu0 0
        %1655 = vmatprep.subr.bf16.mxu0 0
        %1656 = vmatpush2.bf16.msra.mxu0 0
        %1657 = vmatprep.subr.bf16.mxu0 0
        %1658 = vmatpush2.bf16.msra.mxu0 0
        %1659 = vmatprep.subr.bf16.mxu0 0
        %1660 = vmatpush2.bf16.msra.mxu0 0
        %1661 = vmatprep.mubr.bf16.mxu0 0
        %1662 = vmatmul.mubr.bf16.gmra.mxu0 %v1627
        %v1663 = vpop.f32.mrf.mxu0
        %v1664 = vadd.f32 0.0, %v1663
        %v1665 = vpop.f32.mrf.mxu0
        %v1666 = vpop.f32.mrf.mxu0
        %v1667 = vpop.f32.mrf.mxu0
        %1668 = vdwg.mxu0
        %v1673 = vunpack.c.l.b16 %v1373
        %v1674 = vunpack.c.l.b16 %v1374
        %v1675 = vunpack.c.l.b16 %v1375
        %v1676 = vunpack.c.l.b16 %v1376
        %v1677 = vpack.c.b16 %v1674, %v1673
        %v1678 = vpack.c.b16 %v1676, %v1675
        %v1682 = vsel %vm1392, %v1499, 0
        %1684 = vmatprep.subr.bf16.mxu0 0
        %1685 = vmatpush1.bf16.msra.mxu0 0
        %1686 = vmatprep.subr.bf16.mxu0 0
        %1687 = vmatpush1.bf16.msra.mxu0 0
        %1688 = vmatprep.subr.bf16.mxu0 0
        %1689 = vmatpush1.bf16.msra.mxu0 0
        %1690 = vmatprep.subr.bf16.mxu0 0
        %1691 = vmatpush1.bf16.msra.mxu0 0
        %1692 = vmatprep.subr.bf16.mxu0 0
        %1693 = vmatpush1.bf16.msra.mxu0 0
        %1694 = vmatprep.subr.bf16.mxu0 0
        %1695 = vmatpush1.bf16.msra.mxu0 0
        %1696 = vmatprep.subr.bf16.mxu0 0
        %1697 = vmatpush1.bf16.msra.mxu0 %v1678
        %1698 = vmatprep.subr.bf16.mxu0 0
        %1699 = vmatpush1.bf16.msra.mxu0 %v1677
        %1700 = vmatprep.subr.bf16.mxu0 0
        %1701 = vmatpush2.bf16.msra.mxu0 0
        %1702 = vmatprep.subr.bf16.mxu0 0
        %1703 = vmatpush2.bf16.msra.mxu0 0
        %1704 = vmatprep.subr.bf16.mxu0 0
        %1705 = vmatpush2.bf16.msra.mxu0 0
        %1706 = vmatprep.subr.bf16.mxu0 0
        %1707 = vmatpush2.bf16.msra.mxu0 0
        %1708 = vmatprep.subr.bf16.mxu0 0
        %1709 = vmatpush2.bf16.msra.mxu0 0
        %1710 = vmatprep.subr.bf16.mxu0 0
        %1711 = vmatpush2.bf16.msra.mxu0 0
        %1712 = vmatprep.subr.bf16.mxu0 0
        %1713 = vmatpush2.bf16.msra.mxu0 0
        %1714 = vmatprep.subr.bf16.mxu0 0
        %1715 = vmatpush2.bf16.msra.mxu0 0
        %1716 = vmatprep.mubr.bf16.mxu0 0
        %1717 = vmatmul.mubr.bf16.gmra.mxu0 %v1682
        %v1718 = vpop.f32.mrf.mxu0
        %v1719 = vadd.f32 %v1664, %v1718
        %v1720 = vpop.f32.mrf.mxu0
        %v1721 = vpop.f32.mrf.mxu0
        %v1722 = vpop.f32.mrf.mxu0
        %1723 = vdwg.mxu0
        %1724 = vrot.lane.b32.xlu0 %v1389, 64
        %v1725 = vpop.permute.xlu0 %1724
        %1726 = vrot.lane.b32.xlu0 %v1390, 64
        %v1727 = vpop.permute.xlu0 %1726
        %v1729 = vsel %vm1392, %v1725, 0
        %v1732 = vsel %vm1392, %v1727, 0
        %1734 = vmatprep.subr.bf16.mxu0 0
        %1735 = vmatpush1.bf16.xpose.msra.mxu0 0
        %1736 = vmatprep.subr.bf16.mxu0 0
        %1737 = vmatpush1.bf16.xpose.msra.mxu0 0
        %1738 = vmatprep.subr.bf16.mxu0 0
        %1739 = vmatpush1.bf16.xpose.msra.mxu0 0
        %1740 = vmatprep.subr.bf16.mxu0 0
        %1741 = vmatpush1.bf16.xpose.msra.mxu0 0
        %1742 = vmatprep.subr.bf16.mxu0 0
        %1743 = vmatpush1.bf16.xpose.msra.mxu0 0
        %1744 = vmatprep.subr.bf16.mxu0 0
        %1745 = vmatpush1.bf16.xpose.msra.mxu0 0
        %1746 = vmatprep.subr.bf16.mxu0 0
        %1747 = vmatpush1.bf16.xpose.msra.mxu0 0
        %1748 = vmatprep.subr.bf16.mxu0 0
        %1749 = vmatpush1.bf16.xpose.msra.mxu0 %v1732
        %1750 = vmatprep.subr.bf16.mxu0 0
        %1751 = vmatpush2.bf16.xpose.msra.mxu0 0
        %1752 = vmatprep.subr.bf16.mxu0 0
        %1753 = vmatpush2.bf16.xpose.msra.mxu0 0
        %1754 = vmatprep.subr.bf16.mxu0 0
        %1755 = vmatpush2.bf16.xpose.msra.mxu0 0
        %1756 = vmatprep.subr.bf16.mxu0 0
        %1757 = vmatpush2.bf16.xpose.msra.mxu0 0
        %1758 = vmatprep.subr.bf16.mxu0 0
        %1759 = vmatpush2.bf16.xpose.msra.mxu0 0
        %1760 = vmatprep.subr.bf16.mxu0 0
        %1761 = vmatpush2.bf16.xpose.msra.mxu0 0
        %1762 = vmatprep.subr.bf16.mxu0 0
        %1763 = vmatpush2.bf16.xpose.msra.mxu0 0
        %1764 = vmatprep.subr.bf16.mxu0 0
        %1765 = vmatpush2.bf16.xpose.msra.mxu0 0
        %1766 = vmatprep.mubr.bf16.mxu0 0
        %1767 = vmatmul.mubr.bf16.gmra.mxu0 %v1729
        %v1768 = vpop.f32.mrf.mxu0
        %v1769 = vadd.f32 0.0, %v1768
        %v1770 = vpop.f32.mrf.mxu0
        %v1771 = vpop.f32.mrf.mxu0
        %v1772 = vpop.f32.mrf.mxu0
        %1773 = vdwg.mxu0
        %v1774 = vsel %vm1439, %v1769, -inf
        %1775 = vmax.xlane.f32.xlu0 %v1774
        %v1776 = vpop.xlane.xlu0 %1775
        %v1777 = vsub.f32 %v1769, %v1776
        %v1778 = vmul.f32 %v1777, 1.442695
        %v1779 = vpow.pop %v1778
        %v1780 = vsel %vm1439, %v1779, 0.0
        %1781 = vadd.xlane.f32.xlu0 %v1780
        %v1782 = vpop.xlane.xlu0 %1781
        %v1783 = vrcp.pop %v1782
        %v1784 = vmul.f32 %v1779, %v1783
        %v1785 = vpack.c.bf16 %v1784, %v1784
        %1786 = vrot.lane.b32.xlu0 %v1391, 64
        %v1787 = vpop.permute.xlu0 %1786
        %v1789 = vsel %vm1439, %v1785, 0
        %v1792 = vsel %vm1455, %v1787, 0
        %1794 = vmatprep.subr.bf16.mxu0 0
        %1795 = vmatpush1.bf16.msra.mxu0 0
        %1796 = vmatprep.subr.bf16.mxu0 0
        %1797 = vmatpush1.bf16.msra.mxu0 0
        %1798 = vmatprep.subr.bf16.mxu0 0
        %1799 = vmatpush1.bf16.msra.mxu0 0
        %1800 = vmatprep.subr.bf16.mxu0 0
        %1801 = vmatpush1.bf16.msra.mxu0 0
        %1802 = vmatprep.subr.bf16.mxu0 0
        %1803 = vmatpush1.bf16.msra.mxu0 0
        %1804 = vmatprep.subr.bf16.mxu0 0
        %1805 = vmatpush1.bf16.msra.mxu0 0
        %1806 = vmatprep.subr.bf16.mxu0 0
        %1807 = vmatpush1.bf16.msra.mxu0 0
        %1808 = vmatprep.subr.bf16.mxu0 0
        %1809 = vmatpush1.bf16.msra.mxu0 %v1792
        %1810 = vmatprep.subr.bf16.mxu0 0
        %1811 = vmatpush2.bf16.msra.mxu0 0
        %1812 = vmatprep.subr.bf16.mxu0 0
        %1813 = vmatpush2.bf16.msra.mxu0 0
        %1814 = vmatprep.subr.bf16.mxu0 0
        %1815 = vmatpush2.bf16.msra.mxu0 0
        %1816 = vmatprep.subr.bf16.mxu0 0
        %1817 = vmatpush2.bf16.msra.mxu0 0
        %1818 = vmatprep.subr.bf16.mxu0 0
        %1819 = vmatpush2.bf16.msra.mxu0 0
        %1820 = vmatprep.subr.bf16.mxu0 0
        %1821 = vmatpush2.bf16.msra.mxu0 0
        %1822 = vmatprep.subr.bf16.mxu0 0
        %1823 = vmatpush2.bf16.msra.mxu0 0
        %1824 = vmatprep.subr.bf16.mxu0 0
        %1825 = vmatpush2.bf16.msra.mxu0 0
        %1826 = vmatprep.mubr.bf16.mxu0 0
        %1827 = vmatmul.mubr.bf16.gmra.mxu0 %v1789
        %v1828 = vpop.f32.mrf.mxu0
        %v1829 = vadd.f32 0.0, %v1828
        %v1830 = vpop.f32.mrf.mxu0
        %v1831 = vpop.f32.mrf.mxu0
        %v1832 = vpop.f32.mrf.mxu0
        %1833 = vdwg.mxu0
        %v1834 = vpack.c.bf16 %v1829, %v1829
        %v1839 = vunpack.c.l.b16 %v1381
        %v1840 = vunpack.c.l.b16 %v1382
        %v1841 = vunpack.c.l.b16 %v1383
        %v1842 = vunpack.c.l.b16 %v1384
        %v1843 = vpack.c.b16 %v1840, %v1839
        %v1844 = vpack.c.b16 %v1842, %v1841
        %v1848 = vsel %vm1392, %v1834, 0
        %1850 = vmatprep.subr.bf16.mxu0 0
        %1851 = vmatpush1.bf16.msra.mxu0 0
        %1852 = vmatprep.subr.bf16.mxu0 0
        %1853 = vmatpush1.bf16.msra.mxu0 0
        %1854 = vmatprep.subr.bf16.mxu0 0
        %1855 = vmatpush1.bf16.msra.mxu0 0
        %1856 = vmatprep.subr.bf16.mxu0 0
        %1857 = vmatpush1.bf16.msra.mxu0 0
        %1858 = vmatprep.subr.bf16.mxu0 0
        %1859 = vmatpush1.bf16.msra.mxu0 0
        %1860 = vmatprep.subr.bf16.mxu0 0
        %1861 = vmatpush1.bf16.msra.mxu0 0
        %1862 = vmatprep.subr.bf16.mxu0 0
        %1863 = vmatpush1.bf16.msra.mxu0 %v1844
        %1864 = vmatprep.subr.bf16.mxu0 0
        %1865 = vmatpush1.bf16.msra.mxu0 %v1843
        %1866 = vmatprep.subr.bf16.mxu0 0
        %1867 = vmatpush2.bf16.msra.mxu0 0
        %1868 = vmatprep.subr.bf16.mxu0 0
        %1869 = vmatpush2.bf16.msra.mxu0 0
        %1870 = vmatprep.subr.bf16.mxu0 0
        %1871 = vmatpush2.bf16.msra.mxu0 0
        %1872 = vmatprep.subr.bf16.mxu0 0
        %1873 = vmatpush2.bf16.msra.mxu0 0
        %1874 = vmatprep.subr.bf16.mxu0 0
        %1875 = vmatpush2.bf16.msra.mxu0 0
        %1876 = vmatprep.subr.bf16.mxu0 0
        %1877 = vmatpush2.bf16.msra.mxu0 0
        %1878 = vmatprep.subr.bf16.mxu0 0
        %1879 = vmatpush2.bf16.msra.mxu0 0
        %1880 = vmatprep.subr.bf16.mxu0 0
        %1881 = vmatpush2.bf16.msra.mxu0 0
        %1882 = vmatprep.mubr.bf16.mxu0 0
        %1883 = vmatmul.mubr.bf16.gmra.mxu0 %v1848
        %v1884 = vpop.f32.mrf.mxu0
        %v1885 = vadd.f32 0.0, %v1884
        %v1886 = vpop.f32.mrf.mxu0
        %v1887 = vpop.f32.mrf.mxu0
        %v1888 = vpop.f32.mrf.mxu0
        %1889 = vdwg.mxu0
        %v1890 = vadd.f32 %v1719, %v1885
        %1891 = vrot.lane.b32.xlu0 %v1389, 32
        %v1892 = vpop.permute.xlu0 %1891
        %1893 = vrot.lane.b32.xlu0 %v1390, 32
        %v1894 = vpop.permute.xlu0 %1893
        %v1896 = vsel %vm1392, %v1892, 0
        %v1899 = vsel %vm1392, %v1894, 0
        %1901 = vmatprep.subr.bf16.mxu0 0
        %1902 = vmatpush1.bf16.xpose.msra.mxu0 0
        %1903 = vmatprep.subr.bf16.mxu0 0
        %1904 = vmatpush1.bf16.xpose.msra.mxu0 0
        %1905 = vmatprep.subr.bf16.mxu0 0
        %1906 = vmatpush1.bf16.xpose.msra.mxu0 0
        %1907 = vmatprep.subr.bf16.mxu0 0
        %1908 = vmatpush1.bf16.xpose.msra.mxu0 0
        %1909 = vmatprep.subr.bf16.mxu0 0
        %1910 = vmatpush1.bf16.xpose.msra.mxu0 0
        %1911 = vmatprep.subr.bf16.mxu0 0
        %1912 = vmatpush1.bf16.xpose.msra.mxu0 0
        %1913 = vmatprep.subr.bf16.mxu0 0
        %1914 = vmatpush1.bf16.xpose.msra.mxu0 0
        %1915 = vmatprep.subr.bf16.mxu0 0
        %1916 = vmatpush1.bf16.xpose.msra.mxu0 %v1899
        %1917 = vmatprep.subr.bf16.mxu0 0
        %1918 = vmatpush2.bf16.xpose.msra.mxu0 0
        %1919 = vmatprep.subr.bf16.mxu0 0
        %1920 = vmatpush2.bf16.xpose.msra.mxu0 0
        %1921 = vmatprep.subr.bf16.mxu0 0
        %1922 = vmatpush2.bf16.xpose.msra.mxu0 0
        %1923 = vmatprep.subr.bf16.mxu0 0
        %1924 = vmatpush2.bf16.xpose.msra.mxu0 0
        %1925 = vmatprep.subr.bf16.mxu0 0
        %1926 = vmatpush2.bf16.xpose.msra.mxu0 0
        %1927 = vmatprep.subr.bf16.mxu0 0
        %1928 = vmatpush2.bf16.xpose.msra.mxu0 0
        %1929 = vmatprep.subr.bf16.mxu0 0
        %1930 = vmatpush2.bf16.xpose.msra.mxu0 0
        %1931 = vmatprep.subr.bf16.mxu0 0
        %1932 = vmatpush2.bf16.xpose.msra.mxu0 0
        %1933 = vmatprep.mubr.bf16.mxu0 0
        %1934 = vmatmul.mubr.bf16.gmra.mxu0 %v1896
        %v1935 = vpop.f32.mrf.mxu0
        %v1936 = vadd.f32 0.0, %v1935
        %v1937 = vpop.f32.mrf.mxu0
        %v1938 = vpop.f32.mrf.mxu0
        %v1939 = vpop.f32.mrf.mxu0
        %1940 = vdwg.mxu0
        %v1941 = vsel %vm1439, %v1936, -inf
        %1942 = vmax.xlane.f32.xlu0 %v1941
        %v1943 = vpop.xlane.xlu0 %1942
        %v1944 = vsub.f32 %v1936, %v1943
        %v1945 = vmul.f32 %v1944, 1.442695
        %v1946 = vpow.pop %v1945
        %v1947 = vsel %vm1439, %v1946, 0.0
        %1948 = vadd.xlane.f32.xlu0 %v1947
        %v1949 = vpop.xlane.xlu0 %1948
        %v1950 = vrcp.pop %v1949
        %v1951 = vmul.f32 %v1946, %v1950
        %v1952 = vpack.c.bf16 %v1951, %v1951
        %1953 = vrot.lane.b32.xlu0 %v1391, 32
        %v1954 = vpop.permute.xlu0 %1953
        %v1956 = vsel %vm1439, %v1952, 0
        %v1959 = vsel %vm1455, %v1954, 0
        %1961 = vmatprep.subr.bf16.mxu0 0
        %1962 = vmatpush1.bf16.msra.mxu0 0
        %1963 = vmatprep.subr.bf16.mxu0 0
        %1964 = vmatpush1.bf16.msra.mxu0 0
        %1965 = vmatprep.subr.bf16.mxu0 0
        %1966 = vmatpush1.bf16.msra.mxu0 0
        %1967 = vmatprep.subr.bf16.mxu0 0
        %1968 = vmatpush1.bf16.msra.mxu0 0
        %1969 = vmatprep.subr.bf16.mxu0 0
        %1970 = vmatpush1.bf16.msra.mxu0 0
        %1971 = vmatprep.subr.bf16.mxu0 0
        %1972 = vmatpush1.bf16.msra.mxu0 0
        %1973 = vmatprep.subr.bf16.mxu0 0
        %1974 = vmatpush1.bf16.msra.mxu0 0
        %1975 = vmatprep.subr.bf16.mxu0 0
        %1976 = vmatpush1.bf16.msra.mxu0 %v1959
        %1977 = vmatprep.subr.bf16.mxu0 0
        %1978 = vmatpush2.bf16.msra.mxu0 0
        %1979 = vmatprep.subr.bf16.mxu0 0
        %1980 = vmatpush2.bf16.msra.mxu0 0
        %1981 = vmatprep.subr.bf16.mxu0 0
        %1982 = vmatpush2.bf16.msra.mxu0 0
        %1983 = vmatprep.subr.bf16.mxu0 0
        %1984 = vmatpush2.bf16.msra.mxu0 0
        %1985 = vmatprep.subr.bf16.mxu0 0
        %1986 = vmatpush2.bf16.msra.mxu0 0
        %1987 = vmatprep.subr.bf16.mxu0 0
        %1988 = vmatpush2.bf16.msra.mxu0 0
        %1989 = vmatprep.subr.bf16.mxu0 0
        %1990 = vmatpush2.bf16.msra.mxu0 0
        %1991 = vmatprep.subr.bf16.mxu0 0
        %1992 = vmatpush2.bf16.msra.mxu0 0
        %1993 = vmatprep.mubr.bf16.mxu0 0
        %1994 = vmatmul.mubr.bf16.gmra.mxu0 %v1956
        %v1995 = vpop.f32.mrf.mxu0
        %v1996 = vadd.f32 0.0, %v1995
        %v1997 = vpop.f32.mrf.mxu0
        %v1998 = vpop.f32.mrf.mxu0
        %v1999 = vpop.f32.mrf.mxu0
        %2000 = vdwg.mxu0
        %v2001 = vpack.c.bf16 %v1996, %v1996
        %v2006 = vunpack.c.l.b16 %v1385
        %v2007 = vunpack.c.l.b16 %v1386
        %v2008 = vunpack.c.l.b16 %v1387
        %v2009 = vunpack.c.l.b16 %v1388
        %v2010 = vpack.c.b16 %v2007, %v2006
        %v2011 = vpack.c.b16 %v2009, %v2008
        %v2015 = vsel %vm1392, %v2001, 0
        %2017 = vmatprep.subr.bf16.mxu0 0
        %2018 = vmatpush1.bf16.msra.mxu0 0
        %2019 = vmatprep.subr.bf16.mxu0 0
        %2020 = vmatpush1.bf16.msra.mxu0 0
        %2021 = vmatprep.subr.bf16.mxu0 0
        %2022 = vmatpush1.bf16.msra.mxu0 0
        %2023 = vmatprep.subr.bf16.mxu0 0
        %2024 = vmatpush1.bf16.msra.mxu0 0
        %2025 = vmatprep.subr.bf16.mxu0 0
        %2026 = vmatpush1.bf16.msra.mxu0 0
        %2027 = vmatprep.subr.bf16.mxu0 0
        %2028 = vmatpush1.bf16.msra.mxu0 0
        %2029 = vmatprep.subr.bf16.mxu0 0
        %2030 = vmatpush1.bf16.msra.mxu0 %v2011
        %2031 = vmatprep.subr.bf16.mxu0 0
        %2032 = vmatpush1.bf16.msra.mxu0 %v2010
        %2033 = vmatprep.subr.bf16.mxu0 0
        %2034 = vmatpush2.bf16.msra.mxu0 0
        %2035 = vmatprep.subr.bf16.mxu0 0
        %2036 = vmatpush2.bf16.msra.mxu0 0
        %2037 = vmatprep.subr.bf16.mxu0 0
        %2038 = vmatpush2.bf16.msra.mxu0 0
        %2039 = vmatprep.subr.bf16.mxu0 0
        %2040 = vmatpush2.bf16.msra.mxu0 0
        %2041 = vmatprep.subr.bf16.mxu0 0
        %2042 = vmatpush2.bf16.msra.mxu0 0
        %2043 = vmatprep.subr.bf16.mxu0 0
        %2044 = vmatpush2.bf16.msra.mxu0 0
        %2045 = vmatprep.subr.bf16.mxu0 0
        %2046 = vmatpush2.bf16.msra.mxu0 0
        %2047 = vmatprep.subr.bf16.mxu0 0
        %2048 = vmatpush2.bf16.msra.mxu0 0
        %2049 = vmatprep.mubr.bf16.mxu0 0
        %2050 = vmatmul.mubr.bf16.gmra.mxu0 %v2015
        %v2051 = vpop.f32.mrf.mxu0
        %v2052 = vadd.f32 0.0, %v2051
        %v2053 = vpop.f32.mrf.mxu0
        %v2054 = vpop.f32.mrf.mxu0
        %v2055 = vpop.f32.mrf.mxu0
        %2056 = vdwg.mxu0
        %v2057 = vadd.f32 %v1890, %v2052
        %v2058 = vld [vmem:[%s8] sm:$0x1]
        %v2060 = vlaneseq
        %v2061 = vshrl.u32 %v2060, 7
        %v2062 = vsub.s32 0, %v2061
        %v2063 = vrot.slane %v2058, %v2062
        %v2065 = vadd.f32 %v2057, %v2063
        %v2066 = vadd.f32 %v1113, %v2065
        %v2067 = vld [vmem:[%s13] sm:$0x1]
        %v2068 = vld [vmem:[%s14] sm:$0x1]
        %2069 = vadd.xlane.f32.xlu0 %v2066
        %v2070 = vpop.xlane.xlu0 %2069
        %v2071 = vmul.f32 %v2070, %v1090
        %v2072 = vsub.f32 %v2066, %v2071
        %v2073 = vmul.f32 %v2072, %v2072
        %2074 = vadd.xlane.f32.xlu0 %v2073
        %v2075 = vpop.xlane.xlu0 %2074
        %v2076 = vmul.f32 %v2075, %v1090
        %v2077 = vadd.f32 %v2076, 1e-12
        %v2078 = vrsqrt.pop %v2077
        %v2079 = vmul.f32 %v2072, %v2078
        %v2081 = vlaneseq
        %v2082 = vshrl.u32 %v2081, 7
        %v2083 = vsub.s32 0, %v2082
        %v2084 = vrot.slane %v2067, %v2083
        %v2086 = vmul.f32 %v2079, %v2084
        %v2088 = vlaneseq
        %v2089 = vshrl.u32 %v2088, 7
        %v2090 = vsub.s32 0, %v2089
        %v2091 = vrot.slane %v2068, %v2090
        %v2093 = vadd.f32 %v2086, %v2091
        %v2094 = vpack.c.bf16 %v2093, %v2093
        %v2095 = vld [vmem:[#allocation10] sm:$0xff]
        %v2096 = vld [vmem:[#allocation10 + $0x8] sm:$0xff]
        %v2097 = vld [vmem:[#allocation10 + $0x10] sm:$0xff]
        %v2098 = vld [vmem:[#allocation10 + $0x18] sm:$0xff]
        %v2099 = vld [vmem:[#allocation10 + $0x20] sm:$0xff]
        %v2100 = vld [vmem:[#allocation10 + $0x28] sm:$0xff]
        %v2101 = vld [vmem:[#allocation10 + $0x30] sm:$0xff]
        %v2102 = vld [vmem:[#allocation10 + $0x38] sm:$0xff]
        %v2103 = vld [vmem:[#allocation10 + $0x40] sm:$0xff]
        %v2104 = vld [vmem:[#allocation10 + $0x48] sm:$0xff]
        %v2105 = vld [vmem:[#allocation10 + $0x50] sm:$0xff]
        %v2106 = vld [vmem:[#allocation10 + $0x58] sm:$0xff]
        %v2107 = vld [vmem:[#allocation10 + $0x60] sm:$0xff]
        %v2108 = vld [vmem:[#allocation10 + $0x68] sm:$0xff]
        %v2109 = vld [vmem:[#allocation10 + $0x70] sm:$0xff]
        %v2110 = vld [vmem:[#allocation10 + $0x78] sm:$0xff]
        %v2111 = vld [vmem:[%s10] sm:$0x3]
        %v2113 = vlaneseq
        %v2114 = vshrl.u32 %v2113, 7
        %v2115 = vsub.s32 0, %v2114
        %v2116 = vrot.slane %v2111, %v2115
        %v2117 = vlaneseq
        %v2118 = vshrl.u32 %v2117, 7
        %v2119 = vsub.s32 1, %v2118
        %v2120 = vrot.slane %v2111, %v2119
        %v2139 = vunpack.c.l.b16 %v2095
        %v2140 = vunpack.c.h.b16 %v2095
        %v2141 = vunpack.c.l.b16 %v2096
        %v2142 = vunpack.c.h.b16 %v2096
        %v2143 = vunpack.c.l.b16 %v2097
        %v2144 = vunpack.c.h.b16 %v2097
        %v2145 = vunpack.c.l.b16 %v2098
        %v2146 = vunpack.c.h.b16 %v2098
        %v2147 = vunpack.c.l.b16 %v2099
        %v2148 = vunpack.c.h.b16 %v2099
        %v2149 = vunpack.c.l.b16 %v2100
        %v2150 = vunpack.c.h.b16 %v2100
        %v2151 = vunpack.c.l.b16 %v2101
        %v2152 = vunpack.c.h.b16 %v2101
        %v2153 = vunpack.c.l.b16 %v2102
        %v2154 = vunpack.c.h.b16 %v2102
        %v2155 = vunpack.c.l.b16 %v2103
        %v2156 = vunpack.c.h.b16 %v2103
        %v2157 = vunpack.c.l.b16 %v2104
        %v2158 = vunpack.c.h.b16 %v2104
        %v2159 = vunpack.c.l.b16 %v2105
        %v2160 = vunpack.c.h.b16 %v2105
        %v2161 = vunpack.c.l.b16 %v2106
        %v2162 = vunpack.c.h.b16 %v2106
        %v2163 = vunpack.c.l.b16 %v2107
        %v2164 = vunpack.c.h.b16 %v2107
        %v2165 = vunpack.c.l.b16 %v2108
        %v2166 = vunpack.c.h.b16 %v2108
        %v2167 = vunpack.c.l.b16 %v2109
        %v2168 = vunpack.c.h.b16 %v2109
        %v2169 = vunpack.c.l.b16 %v2110
        %v2170 = vunpack.c.h.b16 %v2110
        %v2171 = vpack.c.b16 %v2141, %v2139
        %v2172 = vpack.c.b16 %v2142, %v2140
        %v2173 = vpack.c.b16 %v2145, %v2143
        %v2174 = vpack.c.b16 %v2146, %v2144
        %v2175 = vpack.c.b16 %v2149, %v2147
        %v2176 = vpack.c.b16 %v2150, %v2148
        %v2177 = vpack.c.b16 %v2153, %v2151
        %v2178 = vpack.c.b16 %v2154, %v2152
        %v2179 = vpack.c.b16 %v2157, %v2155
        %v2180 = vpack.c.b16 %v2158, %v2156
        %v2181 = vpack.c.b16 %v2161, %v2159
        %v2182 = vpack.c.b16 %v2162, %v2160
        %v2183 = vpack.c.b16 %v2165, %v2163
        %v2184 = vpack.c.b16 %v2166, %v2164
        %v2185 = vpack.c.b16 %v2169, %v2167
        %v2186 = vpack.c.b16 %v2170, %v2168
        %2203 = vmatprep.subr.bf16.mxu0 %v2186
        %2204 = vmatpush1.bf16.msra.mxu0 %v2185
        %2205 = vmatprep.subr.bf16.mxu0 %v2184
        %2206 = vmatpush1.bf16.msra.mxu0 %v2183
        %2207 = vmatprep.subr.bf16.mxu0 %v2182
        %2208 = vmatpush1.bf16.msra.mxu0 %v2181
        %2209 = vmatprep.subr.bf16.mxu0 %v2180
        %2210 = vmatpush1.bf16.msra.mxu0 %v2179
        %2211 = vmatprep.subr.bf16.mxu0 %v2178
        %2212 = vmatpush1.bf16.msra.mxu0 %v2177
        %2213 = vmatprep.subr.bf16.mxu0 %v2176
        %2214 = vmatpush1.bf16.msra.mxu0 %v2175
        %2215 = vmatprep.subr.bf16.mxu0 %v2174
        %2216 = vmatpush1.bf16.msra.mxu0 %v2173
        %2217 = vmatprep.subr.bf16.mxu0 %v2172
        %2218 = vmatpush1.bf16.msra.mxu0 %v2171
        %2219 = vmatprep.subr.bf16.mxu0 0
        %2220 = vmatpush2.bf16.msra.mxu0 0
        %2221 = vmatprep.subr.bf16.mxu0 0
        %2222 = vmatpush2.bf16.msra.mxu0 0
        %2223 = vmatprep.subr.bf16.mxu0 0
        %2224 = vmatpush2.bf16.msra.mxu0 0
        %2225 = vmatprep.subr.bf16.mxu0 0
        %2226 = vmatpush2.bf16.msra.mxu0 0
        %2227 = vmatprep.subr.bf16.mxu0 0
        %2228 = vmatpush2.bf16.msra.mxu0 0
        %2229 = vmatprep.subr.bf16.mxu0 0
        %2230 = vmatpush2.bf16.msra.mxu0 0
        %2231 = vmatprep.subr.bf16.mxu0 0
        %2232 = vmatpush2.bf16.msra.mxu0 0
        %2233 = vmatprep.subr.bf16.mxu0 0
        %2234 = vmatpush2.bf16.msra.mxu0 0
        %2235 = vmatprep.mubr.bf16.mxu0 0
        %2236 = vmatmul.mubr.bf16.gmra.mxu0 %v2094
        %v2237 = vpop.f32.mrf.mxu0
        %v2238 = vadd.f32 %v2116, %v2237
        %v2239 = vpop.f32.mrf.mxu0
        %v2240 = vadd.f32 %v2120, %v2239
        %v2241 = vpop.f32.mrf.mxu0
        %v2242 = vpop.f32.mrf.mxu0
        %2243 = vdwg.mxu0
        %v2244 = vmul.f32 %v2238, 0.5
        %v2245 = vmul.f32 %v2240, 0.5
        %v2246 = vmul.f32 %v2238, 0.70710677
        %v2247 = vmul.f32 %v2240, 0.70710677
        %v2248 = verf.f32.pop %v2246
        %v2249 = verf.f32.pop %v2247
        %v2250 = vadd.f32 %v2248, 1.0
        %v2251 = vadd.f32 %v2249, 1.0
        %v2252 = vmul.f32 %v2244, %v2250
        %v2253 = vmul.f32 %v2245, %v2251
        %v2254 = vpack.c.bf16 %v2252, %v2252
        %v2255 = vpack.c.bf16 %v2253, %v2253
        %v2256 = vld [vmem:[#allocation12] sm:$0xf]
        %v2257 = vld [vmem:[#allocation12 + $0x4] sm:$0xf]
        %v2258 = vld [vmem:[#allocation12 + $0x8] sm:$0xf]
        %v2259 = vld [vmem:[#allocation12 + $0xc] sm:$0xf]
        %v2260 = vld [vmem:[#allocation12 + $0x10] sm:$0xf]
        %v2261 = vld [vmem:[#allocation12 + $0x14] sm:$0xf]
        %v2262 = vld [vmem:[#allocation12 + $0x18] sm:$0xf]
        %v2263 = vld [vmem:[#allocation12 + $0x1c] sm:$0xf]
        %v2264 = vld [vmem:[#allocation12 + $0x20] sm:$0xf]
        %v2265 = vld [vmem:[#allocation12 + $0x24] sm:$0xf]
        %v2266 = vld [vmem:[#allocation12 + $0x28] sm:$0xf]
        %v2267 = vld [vmem:[#allocation12 + $0x2c] sm:$0xf]
        %v2268 = vld [vmem:[#allocation12 + $0x30] sm:$0xf]
        %v2269 = vld [vmem:[#allocation12 + $0x34] sm:$0xf]
        %v2270 = vld [vmem:[#allocation12 + $0x38] sm:$0xf]
        %v2271 = vld [vmem:[#allocation12 + $0x3c] sm:$0xf]
        %v2272 = vld [vmem:[#allocation12 + $0x40] sm:$0xf]
        %v2273 = vld [vmem:[#allocation12 + $0x44] sm:$0xf]
        %v2274 = vld [vmem:[#allocation12 + $0x48] sm:$0xf]
        %v2275 = vld [vmem:[#allocation12 + $0x4c] sm:$0xf]
        %v2276 = vld [vmem:[#allocation12 + $0x50] sm:$0xf]
        %v2277 = vld [vmem:[#allocation12 + $0x54] sm:$0xf]
        %v2278 = vld [vmem:[#allocation12 + $0x58] sm:$0xf]
        %v2279 = vld [vmem:[#allocation12 + $0x5c] sm:$0xf]
        %v2280 = vld [vmem:[#allocation12 + $0x60] sm:$0xf]
        %v2281 = vld [vmem:[#allocation12 + $0x64] sm:$0xf]
        %v2282 = vld [vmem:[#allocation12 + $0x68] sm:$0xf]
        %v2283 = vld [vmem:[#allocation12 + $0x6c] sm:$0xf]
        %v2284 = vld [vmem:[#allocation12 + $0x70] sm:$0xf]
        %v2285 = vld [vmem:[#allocation12 + $0x74] sm:$0xf]
        %v2286 = vld [vmem:[#allocation12 + $0x78] sm:$0xf]
        %v2287 = vld [vmem:[#allocation12 + $0x7c] sm:$0xf]
        %v2288 = vld [vmem:[%s12] sm:$0x1]
        %v2290 = vlaneseq
        %v2291 = vshrl.u32 %v2290, 7
        %v2292 = vsub.s32 0, %v2291
        %v2293 = vrot.slane %v2288, %v2292
        %v2327 = vunpack.c.l.b16 %v2256
        %v2328 = vunpack.c.l.b16 %v2257
        %v2329 = vunpack.c.l.b16 %v2258
        %v2330 = vunpack.c.l.b16 %v2259
        %v2331 = vunpack.c.l.b16 %v2260
        %v2332 = vunpack.c.l.b16 %v2261
        %v2333 = vunpack.c.l.b16 %v2262
        %v2334 = vunpack.c.l.b16 %v2263
        %v2335 = vunpack.c.l.b16 %v2264
        %v2336 = vunpack.c.l.b16 %v2265
        %v2337 = vunpack.c.l.b16 %v2266
        %v2338 = vunpack.c.l.b16 %v2267
        %v2339 = vunpack.c.l.b16 %v2268
        %v2340 = vunpack.c.l.b16 %v2269
        %v2341 = vunpack.c.l.b16 %v2270
        %v2342 = vunpack.c.l.b16 %v2271
        %v2343 = vunpack.c.l.b16 %v2272
        %v2344 = vunpack.c.l.b16 %v2273
        %v2345 = vunpack.c.l.b16 %v2274
        %v2346 = vunpack.c.l.b16 %v2275
        %v2347 = vunpack.c.l.b16 %v2276
        %v2348 = vunpack.c.l.b16 %v2277
        %v2349 = vunpack.c.l.b16 %v2278
        %v2350 = vunpack.c.l.b16 %v2279
        %v2351 = vunpack.c.l.b16 %v2280
        %v2352 = vunpack.c.l.b16 %v2281
        %v2353 = vunpack.c.l.b16 %v2282
        %v2354 = vunpack.c.l.b16 %v2283
        %v2355 = vunpack.c.l.b16 %v2284
        %v2356 = vunpack.c.l.b16 %v2285
        %v2357 = vunpack.c.l.b16 %v2286
        %v2358 = vunpack.c.l.b16 %v2287
        %v2359 = vpack.c.b16 %v2328, %v2327
        %v2360 = vpack.c.b16 %v2330, %v2329
        %v2361 = vpack.c.b16 %v2332, %v2331
        %v2362 = vpack.c.b16 %v2334, %v2333
        %v2363 = vpack.c.b16 %v2336, %v2335
        %v2364 = vpack.c.b16 %v2338, %v2337
        %v2365 = vpack.c.b16 %v2340, %v2339
        %v2366 = vpack.c.b16 %v2342, %v2341
        %v2367 = vpack.c.b16 %v2344, %v2343
        %v2368 = vpack.c.b16 %v2346, %v2345
        %v2369 = vpack.c.b16 %v2348, %v2347
        %v2370 = vpack.c.b16 %v2350, %v2349
        %v2371 = vpack.c.b16 %v2352, %v2351
        %v2372 = vpack.c.b16 %v2354, %v2353
        %v2373 = vpack.c.b16 %v2356, %v2355
        %v2374 = vpack.c.b16 %v2358, %v2357
        %2391 = vmatprep.subr.bf16.mxu0 0
        %2392 = vmatpush1.bf16.msra.mxu0 %v2366
        %2393 = vmatprep.subr.bf16.mxu0 0
        %2394 = vmatpush1.bf16.msra.mxu0 %v2365
        %2395 = vmatprep.subr.bf16.mxu0 0
        %2396 = vmatpush1.bf16.msra.mxu0 %v2364
        %2397 = vmatprep.subr.bf16.mxu0 0
        %2398 = vmatpush1.bf16.msra.mxu0 %v2363
        %2399 = vmatprep.subr.bf16.mxu0 0
        %2400 = vmatpush1.bf16.msra.mxu0 %v2362
        %2401 = vmatprep.subr.bf16.mxu0 0
        %2402 = vmatpush1.bf16.msra.mxu0 %v2361
        %2403 = vmatprep.subr.bf16.mxu0 0
        %2404 = vmatpush1.bf16.msra.mxu0 %v2360
        %2405 = vmatprep.subr.bf16.mxu0 0
        %2406 = vmatpush1.bf16.msra.mxu0 %v2359
        %2407 = vmatprep.subr.bf16.mxu0 0
        %2408 = vmatpush2.bf16.msra.mxu0 %v2374
        %2409 = vmatprep.subr.bf16.mxu0 0
        %2410 = vmatpush2.bf16.msra.mxu0 %v2373
        %2411 = vmatprep.subr.bf16.mxu0 0
        %2412 = vmatpush2.bf16.msra.mxu0 %v2372
        %2413 = vmatprep.subr.bf16.mxu0 0
        %2414 = vmatpush2.bf16.msra.mxu0 %v2371
        %2415 = vmatprep.subr.bf16.mxu0 0
        %2416 = vmatpush2.bf16.msra.mxu0 %v2370
        %2417 = vmatprep.subr.bf16.mxu0 0
        %2418 = vmatpush2.bf16.msra.mxu0 %v2369
        %2419 = vmatprep.subr.bf16.mxu0 0
        %2420 = vmatpush2.bf16.msra.mxu0 %v2368
        %2421 = vmatprep.subr.bf16.mxu0 0
        %2422 = vmatpush2.bf16.msra.mxu0 %v2367
        %2423 = vmatprep.mubr.bf16.mxu0 %v2255
        %2424 = vmatmul.mubr.bf16.gmra.mxu0 %v2254
        %v2425 = vpop.f32.mrf.mxu0
        %v2426 = vadd.f32 %v2293, %v2425
        %v2427 = vpop.f32.mrf.mxu0
        %v2428 = vpop.f32.mrf.mxu0
        %v2429 = vpop.f32.mrf.mxu0
        %2430 = vdwg.mxu0
        %v2431 = vadd.f32 %v2093, %v2426
        %v2432 = vld [vmem:[%s15] sm:$0x1]
        %v2433 = vld [vmem:[%s16] sm:$0x1]
        %2434 = vadd.xlane.f32.xlu0 %v2431
        %v2435 = vpop.xlane.xlu0 %2434
        %v2436 = vmul.f32 %v2435, %v1090
        %v2437 = vsub.f32 %v2431, %v2436
        %v2438 = vmul.f32 %v2437, %v2437
        %2439 = vadd.xlane.f32.xlu0 %v2438
        %v2440 = vpop.xlane.xlu0 %2439
        %v2441 = vmul.f32 %v2440, %v1090
        %v2442 = vadd.f32 %v2441, 1e-12
        %v2443 = vrsqrt.pop %v2442
        %v2444 = vmul.f32 %v2437, %v2443
        %v2446 = vlaneseq
        %v2447 = vshrl.u32 %v2446, 7
        %v2448 = vsub.s32 0, %v2447
        %v2449 = vrot.slane %v2432, %v2448
        %v2451 = vmul.f32 %v2444, %v2449
        %v2453 = vlaneseq
        %v2454 = vshrl.u32 %v2453, 7
        %v2455 = vsub.s32 0, %v2454
        %v2456 = vrot.slane %v2433, %v2455
        %v2458 = vadd.f32 %v2451, %v2456
        %v2459 = vpack.c.bf16 %v2458, %v2458
        %s2460 = scalar_lea.vmem [#allocation7], 192
        %v2461 = vld [vmem:[%s2460] sm:$0xff]
        %v2462 = vld [vmem:[%s2460 + $0x8] sm:$0xf]
        %v2463 = vld [vmem:[%s2460 + $0xc] sm:$0xff]
        %v2464 = vld [vmem:[%s2460 + $0x14] sm:$0xf]
        %v2465 = vld [vmem:[%s2460 + $0x18] sm:$0xff]
        %v2466 = vld [vmem:[%s2460 + $0x20] sm:$0xf]
        %v2467 = vld [vmem:[%s2460 + $0x24] sm:$0xff]
        %v2468 = vld [vmem:[%s2460 + $0x2c] sm:$0xf]
        %v2469 = vld [vmem:[%s2460 + $0x30] sm:$0xff]
        %v2470 = vld [vmem:[%s2460 + $0x38] sm:$0xf]
        %v2471 = vld [vmem:[%s2460 + $0x3c] sm:$0xff]
        %v2472 = vld [vmem:[%s2460 + $0x44] sm:$0xf]
        %v2473 = vld [vmem:[%s2460 + $0x48] sm:$0xff]
        %v2474 = vld [vmem:[%s2460 + $0x50] sm:$0xf]
        %v2475 = vld [vmem:[%s2460 + $0x54] sm:$0xff]
        %v2476 = vld [vmem:[%s2460 + $0x5c] sm:$0xf]
        %v2477 = vld [vmem:[%s2460 + $0x60] sm:$0xff]
        %v2478 = vld [vmem:[%s2460 + $0x68] sm:$0xf]
        %v2479 = vld [vmem:[%s2460 + $0x6c] sm:$0xff]
        %v2480 = vld [vmem:[%s2460 + $0x74] sm:$0xf]
        %v2481 = vld [vmem:[%s2460 + $0x78] sm:$0xff]
        %v2482 = vld [vmem:[%s2460 + $0x80] sm:$0xf]
        %v2483 = vld [vmem:[%s2460 + $0x84] sm:$0xff]
        %v2484 = vld [vmem:[%s2460 + $0x8c] sm:$0xf]
        %v2485 = vld [vmem:[%s2460 + $0x90] sm:$0xff]
        %v2486 = vld [vmem:[%s2460 + $0x98] sm:$0xf]
        %v2487 = vld [vmem:[%s2460 + $0x9c] sm:$0xff]
        %v2488 = vld [vmem:[%s2460 + $0xa4] sm:$0xf]
        %v2489 = vld [vmem:[%s2460 + $0xa8] sm:$0xff]
        %v2490 = vld [vmem:[%s2460 + $0xb0] sm:$0xf]
        %v2491 = vld [vmem:[%s2460 + $0xb4] sm:$0xff]
        %v2492 = vld [vmem:[%s2460 + $0xbc] sm:$0xf]
        %s2493 = scalar_lea.vmem %s6, 3
        %v2494 = vld [vmem:[%s2493] sm:$0x7]
        %v2496 = vlaneseq
        %v2497 = vshrl.u32 %v2496, 7
        %v2498 = vsub.s32 0, %v2497
        %v2499 = vrot.slane %v2494, %v2498
        %v2500 = vlaneseq
        %v2501 = vshrl.u32 %v2500, 7
        %v2502 = vsub.s32 1, %v2501
        %v2503 = vrot.slane %v2494, %v2502
        %v2504 = vlaneseq
        %v2505 = vshrl.u32 %v2504, 7
        %v2506 = vsub.s32 2, %v2505
        %v2507 = vrot.slane %v2494, %v2506
        %v2543 = vunpack.c.l.b16 %v2461
        %v2544 = vunpack.c.h.b16 %v2461
        %v2545 = vunpack.c.l.b16 %v2462
        %v2546 = vunpack.c.l.b16 %v2463
        %v2547 = vunpack.c.h.b16 %v2463
        %v2548 = vunpack.c.l.b16 %v2464
        %v2549 = vunpack.c.l.b16 %v2465
        %v2550 = vunpack.c.h.b16 %v2465
        %v2551 = vunpack.c.l.b16 %v2466
        %v2552 = vunpack.c.l.b16 %v2467
        %v2553 = vunpack.c.h.b16 %v2467
        %v2554 = vunpack.c.l.b16 %v2468
        %v2555 = vunpack.c.l.b16 %v2469
        %v2556 = vunpack.c.h.b16 %v2469
        %v2557 = vunpack.c.l.b16 %v2470
        %v2558 = vunpack.c.l.b16 %v2471
        %v2559 = vunpack.c.h.b16 %v2471
        %v2560 = vunpack.c.l.b16 %v2472
        %v2561 = vunpack.c.l.b16 %v2473
        %v2562 = vunpack.c.h.b16 %v2473
        %v2563 = vunpack.c.l.b16 %v2474
        %v2564 = vunpack.c.l.b16 %v2475
        %v2565 = vunpack.c.h.b16 %v2475
        %v2566 = vunpack.c.l.b16 %v2476
        %v2567 = vunpack.c.l.b16 %v2477
        %v2568 = vunpack.c.h.b16 %v2477
        %v2569 = vunpack.c.l.b16 %v2478
        %v2570 = vunpack.c.l.b16 %v2479
        %v2571 = vunpack.c.h.b16 %v2479
        %v2572 = vunpack.c.l.b16 %v2480
        %v2573 = vunpack.c.l.b16 %v2481
        %v2574 = vunpack.c.h.b16 %v2481
        %v2575 = vunpack.c.l.b16 %v2482
        %v2576 = vunpack.c.l.b16 %v2483
        %v2577 = vunpack.c.h.b16 %v2483
        %v2578 = vunpack.c.l.b16 %v2484
        %v2579 = vunpack.c.l.b16 %v2485
        %v2580 = vunpack.c.h.b16 %v2485
        %v2581 = vunpack.c.l.b16 %v2486
        %v2582 = vunpack.c.l.b16 %v2487
        %v2583 = vunpack.c.h.b16 %v2487
        %v2584 = vunpack.c.l.b16 %v2488
        %v2585 = vunpack.c.l.b16 %v2489
        %v2586 = vunpack.c.h.b16 %v2489
        %v2587 = vunpack.c.l.b16 %v2490
        %v2588 = vunpack.c.l.b16 %v2491
        %v2589 = vunpack.c.h.b16 %v2491
        %v2590 = vunpack.c.l.b16 %v2492
        %v2591 = vpack.c.b16 %v2546, %v2543
        %v2592 = vpack.c.b16 %v2547, %v2544
        %v2593 = vpack.c.b16 %v2548, %v2545
        %v2594 = vpack.c.b16 %v2552, %v2549
        %v2595 = vpack.c.b16 %v2553, %v2550
        %v2596 = vpack.c.b16 %v2554, %v2551
        %v2597 = vpack.c.b16 %v2558, %v2555
        %v2598 = vpack.c.b16 %v2559, %v2556
        %v2599 = vpack.c.b16 %v2560, %v2557
        %v2600 = vpack.c.b16 %v2564, %v2561
        %v2601 = vpack.c.b16 %v2565, %v2562
        %v2602 = vpack.c.b16 %v2566, %v2563
        %v2603 = vpack.c.b16 %v2570, %v2567
        %v2604 = vpack.c.b16 %v2571, %v2568
        %v2605 = vpack.c.b16 %v2572, %v2569
        %v2606 = vpack.c.b16 %v2576, %v2573
        %v2607 = vpack.c.b16 %v2577, %v2574
        %v2608 = vpack.c.b16 %v2578, %v2575
        %v2609 = vpack.c.b16 %v2582, %v2579
        %v2610 = vpack.c.b16 %v2583, %v2580
        %v2611 = vpack.c.b16 %v2584, %v2581
        %v2612 = vpack.c.b16 %v2588, %v2585
        %v2613 = vpack.c.b16 %v2589, %v2586
        %v2614 = vpack.c.b16 %v2590, %v2587
        %2639 = vmatprep.subr.bf16.mxu0 %v2613
        %2640 = vmatpush1.bf16.msra.mxu0 %v2612
        %2641 = vmatprep.subr.bf16.mxu0 %v2610
        %2642 = vmatpush1.bf16.msra.mxu0 %v2609
        %2643 = vmatprep.subr.bf16.mxu0 %v2607
        %2644 = vmatpush1.bf16.msra.mxu0 %v2606
        %2645 = vmatprep.subr.bf16.mxu0 %v2604
        %2646 = vmatpush1.bf16.msra.mxu0 %v2603
        %2647 = vmatprep.subr.bf16.mxu0 %v2601
        %2648 = vmatpush1.bf16.msra.mxu0 %v2600
        %2649 = vmatprep.subr.bf16.mxu0 %v2598
        %2650 = vmatpush1.bf16.msra.mxu0 %v2597
        %2651 = vmatprep.subr.bf16.mxu0 %v2595
        %2652 = vmatpush1.bf16.msra.mxu0 %v2594
        %2653 = vmatprep.subr.bf16.mxu0 %v2592
        %2654 = vmatpush1.bf16.msra.mxu0 %v2591
        %2655 = vmatprep.subr.bf16.mxu0 0
        %2656 = vmatpush2.bf16.msra.mxu0 0
        %2657 = vmatprep.subr.bf16.mxu0 0
        %2658 = vmatpush2.bf16.msra.mxu0 0
        %2659 = vmatprep.subr.bf16.mxu0 0
        %2660 = vmatpush2.bf16.msra.mxu0 0
        %2661 = vmatprep.subr.bf16.mxu0 0
        %2662 = vmatpush2.bf16.msra.mxu0 0
        %2663 = vmatprep.subr.bf16.mxu0 0
        %2664 = vmatpush2.bf16.msra.mxu0 0
        %2665 = vmatprep.subr.bf16.mxu0 0
        %2666 = vmatpush2.bf16.msra.mxu0 0
        %2667 = vmatprep.subr.bf16.mxu0 0
        %2668 = vmatpush2.bf16.msra.mxu0 0
        %2669 = vmatprep.subr.bf16.mxu0 0
        %2670 = vmatpush2.bf16.msra.mxu0 0
        %2671 = vmatprep.mubr.bf16.mxu0 0
        %2672 = vmatmul.mubr.bf16.gmra.mxu0 %v2459
        %v2673 = vpop.f32.mrf.mxu0
        %v2674 = vadd.f32 %v2499, %v2673
        %v2675 = vpop.f32.mrf.mxu0
        %v2676 = vadd.f32 %v2503, %v2675
        %v2677 = vpop.f32.mrf.mxu0
        %v2678 = vpop.f32.mrf.mxu0
        %2679 = vdwg.mxu0
        %2680 = vmatprep.subr.bf16.mxu0 0
        %2681 = vmatpush1.bf16.msra.mxu0 %v2614
        %2682 = vmatprep.subr.bf16.mxu0 0
        %2683 = vmatpush1.bf16.msra.mxu0 %v2611
        %2684 = vmatprep.subr.bf16.mxu0 0
        %2685 = vmatpush1.bf16.msra.mxu0 %v2608
        %2686 = vmatprep.subr.bf16.mxu0 0
        %2687 = vmatpush1.bf16.msra.mxu0 %v2605
        %2688 = vmatprep.subr.bf16.mxu0 0
        %2689 = vmatpush1.bf16.msra.mxu0 %v2602
        %2690 = vmatprep.subr.bf16.mxu0 0
        %2691 = vmatpush1.bf16.msra.mxu0 %v2599
        %2692 = vmatprep.subr.bf16.mxu0 0
        %2693 = vmatpush1.bf16.msra.mxu0 %v2596
        %2694 = vmatprep.subr.bf16.mxu0 0
        %2695 = vmatpush1.bf16.msra.mxu0 %v2593
        %2696 = vmatprep.subr.bf16.mxu0 0
        %2697 = vmatpush2.bf16.msra.mxu0 0
        %2698 = vmatprep.subr.bf16.mxu0 0
        %2699 = vmatpush2.bf16.msra.mxu0 0
        %2700 = vmatprep.subr.bf16.mxu0 0
        %2701 = vmatpush2.bf16.msra.mxu0 0
        %2702 = vmatprep.subr.bf16.mxu0 0
        %2703 = vmatpush2.bf16.msra.mxu0 0
        %2704 = vmatprep.subr.bf16.mxu0 0
        %2705 = vmatpush2.bf16.msra.mxu0 0
        %2706 = vmatprep.subr.bf16.mxu0 0
        %2707 = vmatpush2.bf16.msra.mxu0 0
        %2708 = vmatprep.subr.bf16.mxu0 0
        %2709 = vmatpush2.bf16.msra.mxu0 0
        %2710 = vmatprep.subr.bf16.mxu0 0
        %2711 = vmatpush2.bf16.msra.mxu0 0
        %2712 = vmatprep.mubr.bf16.mxu0 0
        %2713 = vmatmul.mubr.bf16.gmra.mxu0 %v2459
        %v2714 = vpop.f32.mrf.mxu0
        %v2715 = vadd.f32 %v2507, %v2714
        %v2716 = vpop.f32.mrf.mxu0
        %v2717 = vpop.f32.mrf.mxu0
        %v2718 = vpop.f32.mrf.mxu0
        %2719 = vdwg.mxu0
        %s2720 = scalar_lea.vmem [#allocation9], 64
        %v2721 = vld [vmem:[%s2720] sm:$0xf]
        %v2722 = vld [vmem:[%s2720 + $0x4] sm:$0xf]
        %v2723 = vld [vmem:[%s2720 + $0x8] sm:$0xf]
        %v2724 = vld [vmem:[%s2720 + $0xc] sm:$0xf]
        %v2725 = vld [vmem:[%s2720 + $0x10] sm:$0xf]
        %v2726 = vld [vmem:[%s2720 + $0x14] sm:$0xf]
        %v2727 = vld [vmem:[%s2720 + $0x18] sm:$0xf]
        %v2728 = vld [vmem:[%s2720 + $0x1c] sm:$0xf]
        %v2729 = vld [vmem:[%s2720 + $0x20] sm:$0xf]
        %v2730 = vld [vmem:[%s2720 + $0x24] sm:$0xf]
        %v2731 = vld [vmem:[%s2720 + $0x28] sm:$0xf]
        %v2732 = vld [vmem:[%s2720 + $0x2c] sm:$0xf]
        %v2733 = vld [vmem:[%s2720 + $0x30] sm:$0xf]
        %v2734 = vld [vmem:[%s2720 + $0x34] sm:$0xf]
        %v2735 = vld [vmem:[%s2720 + $0x38] sm:$0xf]
        %v2736 = vld [vmem:[%s2720 + $0x3c] sm:$0xf]
        %v2737 = vpack.c.bf16 %v2674, %v2674
        %v2738 = vpack.c.bf16 %v2676, %v2676
        %v2739 = vpack.c.bf16 %v2715, %v2715
        %v2741 = vsel %vm1392, %v2737, 0
        %v2744 = vsel %vm1392, %v2738, 0
        %2746 = vmatprep.subr.bf16.mxu0 0
        %2747 = vmatpush1.bf16.xpose.msra.mxu0 0
        %2748 = vmatprep.subr.bf16.mxu0 0
        %2749 = vmatpush1.bf16.xpose.msra.mxu0 0
        %2750 = vmatprep.subr.bf16.mxu0 0
        %2751 = vmatpush1.bf16.xpose.msra.mxu0 0
        %2752 = vmatprep.subr.bf16.mxu0 0
        %2753 = vmatpush1.bf16.xpose.msra.mxu0 0
        %2754 = vmatprep.subr.bf16.mxu0 0
        %2755 = vmatpush1.bf16.xpose.msra.mxu0 0
        %2756 = vmatprep.subr.bf16.mxu0 0
        %2757 = vmatpush1.bf16.xpose.msra.mxu0 0
        %2758 = vmatprep.subr.bf16.mxu0 0
        %2759 = vmatpush1.bf16.xpose.msra.mxu0 0
        %2760 = vmatprep.subr.bf16.mxu0 0
        %2761 = vmatpush1.bf16.xpose.msra.mxu0 %v2744
        %2762 = vmatprep.subr.bf16.mxu0 0
        %2763 = vmatpush2.bf16.xpose.msra.mxu0 0
        %2764 = vmatprep.subr.bf16.mxu0 0
        %2765 = vmatpush2.bf16.xpose.msra.mxu0 0
        %2766 = vmatprep.subr.bf16.mxu0 0
        %2767 = vmatpush2.bf16.xpose.msra.mxu0 0
        %2768 = vmatprep.subr.bf16.mxu0 0
        %2769 = vmatpush2.bf16.xpose.msra.mxu0 0
        %2770 = vmatprep.subr.bf16.mxu0 0
        %2771 = vmatpush2.bf16.xpose.msra.mxu0 0
        %2772 = vmatprep.subr.bf16.mxu0 0
        %2773 = vmatpush2.bf16.xpose.msra.mxu0 0
        %2774 = vmatprep.subr.bf16.mxu0 0
        %2775 = vmatpush2.bf16.xpose.msra.mxu0 0
        %2776 = vmatprep.subr.bf16.mxu0 0
        %2777 = vmatpush2.bf16.xpose.msra.mxu0 0
        %2778 = vmatprep.mubr.bf16.mxu0 0
        %2779 = vmatmul.mubr.bf16.gmra.mxu0 %v2741
        %v2780 = vpop.f32.mrf.mxu0
        %v2781 = vadd.f32 0.0, %v2780
        %v2782 = vpop.f32.mrf.mxu0
        %v2783 = vpop.f32.mrf.mxu0
        %v2784 = vpop.f32.mrf.mxu0
        %2785 = vdwg.mxu0
        %v2786 = vsel %vm1439, %v2781, -inf
        %2787 = vmax.xlane.f32.xlu0 %v2786
        %v2788 = vpop.xlane.xlu0 %2787
        %v2789 = vsub.f32 %v2781, %v2788
        %v2790 = vmul.f32 %v2789, 1.442695
        %v2791 = vpow.pop %v2790
        %v2792 = vsel %vm1439, %v2791, 0.0
        %2793 = vadd.xlane.f32.xlu0 %v2792
        %v2794 = vpop.xlane.xlu0 %2793
        %v2795 = vrcp.pop %v2794
        %v2796 = vmul.f32 %v2791, %v2795
        %v2797 = vpack.c.bf16 %v2796, %v2796
        %v2799 = vsel %vm1439, %v2797, 0
        %v2802 = vsel %vm1455, %v2739, 0
        %2804 = vmatprep.subr.bf16.mxu0 0
        %2805 = vmatpush1.bf16.msra.mxu0 0
        %2806 = vmatprep.subr.bf16.mxu0 0
        %2807 = vmatpush1.bf16.msra.mxu0 0
        %2808 = vmatprep.subr.bf16.mxu0 0
        %2809 = vmatpush1.bf16.msra.mxu0 0
        %2810 = vmatprep.subr.bf16.mxu0 0
        %2811 = vmatpush1.bf16.msra.mxu0 0
        %2812 = vmatprep.subr.bf16.mxu0 0
        %2813 = vmatpush1.bf16.msra.mxu0 0
        %2814 = vmatprep.subr.bf16.mxu0 0
        %2815 = vmatpush1.bf16.msra.mxu0 0
        %2816 = vmatprep.subr.bf16.mxu0 0
        %2817 = vmatpush1.bf16.msra.mxu0 0
        %2818 = vmatprep.subr.bf16.mxu0 0
        %2819 = vmatpush1.bf16.msra.mxu0 %v2802
        %2820 = vmatprep.subr.bf16.mxu0 0
        %2821 = vmatpush2.bf16.msra.mxu0 0
        %2822 = vmatprep.subr.bf16.mxu0 0
        %2823 = vmatpush2.bf16.msra.mxu0 0
        %2824 = vmatprep.subr.bf16.mxu0 0
        %2825 = vmatpush2.bf16.msra.mxu0 0
        %2826 = vmatprep.subr.bf16.mxu0 0
        %2827 = vmatpush2.bf16.msra.mxu0 0
        %2828 = vmatprep.subr.bf16.mxu0 0
        %2829 = vmatpush2.bf16.msra.mxu0 0
        %2830 = vmatprep.subr.bf16.mxu0 0
        %2831 = vmatpush2.bf16.msra.mxu0 0
        %2832 = vmatprep.subr.bf16.mxu0 0
        %2833 = vmatpush2.bf16.msra.mxu0 0
        %2834 = vmatprep.subr.bf16.mxu0 0
        %2835 = vmatpush2.bf16.msra.mxu0 0
        %2836 = vmatprep.mubr.bf16.mxu0 0
        %2837 = vmatmul.mubr.bf16.gmra.mxu0 %v2799
        %v2838 = vpop.f32.mrf.mxu0
        %v2839 = vadd.f32 0.0, %v2838
        %v2840 = vpop.f32.mrf.mxu0
        %v2841 = vpop.f32.mrf.mxu0
        %v2842 = vpop.f32.mrf.mxu0
        %2843 = vdwg.mxu0
        %v2844 = vpack.c.bf16 %v2839, %v2839
        %2846 = vrot.lane.b32.xlu0 %v2737, 96
        %v2847 = vpop.permute.xlu0 %2846
        %2849 = vrot.lane.b32.xlu0 %v2738, 96
        %v2850 = vpop.permute.xlu0 %2849
        %v2852 = vsel %vm1392, %v2847, 0
        %v2855 = vsel %vm1392, %v2850, 0
        %2857 = vmatprep.subr.bf16.mxu0 0
        %2858 = vmatpush1.bf16.xpose.msra.mxu0 0
        %2859 = vmatprep.subr.bf16.mxu0 0
        %2860 = vmatpush1.bf16.xpose.msra.mxu0 0
        %2861 = vmatprep.subr.bf16.mxu0 0
        %2862 = vmatpush1.bf16.xpose.msra.mxu0 0
        %2863 = vmatprep.subr.bf16.mxu0 0
        %2864 = vmatpush1.bf16.xpose.msra.mxu0 0
        %2865 = vmatprep.subr.bf16.mxu0 0
        %2866 = vmatpush1.bf16.xpose.msra.mxu0 0
        %2867 = vmatprep.subr.bf16.mxu0 0
        %2868 = vmatpush1.bf16.xpose.msra.mxu0 0
        %2869 = vmatprep.subr.bf16.mxu0 0
        %2870 = vmatpush1.bf16.xpose.msra.mxu0 0
        %2871 = vmatprep.subr.bf16.mxu0 0
        %2872 = vmatpush1.bf16.xpose.msra.mxu0 %v2855
        %2873 = vmatprep.subr.bf16.mxu0 0
        %2874 = vmatpush2.bf16.xpose.msra.mxu0 0
        %2875 = vmatprep.subr.bf16.mxu0 0
        %2876 = vmatpush2.bf16.xpose.msra.mxu0 0
        %2877 = vmatprep.subr.bf16.mxu0 0
        %2878 = vmatpush2.bf16.xpose.msra.mxu0 0
        %2879 = vmatprep.subr.bf16.mxu0 0
        %2880 = vmatpush2.bf16.xpose.msra.mxu0 0
        %2881 = vmatprep.subr.bf16.mxu0 0
        %2882 = vmatpush2.bf16.xpose.msra.mxu0 0
        %2883 = vmatprep.subr.bf16.mxu0 0
        %2884 = vmatpush2.bf16.xpose.msra.mxu0 0
        %2885 = vmatprep.subr.bf16.mxu0 0
        %2886 = vmatpush2.bf16.xpose.msra.mxu0 0
        %2887 = vmatprep.subr.bf16.mxu0 0
        %2888 = vmatpush2.bf16.xpose.msra.mxu0 0
        %2889 = vmatprep.mubr.bf16.mxu0 0
        %2890 = vmatmul.mubr.bf16.gmra.mxu0 %v2852
        %v2891 = vpop.f32.mrf.mxu0
        %v2892 = vadd.f32 0.0, %v2891
        %v2893 = vpop.f32.mrf.mxu0
        %v2894 = vpop.f32.mrf.mxu0
        %v2895 = vpop.f32.mrf.mxu0
        %2896 = vdwg.mxu0
        %v2897 = vsel %vm1439, %v2892, -inf
        %2898 = vmax.xlane.f32.xlu0 %v2897
        %v2899 = vpop.xlane.xlu0 %2898
        %v2900 = vsub.f32 %v2892, %v2899
        %v2901 = vmul.f32 %v2900, 1.442695
        %v2902 = vpow.pop %v2901
        %v2903 = vsel %vm1439, %v2902, 0.0
        %2904 = vadd.xlane.f32.xlu0 %v2903
        %v2905 = vpop.xlane.xlu0 %2904
        %v2906 = vrcp.pop %v2905
        %v2907 = vmul.f32 %v2902, %v2906
        %v2908 = vpack.c.bf16 %v2907, %v2907
        %2910 = vrot.lane.b32.xlu0 %v2739, 96
        %v2911 = vpop.permute.xlu0 %2910
        %v2913 = vsel %vm1439, %v2908, 0
        %v2916 = vsel %vm1455, %v2911, 0
        %2918 = vmatprep.subr.bf16.mxu0 0
        %2919 = vmatpush1.bf16.msra.mxu0 0
        %2920 = vmatprep.subr.bf16.mxu0 0
        %2921 = vmatpush1.bf16.msra.mxu0 0
        %2922 = vmatprep.subr.bf16.mxu0 0
        %2923 = vmatpush1.bf16.msra.mxu0 0
        %2924 = vmatprep.subr.bf16.mxu0 0
        %2925 = vmatpush1.bf16.msra.mxu0 0
        %2926 = vmatprep.subr.bf16.mxu0 0
        %2927 = vmatpush1.bf16.msra.mxu0 0
        %2928 = vmatprep.subr.bf16.mxu0 0
        %2929 = vmatpush1.bf16.msra.mxu0 0
        %2930 = vmatprep.subr.bf16.mxu0 0
        %2931 = vmatpush1.bf16.msra.mxu0 0
        %2932 = vmatprep.subr.bf16.mxu0 0
        %2933 = vmatpush1.bf16.msra.mxu0 %v2916
        %2934 = vmatprep.subr.bf16.mxu0 0
        %2935 = vmatpush2.bf16.msra.mxu0 0
        %2936 = vmatprep.subr.bf16.mxu0 0
        %2937 = vmatpush2.bf16.msra.mxu0 0
        %2938 = vmatprep.subr.bf16.mxu0 0
        %2939 = vmatpush2.bf16.msra.mxu0 0
        %2940 = vmatprep.subr.bf16.mxu0 0
        %2941 = vmatpush2.bf16.msra.mxu0 0
        %2942 = vmatprep.subr.bf16.mxu0 0
        %2943 = vmatpush2.bf16.msra.mxu0 0
        %2944 = vmatprep.subr.bf16.mxu0 0
        %2945 = vmatpush2.bf16.msra.mxu0 0
        %2946 = vmatprep.subr.bf16.mxu0 0
        %2947 = vmatpush2.bf16.msra.mxu0 0
        %2948 = vmatprep.subr.bf16.mxu0 0
        %2949 = vmatpush2.bf16.msra.mxu0 0
        %2950 = vmatprep.mubr.bf16.mxu0 0
        %2951 = vmatmul.mubr.bf16.gmra.mxu0 %v2913
        %v2952 = vpop.f32.mrf.mxu0
        %v2953 = vadd.f32 0.0, %v2952
        %v2954 = vpop.f32.mrf.mxu0
        %v2955 = vpop.f32.mrf.mxu0
        %v2956 = vpop.f32.mrf.mxu0
        %2957 = vdwg.mxu0
        %v2958 = vpack.c.bf16 %v2953, %v2953
        %v2963 = vunpack.c.l.b16 %v2725
        %v2964 = vunpack.c.l.b16 %v2726
        %v2965 = vunpack.c.l.b16 %v2727
        %v2966 = vunpack.c.l.b16 %v2728
        %v2967 = vpack.c.b16 %v2964, %v2963
        %v2968 = vpack.c.b16 %v2966, %v2965
        %v2972 = vsel %vm1392, %v2958, 0
        %2974 = vmatprep.subr.bf16.mxu0 0
        %2975 = vmatpush1.bf16.msra.mxu0 0
        %2976 = vmatprep.subr.bf16.mxu0 0
        %2977 = vmatpush1.bf16.msra.mxu0 0
        %2978 = vmatprep.subr.bf16.mxu0 0
        %2979 = vmatpush1.bf16.msra.mxu0 0
        %2980 = vmatprep.subr.bf16.mxu0 0
        %2981 = vmatpush1.bf16.msra.mxu0 0
        %2982 = vmatprep.subr.bf16.mxu0 0
        %2983 = vmatpush1.bf16.msra.mxu0 0
        %2984 = vmatprep.subr.bf16.mxu0 0
        %2985 = vmatpush1.bf16.msra.mxu0 0
        %2986 = vmatprep.subr.bf16.mxu0 0
        %2987 = vmatpush1.bf16.msra.mxu0 %v2968
        %2988 = vmatprep.subr.bf16.mxu0 0
        %2989 = vmatpush1.bf16.msra.mxu0 %v2967
        %2990 = vmatprep.subr.bf16.mxu0 0
        %2991 = vmatpush2.bf16.msra.mxu0 0
        %2992 = vmatprep.subr.bf16.mxu0 0
        %2993 = vmatpush2.bf16.msra.mxu0 0
        %2994 = vmatprep.subr.bf16.mxu0 0
        %2995 = vmatpush2.bf16.msra.mxu0 0
        %2996 = vmatprep.subr.bf16.mxu0 0
        %2997 = vmatpush2.bf16.msra.mxu0 0
        %2998 = vmatprep.subr.bf16.mxu0 0
        %2999 = vmatpush2.bf16.msra.mxu0 0
        %3000 = vmatprep.subr.bf16.mxu0 0
        %3001 = vmatpush2.bf16.msra.mxu0 0
        %3002 = vmatprep.subr.bf16.mxu0 0
        %3003 = vmatpush2.bf16.msra.mxu0 0
        %3004 = vmatprep.subr.bf16.mxu0 0
        %3005 = vmatpush2.bf16.msra.mxu0 0
        %3006 = vmatprep.mubr.bf16.mxu0 0
        %3007 = vmatmul.mubr.bf16.gmra.mxu0 %v2972
        %v3008 = vpop.f32.mrf.mxu0
        %v3009 = vadd.f32 0.0, %v3008
        %v3010 = vpop.f32.mrf.mxu0
        %v3011 = vpop.f32.mrf.mxu0
        %v3012 = vpop.f32.mrf.mxu0
        %3013 = vdwg.mxu0
        %v3018 = vunpack.c.l.b16 %v2721
        %v3019 = vunpack.c.l.b16 %v2722
        %v3020 = vunpack.c.l.b16 %v2723
        %v3021 = vunpack.c.l.b16 %v2724
        %v3022 = vpack.c.b16 %v3019, %v3018
        %v3023 = vpack.c.b16 %v3021, %v3020
        %v3027 = vsel %vm1392, %v2844, 0
        %3029 = vmatprep.subr.bf16.mxu0 0
        %3030 = vmatpush1.bf16.msra.mxu0 0
        %3031 = vmatprep.subr.bf16.mxu0 0
        %3032 = vmatpush1.bf16.msra.mxu0 0
        %3033 = vmatprep.subr.bf16.mxu0 0
        %3034 = vmatpush1.bf16.msra.mxu0 0
        %3035 = vmatprep.subr.bf16.mxu0 0
        %3036 = vmatpush1.bf16.msra.mxu0 0
        %3037 = vmatprep.subr.bf16.mxu0 0
        %3038 = vmatpush1.bf16.msra.mxu0 0
        %3039 = vmatprep.subr.bf16.mxu0 0
        %3040 = vmatpush1.bf16.msra.mxu0 0
        %3041 = vmatprep.subr.bf16.mxu0 0
        %3042 = vmatpush1.bf16.msra.mxu0 %v3023
        %3043 = vmatprep.subr.bf16.mxu0 0
        %3044 = vmatpush1.bf16.msra.mxu0 %v3022
        %3045 = vmatprep.subr.bf16.mxu0 0
        %3046 = vmatpush2.bf16.msra.mxu0 0
        %3047 = vmatprep.subr.bf16.mxu0 0
        %3048 = vmatpush2.bf16.msra.mxu0 0
        %3049 = vmatprep.subr.bf16.mxu0 0
        %3050 = vmatpush2.bf16.msra.mxu0 0
        %3051 = vmatprep.subr.bf16.mxu0 0
        %3052 = vmatpush2.bf16.msra.mxu0 0
        %3053 = vmatprep.subr.bf16.mxu0 0
        %3054 = vmatpush2.bf16.msra.mxu0 0
        %3055 = vmatprep.subr.bf16.mxu0 0
        %3056 = vmatpush2.bf16.msra.mxu0 0
        %3057 = vmatprep.subr.bf16.mxu0 0
        %3058 = vmatpush2.bf16.msra.mxu0 0
        %3059 = vmatprep.subr.bf16.mxu0 0
        %3060 = vmatpush2.bf16.msra.mxu0 0
        %3061 = vmatprep.mubr.bf16.mxu0 0
        %3062 = vmatmul.mubr.bf16.gmra.mxu0 %v3027
        %v3063 = vpop.f32.mrf.mxu0
        %v3064 = vadd.f32 %v3009, %v3063
        %v3065 = vpop.f32.mrf.mxu0
        %v3066 = vpop.f32.mrf.mxu0
        %v3067 = vpop.f32.mrf.mxu0
        %3068 = vdwg.mxu0
        %3069 = vrot.lane.b32.xlu0 %v2737, 64
        %v3070 = vpop.permute.xlu0 %3069
        %3071 = vrot.lane.b32.xlu0 %v2738, 64
        %v3072 = vpop.permute.xlu0 %3071
        %v3074 = vsel %vm1392, %v3070, 0
        %v3077 = vsel %vm1392, %v3072, 0
        %3079 = vmatprep.subr.bf16.mxu0 0
        %3080 = vmatpush1.bf16.xpose.msra.mxu0 0
        %3081 = vmatprep.subr.bf16.mxu0 0
        %3082 = vmatpush1.bf16.xpose.msra.mxu0 0
        %3083 = vmatprep.subr.bf16.mxu0 0
        %3084 = vmatpush1.bf16.xpose.msra.mxu0 0
        %3085 = vmatprep.subr.bf16.mxu0 0
        %3086 = vmatpush1.bf16.xpose.msra.mxu0 0
        %3087 = vmatprep.subr.bf16.mxu0 0
        %3088 = vmatpush1.bf16.xpose.msra.mxu0 0
        %3089 = vmatprep.subr.bf16.mxu0 0
        %3090 = vmatpush1.bf16.xpose.msra.mxu0 0
        %3091 = vmatprep.subr.bf16.mxu0 0
        %3092 = vmatpush1.bf16.xpose.msra.mxu0 0
        %3093 = vmatprep.subr.bf16.mxu0 0
        %3094 = vmatpush1.bf16.xpose.msra.mxu0 %v3077
        %3095 = vmatprep.subr.bf16.mxu0 0
        %3096 = vmatpush2.bf16.xpose.msra.mxu0 0
        %3097 = vmatprep.subr.bf16.mxu0 0
        %3098 = vmatpush2.bf16.xpose.msra.mxu0 0
        %3099 = vmatprep.subr.bf16.mxu0 0
        %3100 = vmatpush2.bf16.xpose.msra.mxu0 0
        %3101 = vmatprep.subr.bf16.mxu0 0
        %3102 = vmatpush2.bf16.xpose.msra.mxu0 0
        %3103 = vmatprep.subr.bf16.mxu0 0
        %3104 = vmatpush2.bf16.xpose.msra.mxu0 0
        %3105 = vmatprep.subr.bf16.mxu0 0
        %3106 = vmatpush2.bf16.xpose.msra.mxu0 0
        %3107 = vmatprep.subr.bf16.mxu0 0
        %3108 = vmatpush2.bf16.xpose.msra.mxu0 0
        %3109 = vmatprep.subr.bf16.mxu0 0
        %3110 = vmatpush2.bf16.xpose.msra.mxu0 0
        %3111 = vmatprep.mubr.bf16.mxu0 0
        %3112 = vmatmul.mubr.bf16.gmra.mxu0 %v3074
        %v3113 = vpop.f32.mrf.mxu0
        %v3114 = vadd.f32 0.0, %v3113
        %v3115 = vpop.f32.mrf.mxu0
        %v3116 = vpop.f32.mrf.mxu0
        %v3117 = vpop.f32.mrf.mxu0
        %3118 = vdwg.mxu0
        %v3119 = vsel %vm1439, %v3114, -inf
        %3120 = vmax.xlane.f32.xlu0 %v3119
        %v3121 = vpop.xlane.xlu0 %3120
        %v3122 = vsub.f32 %v3114, %v3121
        %v3123 = vmul.f32 %v3122, 1.442695
        %v3124 = vpow.pop %v3123
        %v3125 = vsel %vm1439, %v3124, 0.0
        %3126 = vadd.xlane.f32.xlu0 %v3125
        %v3127 = vpop.xlane.xlu0 %3126
        %v3128 = vrcp.pop %v3127
        %v3129 = vmul.f32 %v3124, %v3128
        %v3130 = vpack.c.bf16 %v3129, %v3129
        %3131 = vrot.lane.b32.xlu0 %v2739, 64
        %v3132 = vpop.permute.xlu0 %3131
        %v3134 = vsel %vm1439, %v3130, 0
        %v3137 = vsel %vm1455, %v3132, 0
        %3139 = vmatprep.subr.bf16.mxu0 0
        %3140 = vmatpush1.bf16.msra.mxu0 0
        %3141 = vmatprep.subr.bf16.mxu0 0
        %3142 = vmatpush1.bf16.msra.mxu0 0
        %3143 = vmatprep.subr.bf16.mxu0 0
        %3144 = vmatpush1.bf16.msra.mxu0 0
        %3145 = vmatprep.subr.bf16.mxu0 0
        %3146 = vmatpush1.bf16.msra.mxu0 0
        %3147 = vmatprep.subr.bf16.mxu0 0
        %3148 = vmatpush1.bf16.msra.mxu0 0
        %3149 = vmatprep.subr.bf16.mxu0 0
        %3150 = vmatpush1.bf16.msra.mxu0 0
        %3151 = vmatprep.subr.bf16.mxu0 0
        %3152 = vmatpush1.bf16.msra.mxu0 0
        %3153 = vmatprep.subr.bf16.mxu0 0
        %3154 = vmatpush1.bf16.msra.mxu0 %v3137
        %3155 = vmatprep.subr.bf16.mxu0 0
        %3156 = vmatpush2.bf16.msra.mxu0 0
        %3157 = vmatprep.subr.bf16.mxu0 0
        %3158 = vmatpush2.bf16.msra.mxu0 0
        %3159 = vmatprep.subr.bf16.mxu0 0
        %3160 = vmatpush2.bf16.msra.mxu0 0
        %3161 = vmatprep.subr.bf16.mxu0 0
        %3162 = vmatpush2.bf16.msra.mxu0 0
        %3163 = vmatprep.subr.bf16.mxu0 0
        %3164 = vmatpush2.bf16.msra.mxu0 0
        %3165 = vmatprep.subr.bf16.mxu0 0
        %3166 = vmatpush2.bf16.msra.mxu0 0
        %3167 = vmatprep.subr.bf16.mxu0 0
        %3168 = vmatpush2.bf16.msra.mxu0 0
        %3169 = vmatprep.subr.bf16.mxu0 0
        %3170 = vmatpush2.bf16.msra.mxu0 0
        %3171 = vmatprep.mubr.bf16.mxu0 0
        %3172 = vmatmul.mubr.bf16.gmra.mxu0 %v3134
        %v3173 = vpop.f32.mrf.mxu0
        %v3174 = vadd.f32 0.0, %v3173
        %v3175 = vpop.f32.mrf.mxu0
        %v3176 = vpop.f32.mrf.mxu0
        %v3177 = vpop.f32.mrf.mxu0
        %3178 = vdwg.mxu0
        %v3179 = vpack.c.bf16 %v3174, %v3174
        %v3184 = vunpack.c.l.b16 %v2729
        %v3185 = vunpack.c.l.b16 %v2730
        %v3186 = vunpack.c.l.b16 %v2731
        %v3187 = vunpack.c.l.b16 %v2732
        %v3188 = vpack.c.b16 %v3185, %v3184
        %v3189 = vpack.c.b16 %v3187, %v3186
        %v3193 = vsel %vm1392, %v3179, 0
        %3195 = vmatprep.subr.bf16.mxu0 0
        %3196 = vmatpush1.bf16.msra.mxu0 0
        %3197 = vmatprep.subr.bf16.mxu0 0
        %3198 = vmatpush1.bf16.msra.mxu0 0
        %3199 = vmatprep.subr.bf16.mxu0 0
        %3200 = vmatpush1.bf16.msra.mxu0 0
        %3201 = vmatprep.subr.bf16.mxu0 0
        %3202 = vmatpush1.bf16.msra.mxu0 0
        %3203 = vmatprep.subr.bf16.mxu0 0
        %3204 = vmatpush1.bf16.msra.mxu0 0
        %3205 = vmatprep.subr.bf16.mxu0 0
        %3206 = vmatpush1.bf16.msra.mxu0 0
        %3207 = vmatprep.subr.bf16.mxu0 0
        %3208 = vmatpush1.bf16.msra.mxu0 %v3189
        %3209 = vmatprep.subr.bf16.mxu0 0
        %3210 = vmatpush1.bf16.msra.mxu0 %v3188
        %3211 = vmatprep.subr.bf16.mxu0 0
        %3212 = vmatpush2.bf16.msra.mxu0 0
        %3213 = vmatprep.subr.bf16.mxu0 0
        %3214 = vmatpush2.bf16.msra.mxu0 0
        %3215 = vmatprep.subr.bf16.mxu0 0
        %3216 = vmatpush2.bf16.msra.mxu0 0
        %3217 = vmatprep.subr.bf16.mxu0 0
        %3218 = vmatpush2.bf16.msra.mxu0 0
        %3219 = vmatprep.subr.bf16.mxu0 0
        %3220 = vmatpush2.bf16.msra.mxu0 0
        %3221 = vmatprep.subr.bf16.mxu0 0
        %3222 = vmatpush2.bf16.msra.mxu0 0
        %3223 = vmatprep.subr.bf16.mxu0 0
        %3224 = vmatpush2.bf16.msra.mxu0 0
        %3225 = vmatprep.subr.bf16.mxu0 0
        %3226 = vmatpush2.bf16.msra.mxu0 0
        %3227 = vmatprep.mubr.bf16.mxu0 0
        %3228 = vmatmul.mubr.bf16.gmra.mxu0 %v3193
        %v3229 = vpop.f32.mrf.mxu0
        %v3230 = vadd.f32 0.0, %v3229
        %v3231 = vpop.f32.mrf.mxu0
        %v3232 = vpop.f32.mrf.mxu0
        %v3233 = vpop.f32.mrf.mxu0
        %3234 = vdwg.mxu0
        %v3235 = vadd.f32 %v3064, %v3230
        %3236 = vrot.lane.b32.xlu0 %v2737, 32
        %v3237 = vpop.permute.xlu0 %3236
        %3238 = vrot.lane.b32.xlu0 %v2738, 32
        %v3239 = vpop.permute.xlu0 %3238
        %v3241 = vsel %vm1392, %v3237, 0
        %v3244 = vsel %vm1392, %v3239, 0
        %3246 = vmatprep.subr.bf16.mxu0 0
        %3247 = vmatpush1.bf16.xpose.msra.mxu0 0
        %3248 = vmatprep.subr.bf16.mxu0 0
        %3249 = vmatpush1.bf16.xpose.msra.mxu0 0
        %3250 = vmatprep.subr.bf16.mxu0 0
        %3251 = vmatpush1.bf16.xpose.msra.mxu0 0
        %3252 = vmatprep.subr.bf16.mxu0 0
        %3253 = vmatpush1.bf16.xpose.msra.mxu0 0
        %3254 = vmatprep.subr.bf16.mxu0 0
        %3255 = vmatpush1.bf16.xpose.msra.mxu0 0
        %3256 = vmatprep.subr.bf16.mxu0 0
        %3257 = vmatpush1.bf16.xpose.msra.mxu0 0
        %3258 = vmatprep.subr.bf16.mxu0 0
        %3259 = vmatpush1.bf16.xpose.msra.mxu0 0
        %3260 = vmatprep.subr.bf16.mxu0 0
        %3261 = vmatpush1.bf16.xpose.msra.mxu0 %v3244
        %3262 = vmatprep.subr.bf16.mxu0 0
        %3263 = vmatpush2.bf16.xpose.msra.mxu0 0
        %3264 = vmatprep.subr.bf16.mxu0 0
        %3265 = vmatpush2.bf16.xpose.msra.mxu0 0
        %3266 = vmatprep.subr.bf16.mxu0 0
        %3267 = vmatpush2.bf16.xpose.msra.mxu0 0
        %3268 = vmatprep.subr.bf16.mxu0 0
        %3269 = vmatpush2.bf16.xpose.msra.mxu0 0
        %3270 = vmatprep.subr.bf16.mxu0 0
        %3271 = vmatpush2.bf16.xpose.msra.mxu0 0
        %3272 = vmatprep.subr.bf16.mxu0 0
        %3273 = vmatpush2.bf16.xpose.msra.mxu0 0
        %3274 = vmatprep.subr.bf16.mxu0 0
        %3275 = vmatpush2.bf16.xpose.msra.mxu0 0
        %3276 = vmatprep.subr.bf16.mxu0 0
        %3277 = vmatpush2.bf16.xpose.msra.mxu0 0
        %3278 = vmatprep.mubr.bf16.mxu0 0
        %3279 = vmatmul.mubr.bf16.gmra.mxu0 %v3241
        %v3280 = vpop.f32.mrf.mxu0
        %v3281 = vadd.f32 0.0, %v3280
        %v3282 = vpop.f32.mrf.mxu0
        %v3283 = vpop.f32.mrf.mxu0
        %v3284 = vpop.f32.mrf.mxu0
        %3285 = vdwg.mxu0
        %v3286 = vsel %vm1439, %v3281, -inf
        %3287 = vmax.xlane.f32.xlu0 %v3286
        %v3288 = vpop.xlane.xlu0 %3287
        %v3289 = vsub.f32 %v3281, %v3288
        %v3290 = vmul.f32 %v3289, 1.442695
        %v3291 = vpow.pop %v3290
        %v3292 = vsel %vm1439, %v3291, 0.0
        %3293 = vadd.xlane.f32.xlu0 %v3292
        %v3294 = vpop.xlane.xlu0 %3293
        %v3295 = vrcp.pop %v3294
        %v3296 = vmul.f32 %v3291, %v3295
        %v3297 = vpack.c.bf16 %v3296, %v3296
        %3298 = vrot.lane.b32.xlu0 %v2739, 32
        %v3299 = vpop.permute.xlu0 %3298
        %v3301 = vsel %vm1439, %v3297, 0
        %v3304 = vsel %vm1455, %v3299, 0
        %3306 = vmatprep.subr.bf16.mxu0 0
        %3307 = vmatpush1.bf16.msra.mxu0 0
        %3308 = vmatprep.subr.bf16.mxu0 0
        %3309 = vmatpush1.bf16.msra.mxu0 0
        %3310 = vmatprep.subr.bf16.mxu0 0
        %3311 = vmatpush1.bf16.msra.mxu0 0
        %3312 = vmatprep.subr.bf16.mxu0 0
        %3313 = vmatpush1.bf16.msra.mxu0 0
        %3314 = vmatprep.subr.bf16.mxu0 0
        %3315 = vmatpush1.bf16.msra.mxu0 0
        %3316 = vmatprep.subr.bf16.mxu0 0
        %3317 = vmatpush1.bf16.msra.mxu0 0
        %3318 = vmatprep.subr.bf16.mxu0 0
        %3319 = vmatpush1.bf16.msra.mxu0 0
        %3320 = vmatprep.subr.bf16.mxu0 0
        %3321 = vmatpush1.bf16.msra.mxu0 %v3304
        %3322 = vmatprep.subr.bf16.mxu0 0
        %3323 = vmatpush2.bf16.msra.mxu0 0
        %3324 = vmatprep.subr.bf16.mxu0 0
        %3325 = vmatpush2.bf16.msra.mxu0 0
        %3326 = vmatprep.subr.bf16.mxu0 0
        %3327 = vmatpush2.bf16.msra.mxu0 0
        %3328 = vmatprep.subr.bf16.mxu0 0
        %3329 = vmatpush2.bf16.msra.mxu0 0
        %3330 = vmatprep.subr.bf16.mxu0 0
        %3331 = vmatpush2.bf16.msra.mxu0 0
        %3332 = vmatprep.subr.bf16.mxu0 0
        %3333 = vmatpush2.bf16.msra.mxu0 0
        %3334 = vmatprep.subr.bf16.mxu0 0
        %3335 = vmatpush2.bf16.msra.mxu0 0
        %3336 = vmatprep.subr.bf16.mxu0 0
        %3337 = vmatpush2.bf16.msra.mxu0 0
        %3338 = vmatprep.mubr.bf16.mxu0 0
        %3339 = vmatmul.mubr.bf16.gmra.mxu0 %v3301
        %v3340 = vpop.f32.mrf.mxu0
        %v3341 = vadd.f32 0.0, %v3340
        %v3342 = vpop.f32.mrf.mxu0
        %v3343 = vpop.f32.mrf.mxu0
        %v3344 = vpop.f32.mrf.mxu0
        %3345 = vdwg.mxu0
        %v3346 = vpack.c.bf16 %v3341, %v3341
        %v3351 = vunpack.c.l.b16 %v2733
        %v3352 = vunpack.c.l.b16 %v2734
        %v3353 = vunpack.c.l.b16 %v2735
        %v3354 = vunpack.c.l.b16 %v2736
        %v3355 = vpack.c.b16 %v3352, %v3351
        %v3356 = vpack.c.b16 %v3354, %v3353
        %v3360 = vsel %vm1392, %v3346, 0
        %3362 = vmatprep.subr.bf16.mxu0 0
        %3363 = vmatpush1.bf16.msra.mxu0 0
        %3364 = vmatprep.subr.bf16.mxu0 0
        %3365 = vmatpush1.bf16.msra.mxu0 0
        %3366 = vmatprep.subr.bf16.mxu0 0
        %3367 = vmatpush1.bf16.msra.mxu0 0
        %3368 = vmatprep.subr.bf16.mxu0 0
        %3369 = vmatpush1.bf16.msra.mxu0 0
        %3370 = vmatprep.subr.bf16.mxu0 0
        %3371 = vmatpush1.bf16.msra.mxu0 0
        %3372 = vmatprep.subr.bf16.mxu0 0
        %3373 = vmatpush1.bf16.msra.mxu0 0
        %3374 = vmatprep.subr.bf16.mxu0 0
        %3375 = vmatpush1.bf16.msra.mxu0 %v3356
        %3376 = vmatprep.subr.bf16.mxu0 0
        %3377 = vmatpush1.bf16.msra.mxu0 %v3355
        %3378 = vmatprep.subr.bf16.mxu0 0
        %3379 = vmatpush2.bf16.msra.mxu0 0
        %3380 = vmatprep.subr.bf16.mxu0 0
        %3381 = vmatpush2.bf16.msra.mxu0 0
        %3382 = vmatprep.subr.bf16.mxu0 0
        %3383 = vmatpush2.bf16.msra.mxu0 0
        %3384 = vmatprep.subr.bf16.mxu0 0
        %3385 = vmatpush2.bf16.msra.mxu0 0
        %3386 = vmatprep.subr.bf16.mxu0 0
        %3387 = vmatpush2.bf16.msra.mxu0 0
        %3388 = vmatprep.subr.bf16.mxu0 0
        %3389 = vmatpush2.bf16.msra.mxu0 0
        %3390 = vmatprep.subr.bf16.mxu0 0
        %3391 = vmatpush2.bf16.msra.mxu0 0
        %3392 = vmatprep.subr.bf16.mxu0 0
        %3393 = vmatpush2.bf16.msra.mxu0 0
        %3394 = vmatprep.mubr.bf16.mxu0 0
        %3395 = vmatmul.mubr.bf16.gmra.mxu0 %v3360
        %v3396 = vpop.f32.mrf.mxu0
        %v3397 = vadd.f32 0.0, %v3396
        %v3398 = vpop.f32.mrf.mxu0
        %v3399 = vpop.f32.mrf.mxu0
        %v3400 = vpop.f32.mrf.mxu0
        %3401 = vdwg.mxu0
        %v3402 = vadd.f32 %v3235, %v3397
        %s3403 = scalar_lea.vmem %s8, 1
        %v3404 = vld [vmem:[%s3403] sm:$0x1]
        %v3406 = vlaneseq
        %v3407 = vshrl.u32 %v3406, 7
        %v3408 = vsub.s32 0, %v3407
        %v3409 = vrot.slane %v3404, %v3408
        %v3411 = vadd.f32 %v3402, %v3409
        %v3412 = vadd.f32 %v2458, %v3411
        %s3413 = scalar_lea.vmem %s13, 1
        %v3414 = vld [vmem:[%s3413] sm:$0x1]
        %s3415 = scalar_lea.vmem %s14, 1
        %v3416 = vld [vmem:[%s3415] sm:$0x1]
        %3417 = vadd.xlane.f32.xlu0 %v3412
        %v3418 = vpop.xlane.xlu0 %3417
        %v3419 = vmul.f32 %v3418, %v1090
        %v3420 = vsub.f32 %v3412, %v3419
        %v3421 = vmul.f32 %v3420, %v3420
        %3422 = vadd.xlane.f32.xlu0 %v3421
        %v3423 = vpop.xlane.xlu0 %3422
        %v3424 = vmul.f32 %v3423, %v1090
        %v3425 = vadd.f32 %v3424, 1e-12
        %v3426 = vrsqrt.pop %v3425
        %v3427 = vmul.f32 %v3420, %v3426
        %v3429 = vlaneseq
        %v3430 = vshrl.u32 %v3429, 7
        %v3431 = vsub.s32 0, %v3430
        %v3432 = vrot.slane %v3414, %v3431
        %v3434 = vmul.f32 %v3427, %v3432
        %v3436 = vlaneseq
        %v3437 = vshrl.u32 %v3436, 7
        %v3438 = vsub.s32 0, %v3437
        %v3439 = vrot.slane %v3416, %v3438
        %v3441 = vadd.f32 %v3434, %v3439
        %v3442 = vpack.c.bf16 %v3441, %v3441
        %s3443 = scalar_lea.vmem [#allocation10], 128
        %v3444 = vld [vmem:[%s3443] sm:$0xff]
        %v3445 = vld [vmem:[%s3443 + $0x8] sm:$0xff]
        %v3446 = vld [vmem:[%s3443 + $0x10] sm:$0xff]
        %v3447 = vld [vmem:[%s3443 + $0x18] sm:$0xff]
        %v3448 = vld [vmem:[%s3443 + $0x20] sm:$0xff]
        %v3449 = vld [vmem:[%s3443 + $0x28] sm:$0xff]
        %v3450 = vld [vmem:[%s3443 + $0x30] sm:$0xff]
        %v3451 = vld [vmem:[%s3443 + $0x38] sm:$0xff]
        %v3452 = vld [vmem:[%s3443 + $0x40] sm:$0xff]
        %v3453 = vld [vmem:[%s3443 + $0x48] sm:$0xff]
        %v3454 = vld [vmem:[%s3443 + $0x50] sm:$0xff]
        %v3455 = vld [vmem:[%s3443 + $0x58] sm:$0xff]
        %v3456 = vld [vmem:[%s3443 + $0x60] sm:$0xff]
        %v3457 = vld [vmem:[%s3443 + $0x68] sm:$0xff]
        %v3458 = vld [vmem:[%s3443 + $0x70] sm:$0xff]
        %v3459 = vld [vmem:[%s3443 + $0x78] sm:$0xff]
        %s3460 = scalar_lea.vmem %s10, 2
        %v3461 = vld [vmem:[%s3460] sm:$0x3]
        %v3463 = vlaneseq
        %v3464 = vshrl.u32 %v3463, 7
        %v3465 = vsub.s32 0, %v3464
        %v3466 = vrot.slane %v3461, %v3465
        %v3467 = vlaneseq
        %v3468 = vshrl.u32 %v3467, 7
        %v3469 = vsub.s32 1, %v3468
        %v3470 = vrot.slane %v3461, %v3469
        %v3489 = vunpack.c.l.b16 %v3444
        %v3490 = vunpack.c.h.b16 %v3444
        %v3491 = vunpack.c.l.b16 %v3445
        %v3492 = vunpack.c.h.b16 %v3445
        %v3493 = vunpack.c.l.b16 %v3446
        %v3494 = vunpack.c.h.b16 %v3446
        %v3495 = vunpack.c.l.b16 %v3447
        %v3496 = vunpack.c.h.b16 %v3447
        %v3497 = vunpack.c.l.b16 %v3448
        %v3498 = vunpack.c.h.b16 %v3448
        %v3499 = vunpack.c.l.b16 %v3449
        %v3500 = vunpack.c.h.b16 %v3449
        %v3501 = vunpack.c.l.b16 %v3450
        %v3502 = vunpack.c.h.b16 %v3450
        %v3503 = vunpack.c.l.b16 %v3451
        %v3504 = vunpack.c.h.b16 %v3451
        %v3505 = vunpack.c.l.b16 %v3452
        %v3506 = vunpack.c.h.b16 %v3452
        %v3507 = vunpack.c.l.b16 %v3453
        %v3508 = vunpack.c.h.b16 %v3453
        %v3509 = vunpack.c.l.b16 %v3454
        %v3510 = vunpack.c.h.b16 %v3454
        %v3511 = vunpack.c.l.b16 %v3455
        %v3512 = vunpack.c.h.b16 %v3455
        %v3513 = vunpack.c.l.b16 %v3456
        %v3514 = vunpack.c.h.b16 %v3456
        %v3515 = vunpack.c.l.b16 %v3457
        %v3516 = vunpack.c.h.b16 %v3457
        %v3517 = vunpack.c.l.b16 %v3458
        %v3518 = vunpack.c.h.b16 %v3458
        %v3519 = vunpack.c.l.b16 %v3459
        %v3520 = vunpack.c.h.b16 %v3459
        %v3521 = vpack.c.b16 %v3491, %v3489
        %v3522 = vpack.c.b16 %v3492, %v3490
        %v3523 = vpack.c.b16 %v3495, %v3493
        %v3524 = vpack.c.b16 %v3496, %v3494
        %v3525 = vpack.c.b16 %v3499, %v3497
        %v3526 = vpack.c.b16 %v3500, %v3498
        %v3527 = vpack.c.b16 %v3503, %v3501
        %v3528 = vpack.c.b16 %v3504, %v3502
        %v3529 = vpack.c.b16 %v3507, %v3505
        %v3530 = vpack.c.b16 %v3508, %v3506
        %v3531 = vpack.c.b16 %v3511, %v3509
        %v3532 = vpack.c.b16 %v3512, %v3510
        %v3533 = vpack.c.b16 %v3515, %v3513
        %v3534 = vpack.c.b16 %v3516, %v3514
        %v3535 = vpack.c.b16 %v3519, %v3517
        %v3536 = vpack.c.b16 %v3520, %v3518
        %3553 = vmatprep.subr.bf16.mxu0 %v3536
        %3554 = vmatpush1.bf16.msra.mxu0 %v3535
        %3555 = vmatprep.subr.bf16.mxu0 %v3534
        %3556 = vmatpush1.bf16.msra.mxu0 %v3533
        %3557 = vmatprep.subr.bf16.mxu0 %v3532
        %3558 = vmatpush1.bf16.msra.mxu0 %v3531
        %3559 = vmatprep.subr.bf16.mxu0 %v3530
        %3560 = vmatpush1.bf16.msra.mxu0 %v3529
        %3561 = vmatprep.subr.bf16.mxu0 %v3528
        %3562 = vmatpush1.bf16.msra.mxu0 %v3527
        %3563 = vmatprep.subr.bf16.mxu0 %v3526
        %3564 = vmatpush1.bf16.msra.mxu0 %v3525
        %3565 = vmatprep.subr.bf16.mxu0 %v3524
        %3566 = vmatpush1.bf16.msra.mxu0 %v3523
        %3567 = vmatprep.subr.bf16.mxu0 %v3522
        %3568 = vmatpush1.bf16.msra.mxu0 %v3521
        %3569 = vmatprep.subr.bf16.mxu0 0
        %3570 = vmatpush2.bf16.msra.mxu0 0
        %3571 = vmatprep.subr.bf16.mxu0 0
        %3572 = vmatpush2.bf16.msra.mxu0 0
        %3573 = vmatprep.subr.bf16.mxu0 0
        %3574 = vmatpush2.bf16.msra.mxu0 0
        %3575 = vmatprep.subr.bf16.mxu0 0
        %3576 = vmatpush2.bf16.msra.mxu0 0
        %3577 = vmatprep.subr.bf16.mxu0 0
        %3578 = vmatpush2.bf16.msra.mxu0 0
        %3579 = vmatprep.subr.bf16.mxu0 0
        %3580 = vmatpush2.bf16.msra.mxu0 0
        %3581 = vmatprep.subr.bf16.mxu0 0
        %3582 = vmatpush2.bf16.msra.mxu0 0
        %3583 = vmatprep.subr.bf16.mxu0 0
        %3584 = vmatpush2.bf16.msra.mxu0 0
        %3585 = vmatprep.mubr.bf16.mxu0 0
        %3586 = vmatmul.mubr.bf16.gmra.mxu0 %v3442
        %v3587 = vpop.f32.mrf.mxu0
        %v3588 = vadd.f32 %v3466, %v3587
        %v3589 = vpop.f32.mrf.mxu0
        %v3590 = vadd.f32 %v3470, %v3589
        %v3591 = vpop.f32.mrf.mxu0
        %v3592 = vpop.f32.mrf.mxu0
        %3593 = vdwg.mxu0
        %v3594 = vmul.f32 %v3588, 0.5
        %v3595 = vmul.f32 %v3590, 0.5
        %v3596 = vmul.f32 %v3588, 0.70710677
        %v3597 = vmul.f32 %v3590, 0.70710677
        %v3598 = verf.f32.pop %v3596
        %v3599 = verf.f32.pop %v3597
        %v3600 = vadd.f32 %v3598, 1.0
        %v3601 = vadd.f32 %v3599, 1.0
        %v3602 = vmul.f32 %v3594, %v3600
        %v3603 = vmul.f32 %v3595, %v3601
        %v3604 = vpack.c.bf16 %v3602, %v3602
        %v3605 = vpack.c.bf16 %v3603, %v3603
        %s3606 = scalar_lea.vmem [#allocation12], 128
        %v3607 = vld [vmem:[%s3606] sm:$0xf]
        %v3608 = vld [vmem:[%s3606 + $0x4] sm:$0xf]
        %v3609 = vld [vmem:[%s3606 + $0x8] sm:$0xf]
        %v3610 = vld [vmem:[%s3606 + $0xc] sm:$0xf]
        %v3611 = vld [vmem:[%s3606 + $0x10] sm:$0xf]
        %v3612 = vld [vmem:[%s3606 + $0x14] sm:$0xf]
        %v3613 = vld [vmem:[%s3606 + $0x18] sm:$0xf]
        %v3614 = vld [vmem:[%s3606 + $0x1c] sm:$0xf]
        %v3615 = vld [vmem:[%s3606 + $0x20] sm:$0xf]
        %v3616 = vld [vmem:[%s3606 + $0x24] sm:$0xf]
        %v3617 = vld [vmem:[%s3606 + $0x28] sm:$0xf]
        %v3618 = vld [vmem:[%s3606 + $0x2c] sm:$0xf]
        %v3619 = vld [vmem:[%s3606 + $0x30] sm:$0xf]
        %v3620 = vld [vmem:[%s3606 + $0x34] sm:$0xf]
        %v3621 = vld [vmem:[%s3606 + $0x38] sm:$0xf]
        %v3622 = vld [vmem:[%s3606 + $0x3c] sm:$0xf]
        %v3623 = vld [vmem:[%s3606 + $0x40] sm:$0xf]
        %v3624 = vld [vmem:[%s3606 + $0x44] sm:$0xf]
        %v3625 = vld [vmem:[%s3606 + $0x48] sm:$0xf]
        %v3626 = vld [vmem:[%s3606 + $0x4c] sm:$0xf]
        %v3627 = vld [vmem:[%s3606 + $0x50] sm:$0xf]
        %v3628 = vld [vmem:[%s3606 + $0x54] sm:$0xf]
        %v3629 = vld [vmem:[%s3606 + $0x58] sm:$0xf]
        %v3630 = vld [vmem:[%s3606 + $0x5c] sm:$0xf]
        %v3631 = vld [vmem:[%s3606 + $0x60] sm:$0xf]
        %v3632 = vld [vmem:[%s3606 + $0x64] sm:$0xf]
        %v3633 = vld [vmem:[%s3606 + $0x68] sm:$0xf]
        %v3634 = vld [vmem:[%s3606 + $0x6c] sm:$0xf]
        %v3635 = vld [vmem:[%s3606 + $0x70] sm:$0xf]
        %v3636 = vld [vmem:[%s3606 + $0x74] sm:$0xf]
        %v3637 = vld [vmem:[%s3606 + $0x78] sm:$0xf]
        %v3638 = vld [vmem:[%s3606 + $0x7c] sm:$0xf]
        %s3639 = scalar_lea.vmem %s12, 1
        %v3640 = vld [vmem:[%s3639] sm:$0x1]
        %v3642 = vlaneseq
        %v3643 = vshrl.u32 %v3642, 7
        %v3644 = vsub.s32 0, %v3643
        %v3645 = vrot.slane %v3640, %v3644
        %v3679 = vunpack.c.l.b16 %v3607
        %v3680 = vunpack.c.l.b16 %v3608
        %v3681 = vunpack.c.l.b16 %v3609
        %v3682 = vunpack.c.l.b16 %v3610
        %v3683 = vunpack.c.l.b16 %v3611
        %v3684 = vunpack.c.l.b16 %v3612
        %v3685 = vunpack.c.l.b16 %v3613
        %v3686 = vunpack.c.l.b16 %v3614
        %v3687 = vunpack.c.l.b16 %v3615
        %v3688 = vunpack.c.l.b16 %v3616
        %v3689 = vunpack.c.l.b16 %v3617
        %v3690 = vunpack.c.l.b16 %v3618
        %v3691 = vunpack.c.l.b16 %v3619
        %v3692 = vunpack.c.l.b16 %v3620
        %v3693 = vunpack.c.l.b16 %v3621
        %v3694 = vunpack.c.l.b16 %v3622
        %v3695 = vunpack.c.l.b16 %v3623
        %v3696 = vunpack.c.l.b16 %v3624
        %v3697 = vunpack.c.l.b16 %v3625
        %v3698 = vunpack.c.l.b16 %v3626
        %v3699 = vunpack.c.l.b16 %v3627
        %v3700 = vunpack.c.l.b16 %v3628
        %v3701 = vunpack.c.l.b16 %v3629
        %v3702 = vunpack.c.l.b16 %v3630
        %v3703 = vunpack.c.l.b16 %v3631
        %v3704 = vunpack.c.l.b16 %v3632
        %v3705 = vunpack.c.l.b16 %v3633
        %v3706 = vunpack.c.l.b16 %v3634
        %v3707 = vunpack.c.l.b16 %v3635
        %v3708 = vunpack.c.l.b16 %v3636
        %v3709 = vunpack.c.l.b16 %v3637
        %v3710 = vunpack.c.l.b16 %v3638
        %v3711 = vpack.c.b16 %v3680, %v3679
        %v3712 = vpack.c.b16 %v3682, %v3681
        %v3713 = vpack.c.b16 %v3684, %v3683
        %v3714 = vpack.c.b16 %v3686, %v3685
        %v3715 = vpack.c.b16 %v3688, %v3687
        %v3716 = vpack.c.b16 %v3690, %v3689
        %v3717 = vpack.c.b16 %v3692, %v3691
        %v3718 = vpack.c.b16 %v3694, %v3693
        %v3719 = vpack.c.b16 %v3696, %v3695
        %v3720 = vpack.c.b16 %v3698, %v3697
        %v3721 = vpack.c.b16 %v3700, %v3699
        %v3722 = vpack.c.b16 %v3702, %v3701
        %v3723 = vpack.c.b16 %v3704, %v3703
        %v3724 = vpack.c.b16 %v3706, %v3705
        %v3725 = vpack.c.b16 %v3708, %v3707
        %v3726 = vpack.c.b16 %v3710, %v3709
        %3743 = vmatprep.subr.bf16.mxu0 0
        %3744 = vmatpush1.bf16.msra.mxu0 %v3718
        %3745 = vmatprep.subr.bf16.mxu0 0
        %3746 = vmatpush1.bf16.msra.mxu0 %v3717
        %3747 = vmatprep.subr.bf16.mxu0 0
        %3748 = vmatpush1.bf16.msra.mxu0 %v3716
        %3749 = vmatprep.subr.bf16.mxu0 0
        %3750 = vmatpush1.bf16.msra.mxu0 %v3715
        %3751 = vmatprep.subr.bf16.mxu0 0
        %3752 = vmatpush1.bf16.msra.mxu0 %v3714
        %3753 = vmatprep.subr.bf16.mxu0 0
        %3754 = vmatpush1.bf16.msra.mxu0 %v3713
        %3755 = vmatprep.subr.bf16.mxu0 0
        %3756 = vmatpush1.bf16.msra.mxu0 %v3712
        %3757 = vmatprep.subr.bf16.mxu0 0
        %3758 = vmatpush1.bf16.msra.mxu0 %v3711
        %3759 = vmatprep.subr.bf16.mxu0 0
        %3760 = vmatpush2.bf16.msra.mxu0 %v3726
        %3761 = vmatprep.subr.bf16.mxu0 0
        %3762 = vmatpush2.bf16.msra.mxu0 %v3725
        %3763 = vmatprep.subr.bf16.mxu0 0
        %3764 = vmatpush2.bf16.msra.mxu0 %v3724
        %3765 = vmatprep.subr.bf16.mxu0 0
        %3766 = vmatpush2.bf16.msra.mxu0 %v3723
        %3767 = vmatprep.subr.bf16.mxu0 0
        %3768 = vmatpush2.bf16.msra.mxu0 %v3722
        %3769 = vmatprep.subr.bf16.mxu0 0
        %3770 = vmatpush2.bf16.msra.mxu0 %v3721
        %3771 = vmatprep.subr.bf16.mxu0 0
        %3772 = vmatpush2.bf16.msra.mxu0 %v3720
        %3773 = vmatprep.subr.bf16.mxu0 0
        %3774 = vmatpush2.bf16.msra.mxu0 %v3719
        %3775 = vmatprep.mubr.bf16.mxu0 %v3605
        %3776 = vmatmul.mubr.bf16.gmra.mxu0 %v3604
        %v3777 = vpop.f32.mrf.mxu0
        %v3778 = vadd.f32 %v3645, %v3777
        %v3779 = vpop.f32.mrf.mxu0
        %v3780 = vpop.f32.mrf.mxu0
        %v3781 = vpop.f32.mrf.mxu0
        %3782 = vdwg.mxu0
        %v3783 = vadd.f32 %v3441, %v3778
        %s3784 = scalar_lea.vmem %s15, 1
        %v3785 = vld [vmem:[%s3784] sm:$0x1]
        %s3786 = scalar_lea.vmem %s16, 1
        %v3787 = vld [vmem:[%s3786] sm:$0x1]
        %3788 = vadd.xlane.f32.xlu0 %v3783
        %v3789 = vpop.xlane.xlu0 %3788
        %v3790 = vmul.f32 %v3789, %v1090
        %v3791 = vsub.f32 %v3783, %v3790
        %v3792 = vmul.f32 %v3791, %v3791
        %3793 = vadd.xlane.f32.xlu0 %v3792
        %v3794 = vpop.xlane.xlu0 %3793
        %v3795 = vmul.f32 %v3794, %v1090
        %v3796 = vadd.f32 %v3795, 1e-12
        %v3797 = vrsqrt.pop %v3796
        %v3798 = vmul.f32 %v3791, %v3797
        %v3800 = vlaneseq
        %v3801 = vshrl.u32 %v3800, 7
        %v3802 = vsub.s32 0, %v3801
        %v3803 = vrot.slane %v3785, %v3802
        %v3805 = vmul.f32 %v3798, %v3803
        %v3807 = vlaneseq
        %v3808 = vshrl.u32 %v3807, 7
        %v3809 = vsub.s32 0, %v3808
        %v3810 = vrot.slane %v3787, %v3809
        %v3812 = vadd.f32 %v3805, %v3810
        %v3813 = vpack.c.bf16 %v3812, %v3812
        %v3814 = vld [vmem:[#allocation13] sm:$0xf]
        %v3815 = vld [vmem:[#allocation13 + $0x4] sm:$0xf]
        %v3816 = vld [vmem:[#allocation13 + $0x8] sm:$0xf]
        %v3817 = vld [vmem:[#allocation13 + $0xc] sm:$0xf]
        %v3818 = vld [vmem:[#allocation13 + $0x10] sm:$0xf]
        %v3819 = vld [vmem:[#allocation13 + $0x14] sm:$0xf]
        %v3820 = vld [vmem:[#allocation13 + $0x18] sm:$0xf]
        %v3821 = vld [vmem:[#allocation13 + $0x1c] sm:$0xf]
        %v3822 = vld [vmem:[#allocation13 + $0x20] sm:$0xf]
        %v3823 = vld [vmem:[#allocation13 + $0x24] sm:$0xf]
        %v3824 = vld [vmem:[#allocation13 + $0x28] sm:$0xf]
        %v3825 = vld [vmem:[#allocation13 + $0x2c] sm:$0xf]
        %v3826 = vld [vmem:[#allocation13 + $0x30] sm:$0xf]
        %v3827 = vld [vmem:[#allocation13 + $0x34] sm:$0xf]
        %v3828 = vld [vmem:[#allocation13 + $0x38] sm:$0xf]
        %v3829 = vld [vmem:[#allocation13 + $0x3c] sm:$0xf]
        %v3830 = vld [vmem:[#allocation15] sm:$0x1]
        %v3832 = vlaneseq
        %v3833 = vshrl.u32 %v3832, 7
        %v3834 = vsub.s32 0, %v3833
        %v3835 = vrot.slane %v3830, %v3834
        %v3853 = vunpack.c.l.b16 %v3814
        %v3854 = vunpack.c.l.b16 %v3815
        %v3855 = vunpack.c.l.b16 %v3816
        %v3856 = vunpack.c.l.b16 %v3817
        %v3857 = vunpack.c.l.b16 %v3818
        %v3858 = vunpack.c.l.b16 %v3819
        %v3859 = vunpack.c.l.b16 %v3820
        %v3860 = vunpack.c.l.b16 %v3821
        %v3861 = vunpack.c.l.b16 %v3822
        %v3862 = vunpack.c.l.b16 %v3823
        %v3863 = vunpack.c.l.b16 %v3824
        %v3864 = vunpack.c.l.b16 %v3825
        %v3865 = vunpack.c.l.b16 %v3826
        %v3866 = vunpack.c.l.b16 %v3827
        %v3867 = vunpack.c.l.b16 %v3828
        %v3868 = vunpack.c.l.b16 %v3829
        %v3869 = vpack.c.b16 %v3854, %v3853
        %v3870 = vpack.c.b16 %v3856, %v3855
        %v3871 = vpack.c.b16 %v3858, %v3857
        %v3872 = vpack.c.b16 %v3860, %v3859
        %v3873 = vpack.c.b16 %v3862, %v3861
        %v3874 = vpack.c.b16 %v3864, %v3863
        %v3875 = vpack.c.b16 %v3866, %v3865
        %v3876 = vpack.c.b16 %v3868, %v3867
        %3885 = vmatprep.subr.bf16.mxu0 0
        %3886 = vmatpush1.bf16.msra.mxu0 %v3876
        %3887 = vmatprep.subr.bf16.mxu0 0
        %3888 = vmatpush1.bf16.msra.mxu0 %v3875
        %3889 = vmatprep.subr.bf16.mxu0 0
        %3890 = vmatpush1.bf16.msra.mxu0 %v3874
        %3891 = vmatprep.subr.bf16.mxu0 0
        %3892 = vmatpush1.bf16.msra.mxu0 %v3873
        %3893 = vmatprep.subr.bf16.mxu0 0
        %3894 = vmatpush1.bf16.msra.mxu0 %v3872
        %3895 = vmatprep.subr.bf16.mxu0 0
        %3896 = vmatpush1.bf16.msra.mxu0 %v3871
        %3897 = vmatprep.subr.bf16.mxu0 0
        %3898 = vmatpush1.bf16.msra.mxu0 %v3870
        %3899 = vmatprep.subr.bf16.mxu0 0
        %3900 = vmatpush1.bf16.msra.mxu0 %v3869
        %3901 = vmatprep.subr.bf16.mxu0 0
        %3902 = vmatpush2.bf16.msra.mxu0 0
        %3903 = vmatprep.subr.bf16.mxu0 0
        %3904 = vmatpush2.bf16.msra.mxu0 0
        %3905 = vmatprep.subr.bf16.mxu0 0
        %3906 = vmatpush2.bf16.msra.mxu0 0
        %3907 = vmatprep.subr.bf16.mxu0 0
        %3908 = vmatpush2.bf16.msra.mxu0 0
        %3909 = vmatprep.subr.bf16.mxu0 0
        %3910 = vmatpush2.bf16.msra.mxu0 0
        %3911 = vmatprep.subr.bf16.mxu0 0
        %3912 = vmatpush2.bf16.msra.mxu0 0
        %3913 = vmatprep.subr.bf16.mxu0 0
        %3914 = vmatpush2.bf16.msra.mxu0 0
        %3915 = vmatprep.subr.bf16.mxu0 0
        %3916 = vmatpush2.bf16.msra.mxu0 0
        %3917 = vmatprep.mubr.bf16.mxu0 0
        %3918 = vmatmul.mubr.bf16.gmra.mxu0 %v3813
        %v3919 = vpop.f32.mrf.mxu0
        %v3920 = vadd.f32 %v3835, %v3919
        %v3921 = vpop.f32.mrf.mxu0
        %v3922 = vpop.f32.mrf.mxu0
        %v3923 = vpop.f32.mrf.mxu0
        %3924 = vdwg.mxu0
        %3925 = vst [vmem:[%s722] sm:$0xff] %v3920
        %p3926 = scmp.lt.s32.totalorder %s35, 1
        %s3927 = scalar_select %p3926, %s35, 1
        %s3928 = smul.addr %s3927, 8
        %s3929 = scalar_lea.vmem %s19, %s3928
        // Predicated region
        $region133: #{bert_ner_forward.1} parent=95 // pred_check
          %p3930 = pneg %p457
        $region134: #{bert_ner_forward.1} parent=95 // pred_check_branch
          %3932 = sbr.rel (%p3930) target = $region136
        $region135: #{bert_ner_forward.1} parent=95 // pred_region
          _
        $region136: #{bert_ner_forward.1} parent=95 // pred_fallthru
          _
      $region96: #{bert_ner_forward.1} parent=5 // pred_fallthru
        _
      %p3933 = scmp.le.s32.totalorder 2, %s30
      // Predicated region
      $region137: #{bert_ner_forward.1} parent=5 // pred_check
        %p3934 = pneg %p3933
      $region138: #{bert_ner_forward.1} parent=5 // pred_check_branch
        %3936 = sbr.rel (%p3934) target = $region140
      $region139: #{bert_ner_forward.1} parent=5 // pred_region
        %s3937 = ssub.s32 %s30, 2
        // Predicated region
        $region141: #{bert_ner_forward.1} parent=139 // pred_check
          %p3938 = pneg %p463
        $region142: #{bert_ner_forward.1} parent=139 // pred_check_branch
          %3940 = sbr.rel (%p3938) target = $region144
        $region143: #{bert_ner_forward.1} parent=139 // pred_region
          %p3941 = scmp.lt.s32.totalorder %s36, 1
          %s3942 = scalar_select %p3941, %s36, 1
          %s3943 = smul.addr %s3942, 8
          %s3944 = scalar_lea.vmem %s19, %s3943
        $region144: #{bert_ner_forward.1} parent=139 // pred_fallthru
          _
      $region140: #{bert_ner_forward.1} parent=5 // pred_fallthru
        _
    $region6: #{bert_ner_forward.1} parent=1 // loop_footer
      %s34 = sadd.s32 1, %s30
    $region7: #{bert_ner_forward.1} parent=1 // loop_footer_branch
      %29 = sbr.rel target = $region3
    $region8: #{bert_ner_forward.1} parent=1 // loop_exit
      _
    %3945 = vsyncpa [#allocation3], 1
    %s3946 = scalar_lea.sflag [#allocation3], 1
    %3947 = vsyncpa %s3946, 1
    %3948 = vsyncpa [#allocation5], 1
    %3949 = vsyncpa [#allocation8], 1
    %3950 = vsyncpa [#allocation11], 1
    %3951 = vsyncpa [#allocation14], 1

</llo_original>
